<compile_context>
chip_gen: v5e
topology: v5e:2x2
jax: 0.10.0
libtpu: 0.0.40
codegen_flags: <defaults>
</compile_context>

<pallas_src>
import functools

import jax
import jax.numpy as jnp
from jax.experimental import pallas as pl
from jax.experimental.pallas import tpu as pltpu


LANE = 128
SUBLANE = 8
# Column offset of the conv1 interior inside the halo scratch.  16 is one full
# bf16 sublane pack, so the interior store is aligned; column LCOL-1 and
# columns >= LCOL+W stay zero and provide the conv2 halo.
LCOL = 16


def _round_up(x, m):
    return (x + m - 1) // m * m


# ------------------------------ Pallas kernel -------------------------------

def _bottleneck_kernel(x_ref, w1_ref, b1_ref, w2g_ref, b2_ref, w3_ref, b3_ref,
                       o_ref, t1_ref):
    # x_ref  : (1, H, W, Cin)      f32  (unpadded NHWC image)
    # w1_ref : (Cin, Pp)           bf16 (BN1 scale folded in)
    # b1_ref : (1, Pp)             f32
    # w2g_ref: (3, 3*Pp, Pp)       bf16 (BN2 folded; dw taps grouped along K)
    # b2_ref : (1, Pp)             f32
    # w3_ref : (Pp, C4)            bf16 (BN3 scale folded in)
    # b3_ref : (1, C4)             f32
    # o_ref  : (1, H, W, C4)       f32
    # t1_ref : VMEM (H+2, Wt, Pp)  bf16 scratch, zero-halo conv1 output,
    #          interior at (row 1, col LCOL)
    H, W, Cin = x_ref.shape[1], x_ref.shape[2], x_ref.shape[3]
    C4 = o_ref.shape[3]
    Pp = w1_ref.shape[1]

    # ---- conv1 (1x1) + bn1 + relu, interior only ----------------------------
    xin = x_ref[0].reshape(H * W, Cin)                     # f32; also residual
    a1 = jnp.dot(xin.astype(jnp.bfloat16), w1_ref[...],
                 preferred_element_type=jnp.float32)
    t1i = jnp.maximum(a1 + b1_ref[...], 0.0).astype(jnp.bfloat16)
    t1i = t1i.reshape(H, W, Pp)

    # Zero-halo scratch: cheap full zero store every step (keeps correctness
    # when the batch axis is sharded across cores), then one aligned interior
    # store.  Halo rows/cols stay zero -> conv2 sees true zero padding.
    t1_ref[...] = jnp.zeros_like(t1_ref)
    t1_ref[1:H + 1, LCOL:LCOL + W, :] = t1i

    # ---- conv2 (3x3, stride=1, pad=1) + bn2 + relu ---------------------------
    # Hoist the dw (width) shifts: three column-shifted views built once,
    # concatenated along channels -> K-fused taps of width 3*Pp.
    s0 = t1_ref[:, LCOL - 1:LCOL - 1 + W, :]               # dw = 0
    s1 = t1_ref[:, LCOL:LCOL + W, :]                       # dw = 1 (aligned)
    s2 = t1_ref[:, LCOL + 1:LCOL + 1 + W, :]               # dw = 2
    scat = jnp.concatenate([s0, s1, s2], axis=-1)          # (H+2, W, 3*Pp)

    acc2 = jnp.zeros((H * W, Pp), jnp.float32)
    for dh in range(3):                                    # leading-dim slices
        tap = scat[dh:dh + H].reshape(H * W, 3 * Pp)
        acc2 = acc2 + jnp.dot(tap, w2g_ref[dh],
                              preferred_element_type=jnp.float32)
    t2 = jnp.maximum(acc2 + b2_ref[...], 0.0).astype(jnp.bfloat16)

    # ---- conv3 (1x1) + bn3 + residual add + relu ----------------------------
    a3 = jnp.dot(t2, w3_ref[...], preferred_element_type=jnp.float32)
    y = jnp.maximum(a3 + b3_ref[...] + xin, 0.0)           # residual in f32
    o_ref[...] = y.reshape(1, H, W, C4).astype(o_ref.dtype)


# -------------------------------- wrappers -----------------------------------

def _fold_bn(gamma, beta, running_mean, running_var, eps=1e-5):
    scale = gamma / jnp.sqrt(running_var + eps)
    bias = beta - running_mean * scale
    return scale, bias


def prepare_bottleneck_params(params, eps=1e-5):
    """Fold eval-mode BN into the conv weights and repack for the kernel.

    Called ONCE outside the per-forward path (no per-call repacking).
    """
    planes, Cin = params["conv1_w"].shape[0], params["conv1_w"].shape[1]
    C4 = params["conv3_w"].shape[0]                        # planes * expansion
    Pp = _round_up(planes, LANE)

    s1, b1 = _fold_bn(params["bn1_gamma"], params["bn1_beta"],
                      params["bn1_mean"], params["bn1_var"], eps)
    s2, b2 = _fold_bn(params["bn2_gamma"], params["bn2_beta"],
                      params["bn2_mean"], params["bn2_var"], eps)
    s3, b3 = _fold_bn(params["bn3_gamma"], params["bn3_beta"],
                      params["bn3_mean"], params["bn3_var"], eps)

    # conv1: (planes, Cin, 1, 1) -> (Cin, Pp), lane-pad only the output dim.
    w1 = params["conv1_w"].reshape(planes, Cin).T * s1[None, :]
    w1 = jnp.pad(w1, ((0, 0), (0, Pp - planes))).astype(jnp.bfloat16)
    b1p = jnp.pad(b1, (0, Pp - planes)).reshape(1, Pp).astype(jnp.float32)

    # conv2: (O, I, 3, 3) -> (dh, dw, I, O), pad I/O to Pp, group dw along K.
    w2 = jnp.transpose(params["conv2_w"], (2, 3, 1, 0)) * s2[None, None, None, :]
    w2 = jnp.pad(w2, ((0, 0), (0, 0), (0, Pp - planes), (0, Pp - planes)))
    w2g = w2.reshape(3, 3 * Pp, Pp).astype(jnp.bfloat16)   # rows = dw*Pp + cin
    b2p = jnp.pad(b2, (0, Pp - planes)).reshape(1, Pp).astype(jnp.float32)

    # conv3: (C4, planes, 1, 1) -> (Pp, C4); output channels stay unpadded.
    w3 = params["conv3_w"].reshape(C4, planes).T * s3[None, :]
    w3 = jnp.pad(w3, ((0, Pp - planes), (0, 0))).astype(jnp.bfloat16)
    b3p = b3.reshape(1, C4).astype(jnp.float32)

    return w1, b1p, w2g, b2p, w3, b3p


def bottleneck_forward(x_nchw, w1, b1, w2g, b2, w3, b3):
    """Bottleneck forward (stride=1, downsample=None). x: (N, Cin, H, W)."""
    N, Cin, H, W = x_nchw.shape
    Pp = w1.shape[1]
    C4 = w3.shape[1]
    assert C4 == Cin, "downsample=None requires inplanes == planes * 4"

    Wt = _round_up(LCOL + W + 2, SUBLANE)      # scratch width (halo both sides)

    # NCHW -> NHWC; no spatial or channel padding (conv1 runs on the interior,
    # the conv2 halo lives only in the VMEM scratch).
    x = jnp.transpose(x_nchw, (0, 2, 3, 1)).astype(jnp.float32)

    out = pl.pallas_call(
        _bottleneck_kernel,
        out_shape=jax.ShapeDtypeStruct((N, H, W, C4), jnp.float32),
        grid=(N,),
        in_specs=[
            pl.BlockSpec((1, H, W, Cin), lambda n: (n, 0, 0, 0)),
            # Weight / bias index_maps are constant -> fetched once, never
            # re-DMA'd across grid steps.
            pl.BlockSpec((Cin, Pp), lambda n: (0, 0)),
            pl.BlockSpec((1, Pp), lambda n: (0, 0)),
            pl.BlockSpec((3, 3 * Pp, Pp), lambda n: (0, 0, 0)),
            pl.BlockSpec((1, Pp), lambda n: (0, 0)),
            pl.BlockSpec((Pp, C4), lambda n: (0, 0)),
            pl.BlockSpec((1, C4), lambda n: (0, 0)),
        ],
        out_specs=pl.BlockSpec((1, H, W, C4), lambda n: (n, 0, 0, 0)),
        scratch_shapes=[pltpu.VMEM((H + 2, Wt, Pp), jnp.bfloat16)],
        compiler_params=pltpu.CompilerParams(
            dimension_semantics=("parallel",)),
    )(x, w1, b1, w2g, b2, w3, b3)

    return jnp.transpose(out, (0, 3, 1, 2))                # back to NCHW


# ----------------------------- reference (jnp) -------------------------------

def _reference_forward(x_nchw, params, eps=1e-5):
    def conv(x, w, pad):
        return jax.lax.conv_general_dilated(
            x, w, window_strides=(1, 1), padding=pad,
            dimension_numbers=("NCHW", "OIHW", "NCHW"))

    def bn(x, g, b, m, v):
        g = g[None, :, None, None]; b = b[None, :, None, None]
        m = m[None, :, None, None]; v = v[None, :, None, None]
        return (x - m) / jnp.sqrt(v + eps) * g + b

    out = conv(x_nchw, params["conv1_w"], ((0, 0), (0, 0)))
    out = jnp.maximum(bn(out, params["bn1_gamma"], params["bn1_beta"],
                         params["bn1_mean"], params["bn1_var"]), 0.0)
    out = conv(out, params["conv2_w"], ((1, 1), (1, 1)))
    out = jnp.maximum(bn(out, params["bn2_gamma"], params["bn2_beta"],
                         params["bn2_mean"], params["bn2_var"]), 0.0)
    out = conv(out, params["conv3_w"], ((0, 0), (0, 0)))
    out = bn(out, params["bn3_gamma"], params["bn3_beta"],
             params["bn3_mean"], params["bn3_var"])
    out = out + x_nchw
    return jnp.maximum(out, 0.0)


# ---------------------------------- main --------------------------------------

if __name__ == "__main__":
    # Bottleneck(inplanes=16, planes=4), expansion=4 -> output channels 16.
    N, planes, H, W = 2, 4, 16, 16
    inplanes = planes * 4

    key = jax.random.PRNGKey(0)
    keys = jax.random.split(key, 17)

    params = {
        "conv1_w": 0.1 * jax.random.normal(keys[0], (planes, inplanes, 1, 1), jnp.float32),
        "bn1_gamma": 0.5 + jax.random.uniform(keys[1], (planes,), jnp.float32),
        "bn1_beta": 0.1 * jax.random.normal(keys[2], (planes,), jnp.float32),
        "bn1_mean": 0.1 * jax.random.normal(keys[3], (planes,), jnp.float32),
        "bn1_var": 0.5 + jax.random.uniform(keys[4], (planes,), jnp.float32),
        "conv2_w": 0.1 * jax.random.normal(keys[5], (planes, planes, 3, 3), jnp.float32),
        "bn2_gamma": 0.5 + jax.random.uniform(keys[6], (planes,), jnp.float32),
        "bn2_beta": 0.1 * jax.random.normal(keys[7], (planes,), jnp.float32),
        "bn2_mean": 0.1 * jax.random.normal(keys[8], (planes,), jnp.float32),
        "bn2_var": 0.5 + jax.random.uniform(keys[9], (planes,), jnp.float32),
        "conv3_w": 0.1 * jax.random.normal(keys[10], (planes * 4, planes, 1, 1), jnp.float32),
        "bn3_gamma": 0.5 + jax.random.uniform(keys[11], (planes * 4,), jnp.float32),
        "bn3_beta": 0.1 * jax.random.normal(keys[12], (planes * 4,), jnp.float32),
        "bn3_mean": 0.1 * jax.random.normal(keys[13], (planes * 4,), jnp.float32),
        "bn3_var": 0.5 + jax.random.uniform(keys[14], (planes * 4,), jnp.float32),
    }

    x = jax.random.normal(keys[15], (N, inplanes, H, W), jnp.float32)

    # BN fold + weight repack happens once, outside the jitted forward.
    prepped = prepare_bottleneck_params(params)
    prepped = jax.tree_util.tree_map(jax.block_until_ready, prepped)

    fwd = jax.jit(bottleneck_forward)
    out = fwd(x, *prepped)
    out = jax.block_until_ready(out)

    ref = _reference_forward(x, params)
    assert out.shape == (N, inplanes, H, W), out.shape
    max_err = float(jnp.max(jnp.abs(out - ref)))
    # bf16 MXU operands -> relaxed tolerance vs the f32 reference.
    assert jnp.allclose(out, ref, rtol=2e-2, atol=2e-2), max_err

    print("KERNEL_OK")
</pallas_src>

<mosaic_0001>
module attributes {stable_mosaic.version = 11 : i64} {
  func.func @_bottleneck_kernel(%arg0: i32, %arg1: memref<1x16x16x16xf32, #tpu.memory_space<vmem>>, %arg2: memref<16x128xbf16, #tpu.memory_space<vmem>>, %arg3: memref<1x128xf32, #tpu.memory_space<vmem>>, %arg4: memref<3x384x128xbf16, #tpu.memory_space<vmem>>, %arg5: memref<1x128xf32, #tpu.memory_space<vmem>>, %arg6: memref<128x16xbf16, #tpu.memory_space<vmem>>, %arg7: memref<1x16xf32, #tpu.memory_space<vmem>>, %arg8: memref<1x16x16x16xf32, #tpu.memory_space<vmem>>, %arg9: memref<18x40x128xbf16, #tpu.memory_space<vmem>>) attributes {dimension_semantics = [#tpu.dimension_semantics<parallel>], iteration_bounds = array<i64: 2>, scalar_prefetch = 0 : i64, scratch_operands = 1 : i64, tpu.core_type = #tpu.core_type<tc>, window_params = [{transform_indices = @transform_0, window_bounds = array<i64: 1, 16, 16, 16>}, {pipeline_mode = #tpu.pipeline_mode<synchronous>, transform_indices = @transform_1, window_bounds = array<i64: 16, 128>}, {pipeline_mode = #tpu.pipeline_mode<synchronous>, transform_indices = @transform_2, window_bounds = array<i64: 1, 128>}, {pipeline_mode = #tpu.pipeline_mode<synchronous>, transform_indices = @transform_3, window_bounds = array<i64: 3, 384, 128>}, {pipeline_mode = #tpu.pipeline_mode<synchronous>, transform_indices = @transform_4, window_bounds = array<i64: 1, 128>}, {pipeline_mode = #tpu.pipeline_mode<synchronous>, transform_indices = @transform_5, window_bounds = array<i64: 128, 16>}, {pipeline_mode = #tpu.pipeline_mode<synchronous>, transform_indices = @transform_6, window_bounds = array<i64: 1, 16>}, {transform_indices = @transform_7, window_bounds = array<i64: 1, 16, 16, 16>}]} {
    %c0 = arith.constant 0 : index
    %c0_0 = arith.constant 0 : index
    %c0_1 = arith.constant 0 : index
    %c0_2 = arith.constant 0 : index
    %0 = vector.load %arg1[%c0, %c0_0, %c0_1, %c0_2] : memref<1x16x16x16xf32, #tpu.memory_space<vmem>>, vector<1x16x16x16xf32>
    %1 = vector.shape_cast %0 : vector<1x16x16x16xf32> to vector<16x16x16xf32>
    %2 = vector.shape_cast %1 : vector<16x16x16xf32> to vector<256x16xf32>
    %3 = arith.truncf %2 : vector<256x16xf32> to vector<256x16xbf16>
    %c0_3 = arith.constant 0 : index
    %c0_4 = arith.constant 0 : index
    %4 = vector.load %arg2[%c0_3, %c0_4] : memref<16x128xbf16, #tpu.memory_space<vmem>>, vector<16x128xbf16>
    %cst = arith.constant dense<0.000000e+00> : vector<256x128xf32>
    %5 = tpu.matmul %3, %4, %cst {dimension_numbers = #tpu.dot_dimension_numbers<[1], [0], [0], [1], [0, 0, 1, 1], [], []>} : vector<256x16xbf16>, vector<16x128xbf16>, vector<256x128xf32> -> vector<256x128xf32>
    %c0_5 = arith.constant 0 : index
    %c0_6 = arith.constant 0 : index
    %6 = vector.load %arg3[%c0_5, %c0_6] : memref<1x128xf32, #tpu.memory_space<vmem>>, vector<1x128xf32>
    %7 = vector.broadcast %6 : vector<1x128xf32> to vector<256x128xf32>
    %8 = arith.addf %5, %7 : vector<256x128xf32>
    %cst_7 = arith.constant 0.000000e+00 : f32
    %9 = vector.broadcast %cst_7 : f32 to vector<256x128xf32>
    %10 = arith.maximumf %8, %9 : vector<256x128xf32>
    %11 = arith.truncf %10 : vector<256x128xf32> to vector<256x128xbf16>
    %12 = vector.shape_cast %11 : vector<256x128xbf16> to vector<16x16x128xbf16>
    %cst_8 = arith.constant 0.000000e+00 : bf16
    %13 = vector.broadcast %cst_8 : bf16 to vector<18x40x128xbf16>
    %c0_9 = arith.constant 0 : index
    %c0_10 = arith.constant 0 : index
    %c0_11 = arith.constant 0 : index
    %14 = vector.load %arg9[%c0_9, %c0_10, %c0_11] : memref<18x40x128xbf16, #tpu.memory_space<vmem>>, vector<18x40x128xbf16>
    tpu.vector_store %arg9[%c0_9, %c0_10, %c0_11], %13 {strides = array<i32>} : memref<18x40x128xbf16, #tpu.memory_space<vmem>>, vector<18x40x128xbf16>,
    %c1 = arith.constant 1 : index
    %c16 = arith.constant 16 : index
    %c0_12 = arith.constant 0 : index
    %15 = vector.load %arg9[%c1, %c16, %c0_12] : memref<18x40x128xbf16, #tpu.memory_space<vmem>>, vector<16x16x128xbf16>
    tpu.vector_store %arg9[%c1, %c16, %c0_12], %12 {strides = array<i32>} : memref<18x40x128xbf16, #tpu.memory_space<vmem>>, vector<16x16x128xbf16>,
    %c0_13 = arith.constant 0 : index
    %c15 = arith.constant 15 : index
    %c0_14 = arith.constant 0 : index
    %16 = vector.load %arg9[%c0_13, %c15, %c0_14] : memref<18x40x128xbf16, #tpu.memory_space<vmem>>, vector<18x16x128xbf16>
    %c0_15 = arith.constant 0 : index
    %c16_16 = arith.constant 16 : index
    %c0_17 = arith.constant 0 : index
    %17 = vector.load %arg9[%c0_15, %c16_16, %c0_17] : memref<18x40x128xbf16, #tpu.memory_space<vmem>>, vector<18x16x128xbf16>
    %c0_18 = arith.constant 0 : index
    %c17 = arith.constant 17 : index
    %c0_19 = arith.constant 0 : index
    %18 = vector.load %arg9[%c0_18, %c17, %c0_19] : memref<18x40x128xbf16, #tpu.memory_space<vmem>>, vector<18x16x128xbf16>
    %19 = tpu.concatenate %16, %17, %18 in 2 : vector<18x16x128xbf16>, vector<18x16x128xbf16>, vector<18x16x128xbf16> -> vector<18x16x384xbf16>
    %cst_20 = arith.constant 0.000000e+00 : f32
    %20 = vector.broadcast %cst_20 : f32 to vector<256x128xf32>
    %21 = vector.extract_strided_slice %19 {offsets = [0, 0, 0], sizes = [16, 16, 384], strides = [1, 1, 1]} : vector<18x16x384xbf16> to vector<16x16x384xbf16>
    %22 = vector.shape_cast %21 : vector<16x16x384xbf16> to vector<256x384xbf16>
    %c0_21 = arith.constant 0 : index
    %c0_22 = arith.constant 0 : index
    %c0_23 = arith.constant 0 : index
    %23 = vector.load %arg4[%c0_21, %c0_22, %c0_23] : memref<3x384x128xbf16, #tpu.memory_space<vmem>>, vector<1x384x128xbf16>
    %24 = vector.shape_cast %23 : vector<1x384x128xbf16> to vector<384x128xbf16>
    %cst_24 = arith.constant dense<0.000000e+00> : vector<256x128xf32>
    %25 = tpu.matmul %22, %24, %cst_24 {dimension_numbers = #tpu.dot_dimension_numbers<[1], [0], [0], [1], [0, 0, 1, 1], [], []>} : vector<256x384xbf16>, vector<384x128xbf16>, vector<256x128xf32> -> vector<256x128xf32>
    %26 = arith.addf %20, %25 : vector<256x128xf32>
    %27 = vector.extract_strided_slice %19 {offsets = [1, 0, 0], sizes = [16, 16, 384], strides = [1, 1, 1]} : vector<18x16x384xbf16> to vector<16x16x384xbf16>
    %28 = vector.shape_cast %27 : vector<16x16x384xbf16> to vector<256x384xbf16>
    %c1_25 = arith.constant 1 : index
    %c0_26 = arith.constant 0 : index
    %c0_27 = arith.constant 0 : index
    %29 = vector.load %arg4[%c1_25, %c0_26, %c0_27] : memref<3x384x128xbf16, #tpu.memory_space<vmem>>, vector<1x384x128xbf16>
    %30 = vector.shape_cast %29 : vector<1x384x128xbf16> to vector<384x128xbf16>
    %cst_28 = arith.constant dense<0.000000e+00> : vector<256x128xf32>
    %31 = tpu.matmul %28, %30, %cst_28 {dimension_numbers = #tpu.dot_dimension_numbers<[1], [0], [0], [1], [0, 0, 1, 1], [], []>} : vector<256x384xbf16>, vector<384x128xbf16>, vector<256x128xf32> -> vector<256x128xf32>
    %32 = arith.addf %26, %31 : vector<256x128xf32>
    %33 = vector.extract_strided_slice %19 {offsets = [2, 0, 0], sizes = [16, 16, 384], strides = [1, 1, 1]} : vector<18x16x384xbf16> to vector<16x16x384xbf16>
    %34 = vector.shape_cast %33 : vector<16x16x384xbf16> to vector<256x384xbf16>
    %c2 = arith.constant 2 : index
    %c0_29 = arith.constant 0 : index
    %c0_30 = arith.constant 0 : index
    %35 = vector.load %arg4[%c2, %c0_29, %c0_30] : memref<3x384x128xbf16, #tpu.memory_space<vmem>>, vector<1x384x128xbf16>
    %36 = vector.shape_cast %35 : vector<1x384x128xbf16> to vector<384x128xbf16>
    %cst_31 = arith.constant dense<0.000000e+00> : vector<256x128xf32>
    %37 = tpu.matmul %34, %36, %cst_31 {dimension_numbers = #tpu.dot_dimension_numbers<[1], [0], [0], [1], [0, 0, 1, 1], [], []>} : vector<256x384xbf16>, vector<384x128xbf16>, vector<256x128xf32> -> vector<256x128xf32>
    %38 = arith.addf %32, %37 : vector<256x128xf32>
    %c0_32 = arith.constant 0 : index
    %c0_33 = arith.constant 0 : index
    %39 = vector.load %arg5[%c0_32, %c0_33] : memref<1x128xf32, #tpu.memory_space<vmem>>, vector<1x128xf32>
    %40 = vector.broadcast %39 : vector<1x128xf32> to vector<256x128xf32>
    %41 = arith.addf %38, %40 : vector<256x128xf32>
    %cst_34 = arith.constant 0.000000e+00 : f32
    %42 = vector.broadcast %cst_34 : f32 to vector<256x128xf32>
    %43 = arith.maximumf %41, %42 : vector<256x128xf32>
    %44 = arith.truncf %43 : vector<256x128xf32> to vector<256x128xbf16>
    %c0_35 = arith.constant 0 : index
    %c0_36 = arith.constant 0 : index
    %45 = vector.load %arg6[%c0_35, %c0_36] : memref<128x16xbf16, #tpu.memory_space<vmem>>, vector<128x16xbf16>
    %cst_37 = arith.constant dense<0.000000e+00> : vector<256x16xf32>
    %46 = tpu.matmul %44, %45, %cst_37 {dimension_numbers = #tpu.dot_dimension_numbers<[1], [0], [0], [1], [0, 0, 1, 1], [], []>} : vector<256x128xbf16>, vector<128x16xbf16>, vector<256x16xf32> -> vector<256x16xf32>
    %c0_38 = arith.constant 0 : index
    %c0_39 = arith.constant 0 : index
    %47 = vector.load %arg7[%c0_38, %c0_39] : memref<1x16xf32, #tpu.memory_space<vmem>>, vector<1x16xf32>
    %48 = vector.broadcast %47 : vector<1x16xf32> to vector<256x16xf32>
    %49 = arith.addf %46, %48 : vector<256x16xf32>
    %50 = arith.addf %49, %2 : vector<256x16xf32>
    %cst_40 = arith.constant 0.000000e+00 : f32
    %51 = vector.broadcast %cst_40 : f32 to vector<256x16xf32>
    %52 = arith.maximumf %50, %51 : vector<256x16xf32>
    %53 = vector.shape_cast %52 : vector<256x16xf32> to vector<1x16x16x16xf32>
    %c0_41 = arith.constant 0 : index
    %c0_42 = arith.constant 0 : index
    %c0_43 = arith.constant 0 : index
    %c0_44 = arith.constant 0 : index
    %54 = vector.load %arg8[%c0_41, %c0_42, %c0_43, %c0_44] : memref<1x16x16x16xf32, #tpu.memory_space<vmem>>, vector<1x16x16x16xf32>
    tpu.vector_store %arg8[%c0_41, %c0_42, %c0_43, %c0_44], %53 {strides = array<i32>} : memref<1x16x16x16xf32, #tpu.memory_space<vmem>>, vector<1x16x16x16xf32>,
    return
  }
  func.func @transform_0(%arg0: i32) -> (i32, i32, i32, i32) {
    %c0_i32 = arith.constant 0 : i32
    %c0_i32_0 = arith.constant 0 : i32
    %c0_i32_1 = arith.constant 0 : i32
    %c0_i32_2 = arith.constant 0 : i32
    return %arg0, %c0_i32, %c0_i32_0, %c0_i32_1 : i32, i32, i32, i32
  }
  func.func @transform_1(%arg0: i32) -> (i32, i32) {
    %c0_i32 = arith.constant 0 : i32
    %c0_i32_0 = arith.constant 0 : i32
    %c0_i32_1 = arith.constant 0 : i32
    return %c0_i32, %c0_i32_0 : i32, i32
  }
  func.func @transform_2(%arg0: i32) -> (i32, i32) {
    %c0_i32 = arith.constant 0 : i32
    %c0_i32_0 = arith.constant 0 : i32
    %c0_i32_1 = arith.constant 0 : i32
    return %c0_i32, %c0_i32_0 : i32, i32
  }
  func.func @transform_3(%arg0: i32) -> (i32, i32, i32) {
    %c0_i32 = arith.constant 0 : i32
    %c0_i32_0 = arith.constant 0 : i32
    %c0_i32_1 = arith.constant 0 : i32
    %c0_i32_2 = arith.constant 0 : i32
    return %c0_i32, %c0_i32_0, %c0_i32_1 : i32, i32, i32
  }
  func.func @transform_4(%arg0: i32) -> (i32, i32) {
    %c0_i32 = arith.constant 0 : i32
    %c0_i32_0 = arith.constant 0 : i32
    %c0_i32_1 = arith.constant 0 : i32
    return %c0_i32, %c0_i32_0 : i32, i32
  }
  func.func @transform_5(%arg0: i32) -> (i32, i32) {
    %c0_i32 = arith.constant 0 : i32
    %c0_i32_0 = arith.constant 0 : i32
    %c0_i32_1 = arith.constant 0 : i32
    return %c0_i32, %c0_i32_0 : i32, i32
  }
  func.func @transform_6(%arg0: i32) -> (i32, i32) {
    %c0_i32 = arith.constant 0 : i32
    %c0_i32_0 = arith.constant 0 : i32
    %c0_i32_1 = arith.constant 0 : i32
    return %c0_i32, %c0_i32_0 : i32, i32
  }
  func.func @transform_7(%arg0: i32) -> (i32, i32, i32, i32) {
    %c0_i32 = arith.constant 0 : i32
    %c0_i32_0 = arith.constant 0 : i32
    %c0_i32_1 = arith.constant 0 : i32
    %c0_i32_2 = arith.constant 0 : i32
    return %arg0, %c0_i32, %c0_i32_0, %c0_i32_1 : i32, i32, i32, i32
  }
}

</mosaic_0001>

<llo_original>
// kernel: bottleneck_forward.1
$region0: #{bottleneck_forward.1}
  #allocation0 [shape = 'u32[]', space=smem, size = 0x4, offset = 0x4, fixed_abs, tag = 'smem constant byte address 0x4 - core index']
  #allocation1 [shape = 'u32[72,128]{1,0:T(1,128)}', space=vmem, size = 0x9000, scoped, tag = 'internal scratch']
  #allocation2 [shape = 'bf16[18,40,128]{2,1,0:T(8,128)(2,1)}', space=vmem, size = 0x2d000, scoped, tag = 'scratch operand']
  %s0 = inlined_call_operand.vmem [shape: f32[2,16,16,16], index: 0, kind: input, shape index: {}]
  %s1 = inlined_call_operand.vmem [shape: bf16[16,128], index: 1, kind: input, shape index: {}]
  %s2 = inlined_call_operand.vmem [shape: f32[1,128], index: 2, kind: input, shape index: {}]
  %s3 = inlined_call_operand.vmem [shape: bf16[3,384,128], index: 3, kind: input, shape index: {}]
  %s4 = inlined_call_operand.vmem [shape: f32[1,128], index: 4, kind: input, shape index: {}]
  %s5 = inlined_call_operand.vmem [shape: bf16[128,16], index: 5, kind: input, shape index: {}]
  %s6 = inlined_call_operand.vmem [shape: f32[1,16], index: 6, kind: input, shape index: {}]
  %s7 = inlined_call_operand.vmem [shape: f32[2,16,16,16], index: 7, kind: output, shape index: {}]
  %s8 = sld [smem:[#allocation0]]
  $region61: #{bottleneck_forward.1} parent=0
    _
  %s10 = ssub.s32 1, %s8
  %s11 = scalar_select 0, %s10, %s8
  loop: start=0, step=1, limit=4
  $region2: #{bottleneck_forward.1} parent=0 // loop_pre_header
    _
  $region3: #{bottleneck_forward.1} parent=0 // loop_header
    %s13 = sphi 0, %s17
    %p14 = scmp.ge.s32.totalorder %s13, 4
    %s23 = sphi 0, %s25
    %s26 = sphi 0, %s23
    %s27 = sphi 0, %s26
    %s43 = sphi 0, %s27
    %s47 = sphi 0, %s47
    %s49 = sphi 0, %s47
    %s50 = sphi 0, %s49
    %s64 = sphi 0, %s50
    %s68 = sphi 0, %s68
    %s70 = sphi 0, %s68
    %s71 = sphi 0, %s70
    %s85 = sphi 0, %s71
    %s89 = sphi 0, %s89
    %s91 = sphi 0, %s89
    %s92 = sphi 0, %s91
    %s106 = sphi 0, %s92
    %s110 = sphi 0, %s110
    %s112 = sphi 0, %s110
    %s113 = sphi 0, %s112
    %s127 = sphi 0, %s113
    %s131 = sphi 0, %s131
    %s133 = sphi 0, %s131
    %s134 = sphi 0, %s133
    %s148 = sphi 0, %s134
    %s152 = sphi 0, %s152
    %s154 = sphi 0, %s152
    %s155 = sphi 0, %s154
    %s169 = sphi 0, %s155
    %s175 = sphi 0, %s177
    %s178 = sphi 0, %s175
    %s179 = sphi 0, %s178
    %s195 = sphi 0, %s179
  $region4: #{bottleneck_forward.1} parent=0 // loop_header_branch
    %16 = sbr.rel (%p14) target = $region8
  $region5: #{bottleneck_forward.1} parent=0 // loop_body
    %s18 = ssub.s32 %s13, 1
    %s19 = ssub.s32 %s13, 2
    %s20 = sadd.s32 %s13, 1
    %s21 = ssub.s32 %s13, %s20
    %p22 = scmp.eq.s32.totalorder %s21, 0
    %s24 = sadd.s32 %s23, 1
    %s25 = scalar_select %p22, %s23, %s24
    %p28 = pneg %p22
    %p29 = scmp.eq.s32.totalorder %s13, 1
    %p30 = por %p28, %p29
    %p31 = scmp.ne.s32.totalorder %s23, %s26
    %p32 = scmp.eq.s32.totalorder %s13, 0
    %p33 = por %p31, %p32
    %p34 = scmp.ne.s32.totalorder %s23, %s26
    %p35 = scmp.eq.s32.totalorder %s18, 1
    %p36 = por %p34, %p35
    %p37 = scmp.ne.s32.totalorder %s26, %s27
    %p38 = scmp.eq.s32.totalorder %s18, 0
    %p39 = por %p37, %p38
    %p40 = scmp.ne.s32.totalorder %s26, %s27
    %p41 = scmp.eq.s32.totalorder %s19, 1
    %p42 = por %p40, %p41
    %p44 = scmp.ne.s32.totalorder %s27, %s43
    %p45 = scmp.eq.s32.totalorder %s19, 0
    %p46 = por %p44, %p45
    %s48 = sadd.s32 %s47, 1
    %p51 = scmp.eq.s32.totalorder %s13, 1
    %p52 = scmp.ne.s32.totalorder %s47, %s49
    %p53 = scmp.eq.s32.totalorder %s13, 0
    %p54 = por %p52, %p53
    %p55 = scmp.ne.s32.totalorder %s47, %s49
    %p56 = scmp.eq.s32.totalorder %s18, 1
    %p57 = por %p55, %p56
    %p58 = scmp.ne.s32.totalorder %s49, %s50
    %p59 = scmp.eq.s32.totalorder %s18, 0
    %p60 = por %p58, %p59
    %p61 = scmp.ne.s32.totalorder %s49, %s50
    %p62 = scmp.eq.s32.totalorder %s19, 1
    %p63 = por %p61, %p62
    %p65 = scmp.ne.s32.totalorder %s50, %s64
    %p66 = scmp.eq.s32.totalorder %s19, 0
    %p67 = por %p65, %p66
    %s69 = sadd.s32 %s68, 1
    %p72 = scmp.eq.s32.totalorder %s13, 1
    %p73 = scmp.ne.s32.totalorder %s68, %s70
    %p74 = scmp.eq.s32.totalorder %s13, 0
    %p75 = por %p73, %p74
    %p76 = scmp.ne.s32.totalorder %s68, %s70
    %p77 = scmp.eq.s32.totalorder %s18, 1
    %p78 = por %p76, %p77
    %p79 = scmp.ne.s32.totalorder %s70, %s71
    %p80 = scmp.eq.s32.totalorder %s18, 0
    %p81 = por %p79, %p80
    %p82 = scmp.ne.s32.totalorder %s70, %s71
    %p83 = scmp.eq.s32.totalorder %s19, 1
    %p84 = por %p82, %p83
    %p86 = scmp.ne.s32.totalorder %s71, %s85
    %p87 = scmp.eq.s32.totalorder %s19, 0
    %p88 = por %p86, %p87
    %s90 = sadd.s32 %s89, 1
    %p93 = scmp.eq.s32.totalorder %s13, 1
    %p94 = scmp.ne.s32.totalorder %s89, %s91
    %p95 = scmp.eq.s32.totalorder %s13, 0
    %p96 = por %p94, %p95
    %p97 = scmp.ne.s32.totalorder %s89, %s91
    %p98 = scmp.eq.s32.totalorder %s18, 1
    %p99 = por %p97, %p98
    %p100 = scmp.ne.s32.totalorder %s91, %s92
    %p101 = scmp.eq.s32.totalorder %s18, 0
    %p102 = por %p100, %p101
    %p103 = scmp.ne.s32.totalorder %s91, %s92
    %p104 = scmp.eq.s32.totalorder %s19, 1
    %p105 = por %p103, %p104
    %p107 = scmp.ne.s32.totalorder %s92, %s106
    %p108 = scmp.eq.s32.totalorder %s19, 0
    %p109 = por %p107, %p108
    %s111 = sadd.s32 %s110, 1
    %p114 = scmp.eq.s32.totalorder %s13, 1
    %p115 = scmp.ne.s32.totalorder %s110, %s112
    %p116 = scmp.eq.s32.totalorder %s13, 0
    %p117 = por %p115, %p116
    %p118 = scmp.ne.s32.totalorder %s110, %s112
    %p119 = scmp.eq.s32.totalorder %s18, 1
    %p120 = por %p118, %p119
    %p121 = scmp.ne.s32.totalorder %s112, %s113
    %p122 = scmp.eq.s32.totalorder %s18, 0
    %p123 = por %p121, %p122
    %p124 = scmp.ne.s32.totalorder %s112, %s113
    %p125 = scmp.eq.s32.totalorder %s19, 1
    %p126 = por %p124, %p125
    %p128 = scmp.ne.s32.totalorder %s113, %s127
    %p129 = scmp.eq.s32.totalorder %s19, 0
    %p130 = por %p128, %p129
    %s132 = sadd.s32 %s131, 1
    %p135 = scmp.eq.s32.totalorder %s13, 1
    %p136 = scmp.ne.s32.totalorder %s131, %s133
    %p137 = scmp.eq.s32.totalorder %s13, 0
    %p138 = por %p136, %p137
    %p139 = scmp.ne.s32.totalorder %s131, %s133
    %p140 = scmp.eq.s32.totalorder %s18, 1
    %p141 = por %p139, %p140
    %p142 = scmp.ne.s32.totalorder %s133, %s134
    %p143 = scmp.eq.s32.totalorder %s18, 0
    %p144 = por %p142, %p143
    %p145 = scmp.ne.s32.totalorder %s133, %s134
    %p146 = scmp.eq.s32.totalorder %s19, 1
    %p147 = por %p145, %p146
    %p149 = scmp.ne.s32.totalorder %s134, %s148
    %p150 = scmp.eq.s32.totalorder %s19, 0
    %p151 = por %p149, %p150
    %s153 = sadd.s32 %s152, 1
    %p156 = scmp.eq.s32.totalorder %s13, 1
    %p157 = scmp.ne.s32.totalorder %s152, %s154
    %p158 = scmp.eq.s32.totalorder %s13, 0
    %p159 = por %p157, %p158
    %p160 = scmp.ne.s32.totalorder %s152, %s154
    %p161 = scmp.eq.s32.totalorder %s18, 1
    %p162 = por %p160, %p161
    %p163 = scmp.ne.s32.totalorder %s154, %s155
    %p164 = scmp.eq.s32.totalorder %s18, 0
    %p165 = por %p163, %p164
    %p166 = scmp.ne.s32.totalorder %s154, %s155
    %p167 = scmp.eq.s32.totalorder %s19, 1
    %p168 = por %p166, %p167
    %p170 = scmp.ne.s32.totalorder %s155, %s169
    %p171 = scmp.eq.s32.totalorder %s19, 0
    %p172 = por %p170, %p171
    %s173 = ssub.s32 %s13, %s20
    %p174 = scmp.eq.s32.totalorder %s173, 0
    %s176 = sadd.s32 %s175, 1
    %s177 = scalar_select %p174, %s175, %s176
    %p180 = pneg %p174
    %p181 = scmp.eq.s32.totalorder %s13, 1
    %p182 = por %p180, %p181
    %p183 = scmp.ne.s32.totalorder %s175, %s178
    %p184 = scmp.eq.s32.totalorder %s13, 0
    %p185 = por %p183, %p184
    %p186 = scmp.ne.s32.totalorder %s175, %s178
    %p187 = scmp.eq.s32.totalorder %s18, 1
    %p188 = por %p186, %p187
    %p189 = scmp.ne.s32.totalorder %s178, %s179
    %p190 = scmp.eq.s32.totalorder %s18, 0
    %p191 = por %p189, %p190
    %p192 = scmp.ne.s32.totalorder %s178, %s179
    %p193 = scmp.eq.s32.totalorder %s19, 1
    %p194 = por %p192, %p193
    %p196 = scmp.ne.s32.totalorder %s179, %s195
    %p197 = scmp.eq.s32.totalorder %s19, 0
    %p198 = por %p196, %p197
    %p199 = scmp.le.s32.totalorder 1, %s13
    %p200 = scmp.lt.s32.totalorder %s13, 3
    %p201 = pnand %p199, %p200
    %p202 = pneg %p201
    // Predicated region
    $region9: #{bottleneck_forward.1} parent=5 // pred_check
      _
    $region10: #{bottleneck_forward.1} parent=5 // pred_check_branch
      %204 = sbr.rel (%p201) target = $region12
    $region11: #{bottleneck_forward.1} parent=5 // pred_region
      %s205 = ssub.s32 %s13, 1
      // Predicated region
      $region13: #{bottleneck_forward.1} parent=11 // pred_check
        %p206 = pneg %p60
      $region14: #{bottleneck_forward.1} parent=11 // pred_check_branch
        %208 = sbr.rel (%p206) target = $region16
      $region15: #{bottleneck_forward.1} parent=11 // pred_region
        _
      $region16: #{bottleneck_forward.1} parent=11 // pred_fallthru
        _
      // Predicated region
      $region17: #{bottleneck_forward.1} parent=11 // pred_check
        %p209 = pneg %p81
      $region18: #{bottleneck_forward.1} parent=11 // pred_check_branch
        %211 = sbr.rel (%p209) target = $region20
      $region19: #{bottleneck_forward.1} parent=11 // pred_region
        _
      $region20: #{bottleneck_forward.1} parent=11 // pred_fallthru
        _
      // Predicated region
      $region21: #{bottleneck_forward.1} parent=11 // pred_check
        %p212 = pneg %p102
      $region22: #{bottleneck_forward.1} parent=11 // pred_check_branch
        %214 = sbr.rel (%p212) target = $region24
      $region23: #{bottleneck_forward.1} parent=11 // pred_region
        _
      $region24: #{bottleneck_forward.1} parent=11 // pred_fallthru
        _
      // Predicated region
      $region25: #{bottleneck_forward.1} parent=11 // pred_check
        %p215 = pneg %p123
      $region26: #{bottleneck_forward.1} parent=11 // pred_check_branch
        %217 = sbr.rel (%p215) target = $region28
      $region27: #{bottleneck_forward.1} parent=11 // pred_region
        _
      $region28: #{bottleneck_forward.1} parent=11 // pred_fallthru
        _
      // Predicated region
      $region29: #{bottleneck_forward.1} parent=11 // pred_check
        %p218 = pneg %p144
      $region30: #{bottleneck_forward.1} parent=11 // pred_check_branch
        %220 = sbr.rel (%p218) target = $region32
      $region31: #{bottleneck_forward.1} parent=11 // pred_region
        _
      $region32: #{bottleneck_forward.1} parent=11 // pred_fallthru
        _
      // Predicated region
      $region33: #{bottleneck_forward.1} parent=11 // pred_check
        %p221 = pneg %p165
      $region34: #{bottleneck_forward.1} parent=11 // pred_check_branch
        %223 = sbr.rel (%p221) target = $region36
      $region35: #{bottleneck_forward.1} parent=11 // pred_region
        _
      $region36: #{bottleneck_forward.1} parent=11 // pred_fallthru
        _
    $region12: #{bottleneck_forward.1} parent=5 // pred_fallthru
      _
    %p224 = scmp.lt.s32.totalorder %s13, 2
    // Predicated region
    $region37: #{bottleneck_forward.1} parent=5 // pred_check
      %p225 = pneg %p224
    $region38: #{bottleneck_forward.1} parent=5 // pred_check_branch
      %227 = sbr.rel (%p225) target = $region40
    $region39: #{bottleneck_forward.1} parent=5 // pred_region
      // Predicated region
      $region41: #{bottleneck_forward.1} parent=39 // pred_check
        %p228 = pneg %p33
      $region42: #{bottleneck_forward.1} parent=39 // pred_check_branch
        %230 = sbr.rel (%p228) target = $region44
      $region43: #{bottleneck_forward.1} parent=39 // pred_region
        %p231 = scmp.lt.s32.totalorder %s13, 1
        %s232 = scalar_select %p231, %s13, 1
        %s233 = smul.addr %s232, 32
        %s234 = smul.addr %s233, 8
        %s235 = scalar_lea.vmem %s0, %s234
      $region44: #{bottleneck_forward.1} parent=39 // pred_fallthru
        _
    $region40: #{bottleneck_forward.1} parent=5 // pred_fallthru
      _
    %p236 = scmp.le.s32.totalorder 1, %s13
    %p237 = scmp.lt.s32.totalorder %s13, 3
    %p238 = pnand %p236, %p237
    %p239 = pneg %p238
    // Predicated region
    $region45: #{bottleneck_forward.1} parent=5 // pred_check
      _
    $region46: #{bottleneck_forward.1} parent=5 // pred_check_branch
      %241 = sbr.rel (%p238) target = $region48
    $region47: #{bottleneck_forward.1} parent=5 // pred_region
      %s242 = ssub.s32 %s13, 1
      %p243 = scmp.lt.s32.totalorder %s18, 1
      %s244 = scalar_select %p243, %s18, 1
      %s245 = smul.addr %s244, 32
      %s246 = smul.addr %s245, 8
      %s247 = scalar_lea.vmem %s0, %s246
      %p248 = pneg %p39
      %p249 = pneg %p36
      %p250 = pneg %p60
      %p251 = pneg %p57
      %p252 = pneg %p81
      %p253 = pneg %p78
      %p254 = pneg %p102
      %p255 = pneg %p99
      %p256 = pneg %p123
      %p257 = pneg %p120
      %p258 = pneg %p144
      %p259 = pneg %p141
      %p260 = pneg %p165
      %p261 = pneg %p162
      %p262 = pneg %p191
      %p263 = pneg %p188
      %p264 = scmp.lt.s32.totalorder %s18, 1
      %s265 = scalar_select %p264, %s18, 1
      %s266 = smul.addr %s265, 32
      %s267 = smul.addr %s266, 8
      %s268 = scalar_lea.vmem %s7, %s267
      %p269 = scmp.lt.s32.totalorder %s18, 1
      %s270 = scalar_select %p269, %s18, 1
      %s271 = smul.addr %s270, 32
      %s272 = smul.addr %s271, 8
      %s273 = scalar_lea.vmem %s0, %s272
      %p274 = scmp.lt.s32.totalorder %s18, 1
      %s275 = scalar_select %p274, %s18, 1
      %s276 = smul.addr %s275, 32
      %s277 = smul.addr %s276, 8
      %s278 = scalar_lea.vmem %s7, %s277
      %v280 = vld [vmem:[%s273] sm:$0xff]
      %v281 = vld [vmem:[%s273 + $0x8] sm:$0xff]
      %v282 = vld [vmem:[%s273 + $0x10] sm:$0xff]
      %v283 = vld [vmem:[%s273 + $0x18] sm:$0xff]
      %v284 = vld [vmem:[%s273 + $0x20] sm:$0xff]
      %v285 = vld [vmem:[%s273 + $0x28] sm:$0xff]
      %v286 = vld [vmem:[%s273 + $0x30] sm:$0xff]
      %v287 = vld [vmem:[%s273 + $0x38] sm:$0xff]
      %v288 = vld [vmem:[%s273 + $0x40] sm:$0xff]
      %v289 = vld [vmem:[%s273 + $0x48] sm:$0xff]
      %v290 = vld [vmem:[%s273 + $0x50] sm:$0xff]
      %v291 = vld [vmem:[%s273 + $0x58] sm:$0xff]
      %v292 = vld [vmem:[%s273 + $0x60] sm:$0xff]
      %v293 = vld [vmem:[%s273 + $0x68] sm:$0xff]
      %v294 = vld [vmem:[%s273 + $0x70] sm:$0xff]
      %v295 = vld [vmem:[%s273 + $0x78] sm:$0xff]
      %v296 = vld [vmem:[%s273 + $0x80] sm:$0xff]
      %v297 = vld [vmem:[%s273 + $0x88] sm:$0xff]
      %v298 = vld [vmem:[%s273 + $0x90] sm:$0xff]
      %v299 = vld [vmem:[%s273 + $0x98] sm:$0xff]
      %v300 = vld [vmem:[%s273 + $0xa0] sm:$0xff]
      %v301 = vld [vmem:[%s273 + $0xa8] sm:$0xff]
      %v302 = vld [vmem:[%s273 + $0xb0] sm:$0xff]
      %v303 = vld [vmem:[%s273 + $0xb8] sm:$0xff]
      %v304 = vld [vmem:[%s273 + $0xc0] sm:$0xff]
      %v305 = vld [vmem:[%s273 + $0xc8] sm:$0xff]
      %v306 = vld [vmem:[%s273 + $0xd0] sm:$0xff]
      %v307 = vld [vmem:[%s273 + $0xd8] sm:$0xff]
      %v308 = vld [vmem:[%s273 + $0xe0] sm:$0xff]
      %v309 = vld [vmem:[%s273 + $0xe8] sm:$0xff]
      %v310 = vld [vmem:[%s273 + $0xf0] sm:$0xff]
      %v311 = vld [vmem:[%s273 + $0xf8] sm:$0xff]
      %v312 = vpack.c.bf16 %v281, %v280
      %v313 = vpack.c.bf16 %v283, %v282
      %v314 = vpack.c.bf16 %v285, %v284
      %v315 = vpack.c.bf16 %v287, %v286
      %v316 = vpack.c.bf16 %v289, %v288
      %v317 = vpack.c.bf16 %v291, %v290
      %v318 = vpack.c.bf16 %v293, %v292
      %v319 = vpack.c.bf16 %v295, %v294
      %v320 = vpack.c.bf16 %v297, %v296
      %v321 = vpack.c.bf16 %v299, %v298
      %v322 = vpack.c.bf16 %v301, %v300
      %v323 = vpack.c.bf16 %v303, %v302
      %v324 = vpack.c.bf16 %v305, %v304
      %v325 = vpack.c.bf16 %v307, %v306
      %v326 = vpack.c.bf16 %v309, %v308
      %v327 = vpack.c.bf16 %v311, %v310
      %v328 = vld [vmem:[%s1] sm:$0xf]
      %v329 = vld [vmem:[%s1 + $0x4] sm:$0xf]
      %v330 = vld [vmem:[%s2] sm:$0x1]
      %v332 = vperm.slane %v330, 0
      %v336 = vunpack.c.l.b16 %v328
      %v337 = vunpack.c.l.b16 %v329
      %v338 = vpack.c.b16 %v337, %v336
      %vm340 = vcmask 130048
      %v342 = vsel %vm340, %v312, 0
      %v345 = vsel %vm340, %v313, 0
      %v348 = vsel %vm340, %v314, 0
      %v351 = vsel %vm340, %v315, 0
      %v354 = vsel %vm340, %v316, 0
      %v357 = vsel %vm340, %v317, 0
      %v360 = vsel %vm340, %v318, 0
      %v363 = vsel %vm340, %v319, 0
      %v366 = vsel %vm340, %v320, 0
      %v369 = vsel %vm340, %v321, 0
      %v372 = vsel %vm340, %v322, 0
      %v375 = vsel %vm340, %v323, 0
      %v378 = vsel %vm340, %v324, 0
      %v381 = vsel %vm340, %v325, 0
      %v384 = vsel %vm340, %v326, 0
      %v387 = vsel %vm340, %v327, 0
      %389 = vmatpush.bf16.msra.mxu0 0
      %390 = vmatpush.bf16.msra.mxu0 0
      %391 = vmatpush.bf16.msra.mxu0 0
      %392 = vmatpush.bf16.msra.mxu0 0
      %393 = vmatpush.bf16.msra.mxu0 0
      %394 = vmatpush.bf16.msra.mxu0 0
      %395 = vmatpush.bf16.msra.mxu0 0
      %396 = vmatpush.bf16.msra.mxu0 %v338
      %397 = vmatmul.bf16.gmra.mxu0 %v342
      %v398 = vpop.f32.mrf.mxu0
      %v399 = vadd.f32 %v332, %v398
      %v400 = vpop.f32.mrf.mxu0
      %v401 = vadd.f32 %v332, %v400
      %402 = vmatmul.bf16.gmra.mxu0 %v345
      %v403 = vpop.f32.mrf.mxu0
      %v404 = vadd.f32 %v332, %v403
      %v405 = vpop.f32.mrf.mxu0
      %v406 = vadd.f32 %v332, %v405
      %407 = vmatmul.bf16.gmra.mxu0 %v348
      %v408 = vpop.f32.mrf.mxu0
      %v409 = vadd.f32 %v332, %v408
      %v410 = vpop.f32.mrf.mxu0
      %v411 = vadd.f32 %v332, %v410
      %412 = vmatmul.bf16.gmra.mxu0 %v351
      %v413 = vpop.f32.mrf.mxu0
      %v414 = vadd.f32 %v332, %v413
      %v415 = vpop.f32.mrf.mxu0
      %v416 = vadd.f32 %v332, %v415
      %417 = vmatmul.bf16.gmra.mxu0 %v354
      %v418 = vpop.f32.mrf.mxu0
      %v419 = vadd.f32 %v332, %v418
      %v420 = vpop.f32.mrf.mxu0
      %v421 = vadd.f32 %v332, %v420
      %422 = vmatmul.bf16.gmra.mxu0 %v357
      %v423 = vpop.f32.mrf.mxu0
      %v424 = vadd.f32 %v332, %v423
      %v425 = vpop.f32.mrf.mxu0
      %v426 = vadd.f32 %v332, %v425
      %427 = vmatmul.bf16.gmra.mxu0 %v360
      %v428 = vpop.f32.mrf.mxu0
      %v429 = vadd.f32 %v332, %v428
      %v430 = vpop.f32.mrf.mxu0
      %v431 = vadd.f32 %v332, %v430
      %432 = vmatmul.bf16.gmra.mxu0 %v363
      %v433 = vpop.f32.mrf.mxu0
      %v434 = vadd.f32 %v332, %v433
      %v435 = vpop.f32.mrf.mxu0
      %v436 = vadd.f32 %v332, %v435
      %437 = vmatmul.bf16.gmra.mxu0 %v366
      %v438 = vpop.f32.mrf.mxu0
      %v439 = vadd.f32 %v332, %v438
      %v440 = vpop.f32.mrf.mxu0
      %v441 = vadd.f32 %v332, %v440
      %442 = vmatmul.bf16.gmra.mxu0 %v369
      %v443 = vpop.f32.mrf.mxu0
      %v444 = vadd.f32 %v332, %v443
      %v445 = vpop.f32.mrf.mxu0
      %v446 = vadd.f32 %v332, %v445
      %447 = vmatmul.bf16.gmra.mxu0 %v372
      %v448 = vpop.f32.mrf.mxu0
      %v449 = vadd.f32 %v332, %v448
      %v450 = vpop.f32.mrf.mxu0
      %v451 = vadd.f32 %v332, %v450
      %452 = vmatmul.bf16.gmra.mxu0 %v375
      %v453 = vpop.f32.mrf.mxu0
      %v454 = vadd.f32 %v332, %v453
      %v455 = vpop.f32.mrf.mxu0
      %v456 = vadd.f32 %v332, %v455
      %457 = vmatmul.bf16.gmra.mxu0 %v378
      %v458 = vpop.f32.mrf.mxu0
      %v459 = vadd.f32 %v332, %v458
      %v460 = vpop.f32.mrf.mxu0
      %v461 = vadd.f32 %v332, %v460
      %462 = vmatmul.bf16.gmra.mxu0 %v381
      %v463 = vpop.f32.mrf.mxu0
      %v464 = vadd.f32 %v332, %v463
      %v465 = vpop.f32.mrf.mxu0
      %v466 = vadd.f32 %v332, %v465
      %467 = vmatmul.bf16.gmra.mxu0 %v384
      %v468 = vpop.f32.mrf.mxu0
      %v469 = vadd.f32 %v332, %v468
      %v470 = vpop.f32.mrf.mxu0
      %v471 = vadd.f32 %v332, %v470
      %472 = vmatmul.bf16.gmra.mxu0 %v387
      %v473 = vpop.f32.mrf.mxu0
      %v474 = vadd.f32 %v332, %v473
      %v475 = vpop.f32.mrf.mxu0
      %v476 = vadd.f32 %v332, %v475
      %477 = vdwg.mxu0
      %v478 = vmax.f32 %v399, 0.0
      %v479 = vmax.f32 %v401, 0.0
      %v480 = vmax.f32 %v404, 0.0
      %v481 = vmax.f32 %v406, 0.0
      %v482 = vmax.f32 %v409, 0.0
      %v483 = vmax.f32 %v411, 0.0
      %v484 = vmax.f32 %v414, 0.0
      %v485 = vmax.f32 %v416, 0.0
      %v486 = vmax.f32 %v419, 0.0
      %v487 = vmax.f32 %v421, 0.0
      %v488 = vmax.f32 %v424, 0.0
      %v489 = vmax.f32 %v426, 0.0
      %v490 = vmax.f32 %v429, 0.0
      %v491 = vmax.f32 %v431, 0.0
      %v492 = vmax.f32 %v434, 0.0
      %v493 = vmax.f32 %v436, 0.0
      %v494 = vmax.f32 %v439, 0.0
      %v495 = vmax.f32 %v441, 0.0
      %v496 = vmax.f32 %v444, 0.0
      %v497 = vmax.f32 %v446, 0.0
      %v498 = vmax.f32 %v449, 0.0
      %v499 = vmax.f32 %v451, 0.0
      %v500 = vmax.f32 %v454, 0.0
      %v501 = vmax.f32 %v456, 0.0
      %v502 = vmax.f32 %v459, 0.0
      %v503 = vmax.f32 %v461, 0.0
      %v504 = vmax.f32 %v464, 0.0
      %v505 = vmax.f32 %v466, 0.0
      %v506 = vmax.f32 %v469, 0.0
      %v507 = vmax.f32 %v471, 0.0
      %v508 = vmax.f32 %v474, 0.0
      %v509 = vmax.f32 %v476, 0.0
      %v510 = vpack.c.bf16 %v478, %v478
      %v511 = vpack.c.bf16 %v479, %v479
      %v512 = vpack.c.bf16 %v480, %v480
      %v513 = vpack.c.bf16 %v481, %v481
      %v514 = vpack.c.bf16 %v482, %v482
      %v515 = vpack.c.bf16 %v483, %v483
      %v516 = vpack.c.bf16 %v484, %v484
      %v517 = vpack.c.bf16 %v485, %v485
      %v518 = vpack.c.bf16 %v486, %v486
      %v519 = vpack.c.bf16 %v487, %v487
      %v520 = vpack.c.bf16 %v488, %v488
      %v521 = vpack.c.bf16 %v489, %v489
      %v522 = vpack.c.bf16 %v490, %v490
      %v523 = vpack.c.bf16 %v491, %v491
      %v524 = vpack.c.bf16 %v492, %v492
      %v525 = vpack.c.bf16 %v493, %v493
      %v526 = vpack.c.bf16 %v494, %v494
      %v527 = vpack.c.bf16 %v495, %v495
      %v528 = vpack.c.bf16 %v496, %v496
      %v529 = vpack.c.bf16 %v497, %v497
      %v530 = vpack.c.bf16 %v498, %v498
      %v531 = vpack.c.bf16 %v499, %v499
      %v532 = vpack.c.bf16 %v500, %v500
      %v533 = vpack.c.bf16 %v501, %v501
      %v534 = vpack.c.bf16 %v502, %v502
      %v535 = vpack.c.bf16 %v503, %v503
      %v536 = vpack.c.bf16 %v504, %v504
      %v537 = vpack.c.bf16 %v505, %v505
      %v538 = vpack.c.bf16 %v506, %v506
      %v539 = vpack.c.bf16 %v507, %v507
      %v540 = vpack.c.bf16 %v508, %v508
      %v541 = vpack.c.bf16 %v509, %v509
      %542 = vst [vmem:[#allocation2] sm:$0xf] 0
      %543 = vst [vmem:[#allocation2 + $0x4] sm:$0xf] 0
      %544 = vst [vmem:[#allocation2 + $0x8] sm:$0xf] 0
      %545 = vst [vmem:[#allocation2 + $0xc] sm:$0xf] 0
      %546 = vst [vmem:[#allocation2 + $0x10] sm:$0xf] 0
      %547 = vst [vmem:[#allocation2 + $0x14] sm:$0xf] 0
      %548 = vst [vmem:[#allocation2 + $0x18] sm:$0xf] 0
      %549 = vst [vmem:[#allocation2 + $0x1c] sm:$0xf] 0
      %550 = vst [vmem:[#allocation2 + $0x20] sm:$0xf] 0
      %551 = vst [vmem:[#allocation2 + $0x24] sm:$0xf] 0
      %552 = vst [vmem:[#allocation2 + $0x28] sm:$0xf] 0
      %553 = vst [vmem:[#allocation2 + $0x2c] sm:$0xf] 0
      %554 = vst [vmem:[#allocation2 + $0x30] sm:$0xf] 0
      %555 = vst [vmem:[#allocation2 + $0x34] sm:$0xf] 0
      %556 = vst [vmem:[#allocation2 + $0x38] sm:$0xf] 0
      %557 = vst [vmem:[#allocation2 + $0x3c] sm:$0xf] 0
      %558 = vst [vmem:[#allocation2 + $0x40] sm:$0xf] 0
      %559 = vst [vmem:[#allocation2 + $0x44] sm:$0xf] 0
      %560 = vst [vmem:[#allocation2 + $0x48] sm:$0xf] 0
      %561 = vst [vmem:[#allocation2 + $0x4c] sm:$0xf] 0
      %562 = vst [vmem:[#allocation2 + $0x50] sm:$0xf] 0
      %563 = vst [vmem:[#allocation2 + $0x54] sm:$0xf] 0
      %564 = vst [vmem:[#allocation2 + $0x58] sm:$0xf] 0
      %565 = vst [vmem:[#allocation2 + $0x5c] sm:$0xf] 0
      %566 = vst [vmem:[#allocation2 + $0x60] sm:$0xf] 0
      %567 = vst [vmem:[#allocation2 + $0x64] sm:$0xf] 0
      %568 = vst [vmem:[#allocation2 + $0x68] sm:$0xf] 0
      %569 = vst [vmem:[#allocation2 + $0x6c] sm:$0xf] 0
      %570 = vst [vmem:[#allocation2 + $0x70] sm:$0xf] 0
      %571 = vst [vmem:[#allocation2 + $0x74] sm:$0xf] 0
      %572 = vst [vmem:[#allocation2 + $0x78] sm:$0xf] 0
      %573 = vst [vmem:[#allocation2 + $0x7c] sm:$0xf] 0
      %574 = vst [vmem:[#allocation2 + $0x80] sm:$0xf] 0
      %575 = vst [vmem:[#allocation2 + $0x84] sm:$0xf] 0
      %576 = vst [vmem:[#allocation2 + $0x88] sm:$0xf] 0
      %577 = vst [vmem:[#allocation2 + $0x8c] sm:$0xf] 0
      %578 = vst [vmem:[#allocation2 + $0x90] sm:$0xf] 0
      %579 = vst [vmem:[#allocation2 + $0x94] sm:$0xf] 0
      %580 = vst [vmem:[#allocation2 + $0x98] sm:$0xf] 0
      %581 = vst [vmem:[#allocation2 + $0x9c] sm:$0xf] 0
      %582 = vst [vmem:[#allocation2 + $0xa0] sm:$0xf] 0
      %583 = vst [vmem:[#allocation2 + $0xa4] sm:$0xf] 0
      %584 = vst [vmem:[#allocation2 + $0xa8] sm:$0xf] 0
      %585 = vst [vmem:[#allocation2 + $0xac] sm:$0xf] 0
      %586 = vst [vmem:[#allocation2 + $0xb0] sm:$0xf] 0
      %587 = vst [vmem:[#allocation2 + $0xb4] sm:$0xf] 0
      %588 = vst [vmem:[#allocation2 + $0xb8] sm:$0xf] 0
      %589 = vst [vmem:[#allocation2 + $0xbc] sm:$0xf] 0
      %590 = vst [vmem:[#allocation2 + $0xc0] sm:$0xf] 0
      %591 = vst [vmem:[#allocation2 + $0xc4] sm:$0xf] 0
      %592 = vst [vmem:[#allocation2 + $0xc8] sm:$0xf] 0
      %593 = vst [vmem:[#allocation2 + $0xcc] sm:$0xf] 0
      %594 = vst [vmem:[#allocation2 + $0xd0] sm:$0xf] 0
      %595 = vst [vmem:[#allocation2 + $0xd4] sm:$0xf] 0
      %596 = vst [vmem:[#allocation2 + $0xd8] sm:$0xf] 0
      %597 = vst [vmem:[#allocation2 + $0xdc] sm:$0xf] 0
      %598 = vst [vmem:[#allocation2 + $0xe0] sm:$0xf] 0
      %599 = vst [vmem:[#allocation2 + $0xe4] sm:$0xf] 0
      %600 = vst [vmem:[#allocation2 + $0xe8] sm:$0xf] 0
      %601 = vst [vmem:[#allocation2 + $0xec] sm:$0xf] 0
      %602 = vst [vmem:[#allocation2 + $0xf0] sm:$0xf] 0
      %603 = vst [vmem:[#allocation2 + $0xf4] sm:$0xf] 0
      %604 = vst [vmem:[#allocation2 + $0xf8] sm:$0xf] 0
      %605 = vst [vmem:[#allocation2 + $0xfc] sm:$0xf] 0
      %606 = vst [vmem:[#allocation2 + $0x100] sm:$0xf] 0
      %607 = vst [vmem:[#allocation2 + $0x104] sm:$0xf] 0
      %608 = vst [vmem:[#allocation2 + $0x108] sm:$0xf] 0
      %609 = vst [vmem:[#allocation2 + $0x10c] sm:$0xf] 0
      %610 = vst [vmem:[#allocation2 + $0x110] sm:$0xf] 0
      %611 = vst [vmem:[#allocation2 + $0x114] sm:$0xf] 0
      %612 = vst [vmem:[#allocation2 + $0x118] sm:$0xf] 0
      %613 = vst [vmem:[#allocation2 + $0x11c] sm:$0xf] 0
      %614 = vst [vmem:[#allocation2 + $0x120] sm:$0xf] 0
      %615 = vst [vmem:[#allocation2 + $0x124] sm:$0xf] 0
      %616 = vst [vmem:[#allocation2 + $0x128] sm:$0xf] 0
      %617 = vst [vmem:[#allocation2 + $0x12c] sm:$0xf] 0
      %618 = vst [vmem:[#allocation2 + $0x130] sm:$0xf] 0
      %619 = vst [vmem:[#allocation2 + $0x134] sm:$0xf] 0
      %620 = vst [vmem:[#allocation2 + $0x138] sm:$0xf] 0
      %621 = vst [vmem:[#allocation2 + $0x13c] sm:$0xf] 0
      %622 = vst [vmem:[#allocation2 + $0x140] sm:$0xf] 0
      %623 = vst [vmem:[#allocation2 + $0x144] sm:$0xf] 0
      %624 = vst [vmem:[#allocation2 + $0x148] sm:$0xf] 0
      %625 = vst [vmem:[#allocation2 + $0x14c] sm:$0xf] 0
      %626 = vst [vmem:[#allocation2 + $0x150] sm:$0xf] 0
      %627 = vst [vmem:[#allocation2 + $0x154] sm:$0xf] 0
      %628 = vst [vmem:[#allocation2 + $0x158] sm:$0xf] 0
      %629 = vst [vmem:[#allocation2 + $0x15c] sm:$0xf] 0
      %630 = vst [vmem:[#allocation2 + $0x160] sm:$0xf] 0
      %631 = vst [vmem:[#allocation2 + $0x164] sm:$0xf] 0
      %s632 = scalar_lea.vmem [#allocation2], 20
      %633 = vst [vmem:[%s632 + $0x8] sm:$0xf] %v510
      %634 = vst [vmem:[%s632 + $0xc] sm:$0xf] %v511
      %635 = vst [vmem:[%s632 + $0x1c] sm:$0xf] %v512
      %636 = vst [vmem:[%s632 + $0x20] sm:$0xf] %v513
      %637 = vst [vmem:[%s632 + $0x30] sm:$0xf] %v514
      %638 = vst [vmem:[%s632 + $0x34] sm:$0xf] %v515
      %639 = vst [vmem:[%s632 + $0x44] sm:$0xf] %v516
      %640 = vst [vmem:[%s632 + $0x48] sm:$0xf] %v517
      %641 = vst [vmem:[%s632 + $0x58] sm:$0xf] %v518
      %642 = vst [vmem:[%s632 + $0x5c] sm:$0xf] %v519
      %643 = vst [vmem:[%s632 + $0x6c] sm:$0xf] %v520
      %644 = vst [vmem:[%s632 + $0x70] sm:$0xf] %v521
      %645 = vst [vmem:[%s632 + $0x80] sm:$0xf] %v522
      %646 = vst [vmem:[%s632 + $0x84] sm:$0xf] %v523
      %647 = vst [vmem:[%s632 + $0x94] sm:$0xf] %v524
      %648 = vst [vmem:[%s632 + $0x98] sm:$0xf] %v525
      %649 = vst [vmem:[%s632 + $0xa8] sm:$0xf] %v526
      %650 = vst [vmem:[%s632 + $0xac] sm:$0xf] %v527
      %651 = vst [vmem:[%s632 + $0xbc] sm:$0xf] %v528
      %652 = vst [vmem:[%s632 + $0xc0] sm:$0xf] %v529
      %653 = vst [vmem:[%s632 + $0xd0] sm:$0xf] %v530
      %654 = vst [vmem:[%s632 + $0xd4] sm:$0xf] %v531
      %655 = vst [vmem:[%s632 + $0xe4] sm:$0xf] %v532
      %656 = vst [vmem:[%s632 + $0xe8] sm:$0xf] %v533
      %657 = vst [vmem:[%s632 + $0xf8] sm:$0xf] %v534
      %658 = vst [vmem:[%s632 + $0xfc] sm:$0xf] %v535
      %659 = vst [vmem:[%s632 + $0x10c] sm:$0xf] %v536
      %660 = vst [vmem:[%s632 + $0x110] sm:$0xf] %v537
      %661 = vst [vmem:[%s632 + $0x120] sm:$0xf] %v538
      %662 = vst [vmem:[%s632 + $0x124] sm:$0xf] %v539
      %663 = vst [vmem:[%s632 + $0x134] sm:$0xf] %v540
      %664 = vst [vmem:[%s632 + $0x138] sm:$0xf] %v541
      %v665 = vld [vmem:[#allocation2 + $0x4] sm:$0x8]
      %v666 = vld [vmem:[#allocation2 + $0x8] sm:$0xf]
      %v667 = vld [vmem:[#allocation2 + $0xc] sm:$0xf]
      %v668 = vld [vmem:[#allocation2 + $0x18] sm:$0x8]
      %v669 = vld [vmem:[#allocation2 + $0x1c] sm:$0xf]
      %v670 = vld [vmem:[#allocation2 + $0x20] sm:$0xf]
      %v671 = vld [vmem:[#allocation2 + $0x2c] sm:$0x8]
      %v672 = vld [vmem:[#allocation2 + $0x30] sm:$0xf]
      %v673 = vld [vmem:[#allocation2 + $0x34] sm:$0xf]
      %v674 = vld [vmem:[#allocation2 + $0x40] sm:$0x8]
      %v675 = vld [vmem:[#allocation2 + $0x44] sm:$0xf]
      %v676 = vld [vmem:[#allocation2 + $0x48] sm:$0xf]
      %v677 = vld [vmem:[#allocation2 + $0x54] sm:$0x8]
      %v678 = vld [vmem:[#allocation2 + $0x58] sm:$0xf]
      %v679 = vld [vmem:[#allocation2 + $0x5c] sm:$0xf]
      %v680 = vld [vmem:[#allocation2 + $0x68] sm:$0x8]
      %v681 = vld [vmem:[#allocation2 + $0x6c] sm:$0xf]
      %v682 = vld [vmem:[#allocation2 + $0x70] sm:$0xf]
      %v683 = vld [vmem:[#allocation2 + $0x7c] sm:$0x8]
      %v684 = vld [vmem:[#allocation2 + $0x80] sm:$0xf]
      %v685 = vld [vmem:[#allocation2 + $0x84] sm:$0xf]
      %v686 = vld [vmem:[#allocation2 + $0x90] sm:$0x8]
      %v687 = vld [vmem:[#allocation2 + $0x94] sm:$0xf]
      %v688 = vld [vmem:[#allocation2 + $0x98] sm:$0xf]
      %v689 = vld [vmem:[#allocation2 + $0xa4] sm:$0x8]
      %v690 = vld [vmem:[#allocation2 + $0xa8] sm:$0xf]
      %v691 = vld [vmem:[#allocation2 + $0xac] sm:$0xf]
      %v692 = vld [vmem:[#allocation2 + $0xb8] sm:$0x8]
      %v693 = vld [vmem:[#allocation2 + $0xbc] sm:$0xf]
      %v694 = vld [vmem:[#allocation2 + $0xc0] sm:$0xf]
      %v695 = vld [vmem:[#allocation2 + $0xcc] sm:$0x8]
      %v696 = vld [vmem:[#allocation2 + $0xd0] sm:$0xf]
      %v697 = vld [vmem:[#allocation2 + $0xd4] sm:$0xf]
      %v698 = vld [vmem:[#allocation2 + $0xe0] sm:$0x8]
      %v699 = vld [vmem:[#allocation2 + $0xe4] sm:$0xf]
      %v700 = vld [vmem:[#allocation2 + $0xe8] sm:$0xf]
      %v701 = vld [vmem:[#allocation2 + $0xf4] sm:$0x8]
      %v702 = vld [vmem:[#allocation2 + $0xf8] sm:$0xf]
      %v703 = vld [vmem:[#allocation2 + $0xfc] sm:$0xf]
      %v704 = vld [vmem:[#allocation2 + $0x108] sm:$0x8]
      %v705 = vld [vmem:[#allocation2 + $0x10c] sm:$0xf]
      %v706 = vld [vmem:[#allocation2 + $0x110] sm:$0xf]
      %v707 = vld [vmem:[#allocation2 + $0x11c] sm:$0x8]
      %v708 = vld [vmem:[#allocation2 + $0x120] sm:$0xf]
      %v709 = vld [vmem:[#allocation2 + $0x124] sm:$0xf]
      %v710 = vld [vmem:[#allocation2 + $0x130] sm:$0x8]
      %v711 = vld [vmem:[#allocation2 + $0x134] sm:$0xf]
      %v712 = vld [vmem:[#allocation2 + $0x138] sm:$0xf]
      %v713 = vld [vmem:[#allocation2 + $0x144] sm:$0x8]
      %v714 = vld [vmem:[#allocation2 + $0x148] sm:$0xf]
      %v715 = vld [vmem:[#allocation2 + $0x14c] sm:$0xf]
      %v716 = vld [vmem:[#allocation2 + $0x158] sm:$0x8]
      %v717 = vld [vmem:[#allocation2 + $0x15c] sm:$0xf]
      %v718 = vld [vmem:[#allocation2 + $0x160] sm:$0xf]
      %v719 = vld [vmem:[#allocation2 + $0x8] sm:$0xf]
      %v720 = vld [vmem:[#allocation2 + $0xc] sm:$0xf]
      %v721 = vld [vmem:[#allocation2 + $0x10] sm:$0x1]
      %v722 = vld [vmem:[#allocation2 + $0x1c] sm:$0xf]
      %v723 = vld [vmem:[#allocation2 + $0x20] sm:$0xf]
      %v724 = vld [vmem:[#allocation2 + $0x24] sm:$0x1]
      %v725 = vld [vmem:[#allocation2 + $0x30] sm:$0xf]
      %v726 = vld [vmem:[#allocation2 + $0x34] sm:$0xf]
      %v727 = vld [vmem:[#allocation2 + $0x38] sm:$0x1]
      %v728 = vld [vmem:[#allocation2 + $0x44] sm:$0xf]
      %v729 = vld [vmem:[#allocation2 + $0x48] sm:$0xf]
      %v730 = vld [vmem:[#allocation2 + $0x4c] sm:$0x1]
      %v731 = vld [vmem:[#allocation2 + $0x58] sm:$0xf]
      %v732 = vld [vmem:[#allocation2 + $0x5c] sm:$0xf]
      %v733 = vld [vmem:[#allocation2 + $0x60] sm:$0x1]
      %v734 = vld [vmem:[#allocation2 + $0x6c] sm:$0xf]
      %v735 = vld [vmem:[#allocation2 + $0x70] sm:$0xf]
      %v736 = vld [vmem:[#allocation2 + $0x74] sm:$0x1]
      %v737 = vld [vmem:[#allocation2 + $0x80] sm:$0xf]
      %v738 = vld [vmem:[#allocation2 + $0x84] sm:$0xf]
      %v739 = vld [vmem:[#allocation2 + $0x88] sm:$0x1]
      %v740 = vld [vmem:[#allocation2 + $0x94] sm:$0xf]
      %v741 = vld [vmem:[#allocation2 + $0x98] sm:$0xf]
      %v742 = vld [vmem:[#allocation2 + $0x9c] sm:$0x1]
      %v743 = vld [vmem:[#allocation2 + $0xa8] sm:$0xf]
      %v744 = vld [vmem:[#allocation2 + $0xac] sm:$0xf]
      %v745 = vld [vmem:[#allocation2 + $0xb0] sm:$0x1]
      %v746 = vld [vmem:[#allocation2 + $0xbc] sm:$0xf]
      %v747 = vld [vmem:[#allocation2 + $0xc0] sm:$0xf]
      %v748 = vld [vmem:[#allocation2 + $0xc4] sm:$0x1]
      %v749 = vld [vmem:[#allocation2 + $0xd0] sm:$0xf]
      %v750 = vld [vmem:[#allocation2 + $0xd4] sm:$0xf]
      %v751 = vld [vmem:[#allocation2 + $0xd8] sm:$0x1]
      %v752 = vld [vmem:[#allocation2 + $0xe4] sm:$0xf]
      %v753 = vld [vmem:[#allocation2 + $0xe8] sm:$0xf]
      %v754 = vld [vmem:[#allocation2 + $0xec] sm:$0x1]
      %v755 = vld [vmem:[#allocation2 + $0xf8] sm:$0xf]
      %v756 = vld [vmem:[#allocation2 + $0xfc] sm:$0xf]
      %v757 = vld [vmem:[#allocation2 + $0x100] sm:$0x1]
      %v758 = vld [vmem:[#allocation2 + $0x10c] sm:$0xf]
      %v759 = vld [vmem:[#allocation2 + $0x110] sm:$0xf]
      %v760 = vld [vmem:[#allocation2 + $0x114] sm:$0x1]
      %v761 = vld [vmem:[#allocation2 + $0x120] sm:$0xf]
      %v762 = vld [vmem:[#allocation2 + $0x124] sm:$0xf]
      %v763 = vld [vmem:[#allocation2 + $0x128] sm:$0x1]
      %v764 = vld [vmem:[#allocation2 + $0x134] sm:$0xf]
      %v765 = vld [vmem:[#allocation2 + $0x138] sm:$0xf]
      %v766 = vld [vmem:[#allocation2 + $0x13c] sm:$0x1]
      %v767 = vld [vmem:[#allocation2 + $0x148] sm:$0xf]
      %v768 = vld [vmem:[#allocation2 + $0x14c] sm:$0xf]
      %v769 = vld [vmem:[#allocation2 + $0x150] sm:$0x1]
      %v770 = vld [vmem:[#allocation2 + $0x15c] sm:$0xf]
      %v771 = vld [vmem:[#allocation2 + $0x160] sm:$0xf]
      %v772 = vld [vmem:[#allocation2 + $0x164] sm:$0x1]
      %v827 = vunpack.c.l.b16 %v665
      %v828 = vunpack.c.l.b16 %v666
      %v829 = vunpack.c.l.b16 %v667
      %v830 = vunpack.c.l.b16 %v668
      %v831 = vunpack.c.l.b16 %v669
      %v832 = vunpack.c.l.b16 %v670
      %v833 = vunpack.c.l.b16 %v671
      %v834 = vunpack.c.l.b16 %v672
      %v835 = vunpack.c.l.b16 %v673
      %v836 = vunpack.c.l.b16 %v674
      %v837 = vunpack.c.l.b16 %v675
      %v838 = vunpack.c.l.b16 %v676
      %v839 = vunpack.c.l.b16 %v677
      %v840 = vunpack.c.l.b16 %v678
      %v841 = vunpack.c.l.b16 %v679
      %v842 = vunpack.c.l.b16 %v680
      %v843 = vunpack.c.l.b16 %v681
      %v844 = vunpack.c.l.b16 %v682
      %v845 = vunpack.c.l.b16 %v683
      %v846 = vunpack.c.l.b16 %v684
      %v847 = vunpack.c.l.b16 %v685
      %v848 = vunpack.c.l.b16 %v686
      %v849 = vunpack.c.l.b16 %v687
      %v850 = vunpack.c.l.b16 %v688
      %v851 = vunpack.c.l.b16 %v689
      %v852 = vunpack.c.l.b16 %v690
      %v853 = vunpack.c.l.b16 %v691
      %v854 = vunpack.c.l.b16 %v692
      %v855 = vunpack.c.l.b16 %v693
      %v856 = vunpack.c.l.b16 %v694
      %v857 = vunpack.c.l.b16 %v695
      %v858 = vunpack.c.l.b16 %v696
      %v859 = vunpack.c.l.b16 %v697
      %v860 = vunpack.c.l.b16 %v698
      %v861 = vunpack.c.l.b16 %v699
      %v862 = vunpack.c.l.b16 %v700
      %v863 = vunpack.c.l.b16 %v701
      %v864 = vunpack.c.l.b16 %v702
      %v865 = vunpack.c.l.b16 %v703
      %v866 = vunpack.c.l.b16 %v704
      %v867 = vunpack.c.l.b16 %v705
      %v868 = vunpack.c.l.b16 %v706
      %v869 = vunpack.c.l.b16 %v707
      %v870 = vunpack.c.l.b16 %v708
      %v871 = vunpack.c.l.b16 %v709
      %v872 = vunpack.c.l.b16 %v710
      %v873 = vunpack.c.l.b16 %v711
      %v874 = vunpack.c.l.b16 %v712
      %v875 = vunpack.c.l.b16 %v713
      %v876 = vunpack.c.l.b16 %v714
      %v877 = vunpack.c.l.b16 %v715
      %v878 = vunpack.c.l.b16 %v716
      %v879 = vunpack.c.l.b16 %v717
      %v880 = vunpack.c.l.b16 %v718
      %v881 = vpack.c.b16 %v828, %v827
      %v882 = vpack.c.b16 %v829, %v829
      %v883 = vpack.c.b16 %v831, %v830
      %v884 = vpack.c.b16 %v832, %v832
      %v885 = vpack.c.b16 %v834, %v833
      %v886 = vpack.c.b16 %v835, %v835
      %v887 = vpack.c.b16 %v837, %v836
      %v888 = vpack.c.b16 %v838, %v838
      %v889 = vpack.c.b16 %v840, %v839
      %v890 = vpack.c.b16 %v841, %v841
      %v891 = vpack.c.b16 %v843, %v842
      %v892 = vpack.c.b16 %v844, %v844
      %v893 = vpack.c.b16 %v846, %v845
      %v894 = vpack.c.b16 %v847, %v847
      %v895 = vpack.c.b16 %v849, %v848
      %v896 = vpack.c.b16 %v850, %v850
      %v897 = vpack.c.b16 %v852, %v851
      %v898 = vpack.c.b16 %v853, %v853
      %v899 = vpack.c.b16 %v855, %v854
      %v900 = vpack.c.b16 %v856, %v856
      %v901 = vpack.c.b16 %v858, %v857
      %v902 = vpack.c.b16 %v859, %v859
      %v903 = vpack.c.b16 %v861, %v860
      %v904 = vpack.c.b16 %v862, %v862
      %v905 = vpack.c.b16 %v864, %v863
      %v906 = vpack.c.b16 %v865, %v865
      %v907 = vpack.c.b16 %v867, %v866
      %v908 = vpack.c.b16 %v868, %v868
      %v909 = vpack.c.b16 %v870, %v869
      %v910 = vpack.c.b16 %v871, %v871
      %v911 = vpack.c.b16 %v873, %v872
      %v912 = vpack.c.b16 %v874, %v874
      %v913 = vpack.c.b16 %v876, %v875
      %v914 = vpack.c.b16 %v877, %v877
      %v915 = vpack.c.b16 %v879, %v878
      %v916 = vpack.c.b16 %v880, %v880
      %v917 = vpack.c.b16 %v829, %v828
      %v918 = vpack.c.b16 %v832, %v831
      %v919 = vpack.c.b16 %v835, %v834
      %v920 = vpack.c.b16 %v838, %v837
      %v921 = vpack.c.b16 %v841, %v840
      %v922 = vpack.c.b16 %v844, %v843
      %v923 = vpack.c.b16 %v847, %v846
      %v924 = vpack.c.b16 %v850, %v849
      %v925 = vpack.c.b16 %v853, %v852
      %v926 = vpack.c.b16 %v856, %v855
      %v927 = vpack.c.b16 %v859, %v858
      %v928 = vpack.c.b16 %v862, %v861
      %v929 = vpack.c.b16 %v865, %v864
      %v930 = vpack.c.b16 %v868, %v867
      %v931 = vpack.c.b16 %v871, %v870
      %v932 = vpack.c.b16 %v874, %v873
      %v933 = vpack.c.b16 %v877, %v876
      %v934 = vpack.c.b16 %v880, %v879
      %v936 = vshrl.u32 %v917, 16
      %v938 = vrot.slane %v936, 4
      %v939 = vshll.u32 %v917, 16
      %v941 = vrot.slane %v939, 5
      %v942 = vor.u32 %v938, %v941
      %v944 = vshrl.u32 %v918, 16
      %v946 = vrot.slane %v944, 4
      %v947 = vshll.u32 %v918, 16
      %v949 = vrot.slane %v947, 5
      %v950 = vor.u32 %v946, %v949
      %v952 = vshrl.u32 %v919, 16
      %v954 = vrot.slane %v952, 4
      %v955 = vshll.u32 %v919, 16
      %v957 = vrot.slane %v955, 5
      %v958 = vor.u32 %v954, %v957
      %v960 = vshrl.u32 %v920, 16
      %v962 = vrot.slane %v960, 4
      %v963 = vshll.u32 %v920, 16
      %v965 = vrot.slane %v963, 5
      %v966 = vor.u32 %v962, %v965
      %v968 = vshrl.u32 %v921, 16
      %v970 = vrot.slane %v968, 4
      %v971 = vshll.u32 %v921, 16
      %v973 = vrot.slane %v971, 5
      %v974 = vor.u32 %v970, %v973
      %v976 = vshrl.u32 %v922, 16
      %v978 = vrot.slane %v976, 4
      %v979 = vshll.u32 %v922, 16
      %v981 = vrot.slane %v979, 5
      %v982 = vor.u32 %v978, %v981
      %v984 = vshrl.u32 %v923, 16
      %v986 = vrot.slane %v984, 4
      %v987 = vshll.u32 %v923, 16
      %v989 = vrot.slane %v987, 5
      %v990 = vor.u32 %v986, %v989
      %v992 = vshrl.u32 %v924, 16
      %v994 = vrot.slane %v992, 4
      %v995 = vshll.u32 %v924, 16
      %v997 = vrot.slane %v995, 5
      %v998 = vor.u32 %v994, %v997
      %v1000 = vshrl.u32 %v925, 16
      %v1002 = vrot.slane %v1000, 4
      %v1003 = vshll.u32 %v925, 16
      %v1005 = vrot.slane %v1003, 5
      %v1006 = vor.u32 %v1002, %v1005
      %v1008 = vshrl.u32 %v926, 16
      %v1010 = vrot.slane %v1008, 4
      %v1011 = vshll.u32 %v926, 16
      %v1013 = vrot.slane %v1011, 5
      %v1014 = vor.u32 %v1010, %v1013
      %v1016 = vshrl.u32 %v927, 16
      %v1018 = vrot.slane %v1016, 4
      %v1019 = vshll.u32 %v927, 16
      %v1021 = vrot.slane %v1019, 5
      %v1022 = vor.u32 %v1018, %v1021
      %v1024 = vshrl.u32 %v928, 16
      %v1026 = vrot.slane %v1024, 4
      %v1027 = vshll.u32 %v928, 16
      %v1029 = vrot.slane %v1027, 5
      %v1030 = vor.u32 %v1026, %v1029
      %v1032 = vshrl.u32 %v929, 16
      %v1034 = vrot.slane %v1032, 4
      %v1035 = vshll.u32 %v929, 16
      %v1037 = vrot.slane %v1035, 5
      %v1038 = vor.u32 %v1034, %v1037
      %v1040 = vshrl.u32 %v930, 16
      %v1042 = vrot.slane %v1040, 4
      %v1043 = vshll.u32 %v930, 16
      %v1045 = vrot.slane %v1043, 5
      %v1046 = vor.u32 %v1042, %v1045
      %v1048 = vshrl.u32 %v931, 16
      %v1050 = vrot.slane %v1048, 4
      %v1051 = vshll.u32 %v931, 16
      %v1053 = vrot.slane %v1051, 5
      %v1054 = vor.u32 %v1050, %v1053
      %v1056 = vshrl.u32 %v932, 16
      %v1058 = vrot.slane %v1056, 4
      %v1059 = vshll.u32 %v932, 16
      %v1061 = vrot.slane %v1059, 5
      %v1062 = vor.u32 %v1058, %v1061
      %v1064 = vshrl.u32 %v933, 16
      %v1066 = vrot.slane %v1064, 4
      %v1067 = vshll.u32 %v933, 16
      %v1069 = vrot.slane %v1067, 5
      %v1070 = vor.u32 %v1066, %v1069
      %v1072 = vshrl.u32 %v934, 16
      %v1074 = vrot.slane %v1072, 4
      %v1075 = vshll.u32 %v934, 16
      %v1077 = vrot.slane %v1075, 5
      %v1078 = vor.u32 %v1074, %v1077
      %v1133 = vunpack.c.l.b16 %v719
      %v1134 = vunpack.c.l.b16 %v720
      %v1135 = vunpack.c.l.b16 %v721
      %v1136 = vunpack.c.l.b16 %v722
      %v1137 = vunpack.c.l.b16 %v723
      %v1138 = vunpack.c.l.b16 %v724
      %v1139 = vunpack.c.l.b16 %v725
      %v1140 = vunpack.c.l.b16 %v726
      %v1141 = vunpack.c.l.b16 %v727
      %v1142 = vunpack.c.l.b16 %v728
      %v1143 = vunpack.c.l.b16 %v729
      %v1144 = vunpack.c.l.b16 %v730
      %v1145 = vunpack.c.l.b16 %v731
      %v1146 = vunpack.c.l.b16 %v732
      %v1147 = vunpack.c.l.b16 %v733
      %v1148 = vunpack.c.l.b16 %v734
      %v1149 = vunpack.c.l.b16 %v735
      %v1150 = vunpack.c.l.b16 %v736
      %v1151 = vunpack.c.l.b16 %v737
      %v1152 = vunpack.c.l.b16 %v738
      %v1153 = vunpack.c.l.b16 %v739
      %v1154 = vunpack.c.l.b16 %v740
      %v1155 = vunpack.c.l.b16 %v741
      %v1156 = vunpack.c.l.b16 %v742
      %v1157 = vunpack.c.l.b16 %v743
      %v1158 = vunpack.c.l.b16 %v744
      %v1159 = vunpack.c.l.b16 %v745
      %v1160 = vunpack.c.l.b16 %v746
      %v1161 = vunpack.c.l.b16 %v747
      %v1162 = vunpack.c.l.b16 %v748
      %v1163 = vunpack.c.l.b16 %v749
      %v1164 = vunpack.c.l.b16 %v750
      %v1165 = vunpack.c.l.b16 %v751
      %v1166 = vunpack.c.l.b16 %v752
      %v1167 = vunpack.c.l.b16 %v753
      %v1168 = vunpack.c.l.b16 %v754
      %v1169 = vunpack.c.l.b16 %v755
      %v1170 = vunpack.c.l.b16 %v756
      %v1171 = vunpack.c.l.b16 %v757
      %v1172 = vunpack.c.l.b16 %v758
      %v1173 = vunpack.c.l.b16 %v759
      %v1174 = vunpack.c.l.b16 %v760
      %v1175 = vunpack.c.l.b16 %v761
      %v1176 = vunpack.c.l.b16 %v762
      %v1177 = vunpack.c.l.b16 %v763
      %v1178 = vunpack.c.l.b16 %v764
      %v1179 = vunpack.c.l.b16 %v765
      %v1180 = vunpack.c.l.b16 %v766
      %v1181 = vunpack.c.l.b16 %v767
      %v1182 = vunpack.c.l.b16 %v768
      %v1183 = vunpack.c.l.b16 %v769
      %v1184 = vunpack.c.l.b16 %v770
      %v1185 = vunpack.c.l.b16 %v771
      %v1186 = vunpack.c.l.b16 %v772
      %v1187 = vpack.c.b16 %v1134, %v1133
      %v1188 = vpack.c.b16 %v1135, %v1135
      %v1189 = vpack.c.b16 %v1137, %v1136
      %v1190 = vpack.c.b16 %v1138, %v1138
      %v1191 = vpack.c.b16 %v1140, %v1139
      %v1192 = vpack.c.b16 %v1141, %v1141
      %v1193 = vpack.c.b16 %v1143, %v1142
      %v1194 = vpack.c.b16 %v1144, %v1144
      %v1195 = vpack.c.b16 %v1146, %v1145
      %v1196 = vpack.c.b16 %v1147, %v1147
      %v1197 = vpack.c.b16 %v1149, %v1148
      %v1198 = vpack.c.b16 %v1150, %v1150
      %v1199 = vpack.c.b16 %v1152, %v1151
      %v1200 = vpack.c.b16 %v1153, %v1153
      %v1201 = vpack.c.b16 %v1155, %v1154
      %v1202 = vpack.c.b16 %v1156, %v1156
      %v1203 = vpack.c.b16 %v1158, %v1157
      %v1204 = vpack.c.b16 %v1159, %v1159
      %v1205 = vpack.c.b16 %v1161, %v1160
      %v1206 = vpack.c.b16 %v1162, %v1162
      %v1207 = vpack.c.b16 %v1164, %v1163
      %v1208 = vpack.c.b16 %v1165, %v1165
      %v1209 = vpack.c.b16 %v1167, %v1166
      %v1210 = vpack.c.b16 %v1168, %v1168
      %v1211 = vpack.c.b16 %v1170, %v1169
      %v1212 = vpack.c.b16 %v1171, %v1171
      %v1213 = vpack.c.b16 %v1173, %v1172
      %v1214 = vpack.c.b16 %v1174, %v1174
      %v1215 = vpack.c.b16 %v1176, %v1175
      %v1216 = vpack.c.b16 %v1177, %v1177
      %v1217 = vpack.c.b16 %v1179, %v1178
      %v1218 = vpack.c.b16 %v1180, %v1180
      %v1219 = vpack.c.b16 %v1182, %v1181
      %v1220 = vpack.c.b16 %v1183, %v1183
      %v1221 = vpack.c.b16 %v1185, %v1184
      %v1222 = vpack.c.b16 %v1186, %v1186
      %vm1223 = vcmask 1042432
      %v1224 = vrot.slane %v1187, 5
      %v1225 = vrot.slane %v1188, 5
      %v1226 = vsel %vm1223, %v1224, %v1225
      %v1227 = vrot.slane %v1189, 5
      %v1228 = vrot.slane %v1190, 5
      %v1229 = vsel %vm1223, %v1227, %v1228
      %v1230 = vrot.slane %v1191, 5
      %v1231 = vrot.slane %v1192, 5
      %v1232 = vsel %vm1223, %v1230, %v1231
      %v1233 = vrot.slane %v1193, 5
      %v1234 = vrot.slane %v1194, 5
      %v1235 = vsel %vm1223, %v1233, %v1234
      %v1236 = vrot.slane %v1195, 5
      %v1237 = vrot.slane %v1196, 5
      %v1238 = vsel %vm1223, %v1236, %v1237
      %v1239 = vrot.slane %v1197, 5
      %v1240 = vrot.slane %v1198, 5
      %v1241 = vsel %vm1223, %v1239, %v1240
      %v1242 = vrot.slane %v1199, 5
      %v1243 = vrot.slane %v1200, 5
      %v1244 = vsel %vm1223, %v1242, %v1243
      %v1245 = vrot.slane %v1201, 5
      %v1246 = vrot.slane %v1202, 5
      %v1247 = vsel %vm1223, %v1245, %v1246
      %v1248 = vrot.slane %v1203, 5
      %v1249 = vrot.slane %v1204, 5
      %v1250 = vsel %vm1223, %v1248, %v1249
      %v1251 = vrot.slane %v1205, 5
      %v1252 = vrot.slane %v1206, 5
      %v1253 = vsel %vm1223, %v1251, %v1252
      %v1254 = vrot.slane %v1207, 5
      %v1255 = vrot.slane %v1208, 5
      %v1256 = vsel %vm1223, %v1254, %v1255
      %v1257 = vrot.slane %v1209, 5
      %v1258 = vrot.slane %v1210, 5
      %v1259 = vsel %vm1223, %v1257, %v1258
      %v1260 = vrot.slane %v1211, 5
      %v1261 = vrot.slane %v1212, 5
      %v1262 = vsel %vm1223, %v1260, %v1261
      %v1263 = vrot.slane %v1213, 5
      %v1264 = vrot.slane %v1214, 5
      %v1265 = vsel %vm1223, %v1263, %v1264
      %v1266 = vrot.slane %v1215, 5
      %v1267 = vrot.slane %v1216, 5
      %v1268 = vsel %vm1223, %v1266, %v1267
      %v1269 = vrot.slane %v1217, 5
      %v1270 = vrot.slane %v1218, 5
      %v1271 = vsel %vm1223, %v1269, %v1270
      %v1272 = vrot.slane %v1219, 5
      %v1273 = vrot.slane %v1220, 5
      %v1274 = vsel %vm1223, %v1272, %v1273
      %v1275 = vrot.slane %v1221, 5
      %v1276 = vrot.slane %v1222, 5
      %v1277 = vsel %vm1223, %v1275, %v1276
      %vm1278 = vsmask.f32 4352
      %v1280 = vshrl.u32 %v881, 16
      %v1282 = vrot.slane %v1280, 3
      %v1283 = vshll.u32 %v881, 16
      %v1285 = vrot.slane %v1283, 4
      %v1286 = vor.u32 %v1282, %v1285
      %v1288 = vshrl.u32 %v882, 16
      %v1290 = vrot.slane %v1288, 3
      %v1291 = vshll.u32 %v882, 16
      %v1293 = vrot.slane %v1291, 4
      %v1294 = vor.u32 %v1290, %v1293
      %v1295 = vsel %vm1278, %v1286, %v1294
      %v1297 = vshrl.u32 %v942, 16
      %v1299 = vrot.slane %v1297, 3
      %v1300 = vshll.u32 %v942, 16
      %v1302 = vrot.slane %v1300, 4
      %v1303 = vor.u32 %v1299, %v1302
      %v1304 = vsel %vm1278, %v1303, %v1303
      %v1306 = vshrl.u32 %v1224, 16
      %v1308 = vrot.slane %v1306, 3
      %v1309 = vshll.u32 %v1224, 16
      %v1311 = vrot.slane %v1309, 4
      %v1312 = vor.u32 %v1308, %v1311
      %v1314 = vshrl.u32 %v1226, 16
      %v1316 = vrot.slane %v1314, 3
      %v1317 = vshll.u32 %v1226, 16
      %v1319 = vrot.slane %v1317, 4
      %v1320 = vor.u32 %v1316, %v1319
      %v1321 = vsel %vm1278, %v1312, %v1320
      %v1323 = vshrl.u32 %v883, 16
      %v1325 = vrot.slane %v1323, 3
      %v1326 = vshll.u32 %v883, 16
      %v1328 = vrot.slane %v1326, 4
      %v1329 = vor.u32 %v1325, %v1328
      %v1331 = vshrl.u32 %v884, 16
      %v1333 = vrot.slane %v1331, 3
      %v1334 = vshll.u32 %v884, 16
      %v1336 = vrot.slane %v1334, 4
      %v1337 = vor.u32 %v1333, %v1336
      %v1338 = vsel %vm1278, %v1329, %v1337
      %v1340 = vshrl.u32 %v950, 16
      %v1342 = vrot.slane %v1340, 3
      %v1343 = vshll.u32 %v950, 16
      %v1345 = vrot.slane %v1343, 4
      %v1346 = vor.u32 %v1342, %v1345
      %v1347 = vsel %vm1278, %v1346, %v1346
      %v1349 = vshrl.u32 %v1227, 16
      %v1351 = vrot.slane %v1349, 3
      %v1352 = vshll.u32 %v1227, 16
      %v1354 = vrot.slane %v1352, 4
      %v1355 = vor.u32 %v1351, %v1354
      %v1357 = vshrl.u32 %v1229, 16
      %v1359 = vrot.slane %v1357, 3
      %v1360 = vshll.u32 %v1229, 16
      %v1362 = vrot.slane %v1360, 4
      %v1363 = vor.u32 %v1359, %v1362
      %v1364 = vsel %vm1278, %v1355, %v1363
      %v1366 = vshrl.u32 %v885, 16
      %v1368 = vrot.slane %v1366, 3
      %v1369 = vshll.u32 %v885, 16
      %v1371 = vrot.slane %v1369, 4
      %v1372 = vor.u32 %v1368, %v1371
      %v1374 = vshrl.u32 %v886, 16
      %v1376 = vrot.slane %v1374, 3
      %v1377 = vshll.u32 %v886, 16
      %v1379 = vrot.slane %v1377, 4
      %v1380 = vor.u32 %v1376, %v1379
      %v1381 = vsel %vm1278, %v1372, %v1380
      %v1383 = vshrl.u32 %v958, 16
      %v1385 = vrot.slane %v1383, 3
      %v1386 = vshll.u32 %v958, 16
      %v1388 = vrot.slane %v1386, 4
      %v1389 = vor.u32 %v1385, %v1388
      %v1390 = vsel %vm1278, %v1389, %v1389
      %v1392 = vshrl.u32 %v1230, 16
      %v1394 = vrot.slane %v1392, 3
      %v1395 = vshll.u32 %v1230, 16
      %v1397 = vrot.slane %v1395, 4
      %v1398 = vor.u32 %v1394, %v1397
      %v1400 = vshrl.u32 %v1232, 16
      %v1402 = vrot.slane %v1400, 3
      %v1403 = vshll.u32 %v1232, 16
      %v1405 = vrot.slane %v1403, 4
      %v1406 = vor.u32 %v1402, %v1405
      %v1407 = vsel %vm1278, %v1398, %v1406
      %v1409 = vshrl.u32 %v887, 16
      %v1411 = vrot.slane %v1409, 3
      %v1412 = vshll.u32 %v887, 16
      %v1414 = vrot.slane %v1412, 4
      %v1415 = vor.u32 %v1411, %v1414
      %v1417 = vshrl.u32 %v888, 16
      %v1419 = vrot.slane %v1417, 3
      %v1420 = vshll.u32 %v888, 16
      %v1422 = vrot.slane %v1420, 4
      %v1423 = vor.u32 %v1419, %v1422
      %v1424 = vsel %vm1278, %v1415, %v1423
      %v1426 = vshrl.u32 %v966, 16
      %v1428 = vrot.slane %v1426, 3
      %v1429 = vshll.u32 %v966, 16
      %v1431 = vrot.slane %v1429, 4
      %v1432 = vor.u32 %v1428, %v1431
      %v1433 = vsel %vm1278, %v1432, %v1432
      %v1435 = vshrl.u32 %v1233, 16
      %v1437 = vrot.slane %v1435, 3
      %v1438 = vshll.u32 %v1233, 16
      %v1440 = vrot.slane %v1438, 4
      %v1441 = vor.u32 %v1437, %v1440
      %v1443 = vshrl.u32 %v1235, 16
      %v1445 = vrot.slane %v1443, 3
      %v1446 = vshll.u32 %v1235, 16
      %v1448 = vrot.slane %v1446, 4
      %v1449 = vor.u32 %v1445, %v1448
      %v1450 = vsel %vm1278, %v1441, %v1449
      %v1452 = vshrl.u32 %v889, 16
      %v1454 = vrot.slane %v1452, 3
      %v1455 = vshll.u32 %v889, 16
      %v1457 = vrot.slane %v1455, 4
      %v1458 = vor.u32 %v1454, %v1457
      %v1460 = vshrl.u32 %v890, 16
      %v1462 = vrot.slane %v1460, 3
      %v1463 = vshll.u32 %v890, 16
      %v1465 = vrot.slane %v1463, 4
      %v1466 = vor.u32 %v1462, %v1465
      %v1467 = vsel %vm1278, %v1458, %v1466
      %v1469 = vshrl.u32 %v974, 16
      %v1471 = vrot.slane %v1469, 3
      %v1472 = vshll.u32 %v974, 16
      %v1474 = vrot.slane %v1472, 4
      %v1475 = vor.u32 %v1471, %v1474
      %v1476 = vsel %vm1278, %v1475, %v1475
      %v1478 = vshrl.u32 %v1236, 16
      %v1480 = vrot.slane %v1478, 3
      %v1481 = vshll.u32 %v1236, 16
      %v1483 = vrot.slane %v1481, 4
      %v1484 = vor.u32 %v1480, %v1483
      %v1486 = vshrl.u32 %v1238, 16
      %v1488 = vrot.slane %v1486, 3
      %v1489 = vshll.u32 %v1238, 16
      %v1491 = vrot.slane %v1489, 4
      %v1492 = vor.u32 %v1488, %v1491
      %v1493 = vsel %vm1278, %v1484, %v1492
      %v1495 = vshrl.u32 %v891, 16
      %v1497 = vrot.slane %v1495, 3
      %v1498 = vshll.u32 %v891, 16
      %v1500 = vrot.slane %v1498, 4
      %v1501 = vor.u32 %v1497, %v1500
      %v1503 = vshrl.u32 %v892, 16
      %v1505 = vrot.slane %v1503, 3
      %v1506 = vshll.u32 %v892, 16
      %v1508 = vrot.slane %v1506, 4
      %v1509 = vor.u32 %v1505, %v1508
      %v1510 = vsel %vm1278, %v1501, %v1509
      %v1512 = vshrl.u32 %v982, 16
      %v1514 = vrot.slane %v1512, 3
      %v1515 = vshll.u32 %v982, 16
      %v1517 = vrot.slane %v1515, 4
      %v1518 = vor.u32 %v1514, %v1517
      %v1519 = vsel %vm1278, %v1518, %v1518
      %v1521 = vshrl.u32 %v1239, 16
      %v1523 = vrot.slane %v1521, 3
      %v1524 = vshll.u32 %v1239, 16
      %v1526 = vrot.slane %v1524, 4
      %v1527 = vor.u32 %v1523, %v1526
      %v1529 = vshrl.u32 %v1241, 16
      %v1531 = vrot.slane %v1529, 3
      %v1532 = vshll.u32 %v1241, 16
      %v1534 = vrot.slane %v1532, 4
      %v1535 = vor.u32 %v1531, %v1534
      %v1536 = vsel %vm1278, %v1527, %v1535
      %v1538 = vshrl.u32 %v893, 16
      %v1540 = vrot.slane %v1538, 3
      %v1541 = vshll.u32 %v893, 16
      %v1543 = vrot.slane %v1541, 4
      %v1544 = vor.u32 %v1540, %v1543
      %v1546 = vshrl.u32 %v894, 16
      %v1548 = vrot.slane %v1546, 3
      %v1549 = vshll.u32 %v894, 16
      %v1551 = vrot.slane %v1549, 4
      %v1552 = vor.u32 %v1548, %v1551
      %v1553 = vsel %vm1278, %v1544, %v1552
      %v1555 = vshrl.u32 %v990, 16
      %v1557 = vrot.slane %v1555, 3
      %v1558 = vshll.u32 %v990, 16
      %v1560 = vrot.slane %v1558, 4
      %v1561 = vor.u32 %v1557, %v1560
      %v1562 = vsel %vm1278, %v1561, %v1561
      %v1564 = vshrl.u32 %v1242, 16
      %v1566 = vrot.slane %v1564, 3
      %v1567 = vshll.u32 %v1242, 16
      %v1569 = vrot.slane %v1567, 4
      %v1570 = vor.u32 %v1566, %v1569
      %v1572 = vshrl.u32 %v1244, 16
      %v1574 = vrot.slane %v1572, 3
      %v1575 = vshll.u32 %v1244, 16
      %v1577 = vrot.slane %v1575, 4
      %v1578 = vor.u32 %v1574, %v1577
      %v1579 = vsel %vm1278, %v1570, %v1578
      %v1581 = vshrl.u32 %v895, 16
      %v1583 = vrot.slane %v1581, 3
      %v1584 = vshll.u32 %v895, 16
      %v1586 = vrot.slane %v1584, 4
      %v1587 = vor.u32 %v1583, %v1586
      %v1589 = vshrl.u32 %v896, 16
      %v1591 = vrot.slane %v1589, 3
      %v1592 = vshll.u32 %v896, 16
      %v1594 = vrot.slane %v1592, 4
      %v1595 = vor.u32 %v1591, %v1594
      %v1596 = vsel %vm1278, %v1587, %v1595
      %v1598 = vshrl.u32 %v998, 16
      %v1600 = vrot.slane %v1598, 3
      %v1601 = vshll.u32 %v998, 16
      %v1603 = vrot.slane %v1601, 4
      %v1604 = vor.u32 %v1600, %v1603
      %v1605 = vsel %vm1278, %v1604, %v1604
      %v1607 = vshrl.u32 %v1245, 16
      %v1609 = vrot.slane %v1607, 3
      %v1610 = vshll.u32 %v1245, 16
      %v1612 = vrot.slane %v1610, 4
      %v1613 = vor.u32 %v1609, %v1612
      %v1615 = vshrl.u32 %v1247, 16
      %v1617 = vrot.slane %v1615, 3
      %v1618 = vshll.u32 %v1247, 16
      %v1620 = vrot.slane %v1618, 4
      %v1621 = vor.u32 %v1617, %v1620
      %v1622 = vsel %vm1278, %v1613, %v1621
      %v1624 = vshrl.u32 %v897, 16
      %v1626 = vrot.slane %v1624, 3
      %v1627 = vshll.u32 %v897, 16
      %v1629 = vrot.slane %v1627, 4
      %v1630 = vor.u32 %v1626, %v1629
      %v1632 = vshrl.u32 %v898, 16
      %v1634 = vrot.slane %v1632, 3
      %v1635 = vshll.u32 %v898, 16
      %v1637 = vrot.slane %v1635, 4
      %v1638 = vor.u32 %v1634, %v1637
      %v1639 = vsel %vm1278, %v1630, %v1638
      %v1641 = vshrl.u32 %v1006, 16
      %v1643 = vrot.slane %v1641, 3
      %v1644 = vshll.u32 %v1006, 16
      %v1646 = vrot.slane %v1644, 4
      %v1647 = vor.u32 %v1643, %v1646
      %v1648 = vsel %vm1278, %v1647, %v1647
      %v1650 = vshrl.u32 %v1248, 16
      %v1652 = vrot.slane %v1650, 3
      %v1653 = vshll.u32 %v1248, 16
      %v1655 = vrot.slane %v1653, 4
      %v1656 = vor.u32 %v1652, %v1655
      %v1658 = vshrl.u32 %v1250, 16
      %v1660 = vrot.slane %v1658, 3
      %v1661 = vshll.u32 %v1250, 16
      %v1663 = vrot.slane %v1661, 4
      %v1664 = vor.u32 %v1660, %v1663
      %v1665 = vsel %vm1278, %v1656, %v1664
      %v1667 = vshrl.u32 %v899, 16
      %v1669 = vrot.slane %v1667, 3
      %v1670 = vshll.u32 %v899, 16
      %v1672 = vrot.slane %v1670, 4
      %v1673 = vor.u32 %v1669, %v1672
      %v1675 = vshrl.u32 %v900, 16
      %v1677 = vrot.slane %v1675, 3
      %v1678 = vshll.u32 %v900, 16
      %v1680 = vrot.slane %v1678, 4
      %v1681 = vor.u32 %v1677, %v1680
      %v1682 = vsel %vm1278, %v1673, %v1681
      %v1684 = vshrl.u32 %v1014, 16
      %v1686 = vrot.slane %v1684, 3
      %v1687 = vshll.u32 %v1014, 16
      %v1689 = vrot.slane %v1687, 4
      %v1690 = vor.u32 %v1686, %v1689
      %v1691 = vsel %vm1278, %v1690, %v1690
      %v1693 = vshrl.u32 %v1251, 16
      %v1695 = vrot.slane %v1693, 3
      %v1696 = vshll.u32 %v1251, 16
      %v1698 = vrot.slane %v1696, 4
      %v1699 = vor.u32 %v1695, %v1698
      %v1701 = vshrl.u32 %v1253, 16
      %v1703 = vrot.slane %v1701, 3
      %v1704 = vshll.u32 %v1253, 16
      %v1706 = vrot.slane %v1704, 4
      %v1707 = vor.u32 %v1703, %v1706
      %v1708 = vsel %vm1278, %v1699, %v1707
      %v1710 = vshrl.u32 %v901, 16
      %v1712 = vrot.slane %v1710, 3
      %v1713 = vshll.u32 %v901, 16
      %v1715 = vrot.slane %v1713, 4
      %v1716 = vor.u32 %v1712, %v1715
      %v1718 = vshrl.u32 %v902, 16
      %v1720 = vrot.slane %v1718, 3
      %v1721 = vshll.u32 %v902, 16
      %v1723 = vrot.slane %v1721, 4
      %v1724 = vor.u32 %v1720, %v1723
      %v1725 = vsel %vm1278, %v1716, %v1724
      %v1727 = vshrl.u32 %v1022, 16
      %v1729 = vrot.slane %v1727, 3
      %v1730 = vshll.u32 %v1022, 16
      %v1732 = vrot.slane %v1730, 4
      %v1733 = vor.u32 %v1729, %v1732
      %v1734 = vsel %vm1278, %v1733, %v1733
      %v1736 = vshrl.u32 %v1254, 16
      %v1738 = vrot.slane %v1736, 3
      %v1739 = vshll.u32 %v1254, 16
      %v1741 = vrot.slane %v1739, 4
      %v1742 = vor.u32 %v1738, %v1741
      %v1744 = vshrl.u32 %v1256, 16
      %v1746 = vrot.slane %v1744, 3
      %v1747 = vshll.u32 %v1256, 16
      %v1749 = vrot.slane %v1747, 4
      %v1750 = vor.u32 %v1746, %v1749
      %v1751 = vsel %vm1278, %v1742, %v1750
      %v1753 = vshrl.u32 %v903, 16
      %v1755 = vrot.slane %v1753, 3
      %v1756 = vshll.u32 %v903, 16
      %v1758 = vrot.slane %v1756, 4
      %v1759 = vor.u32 %v1755, %v1758
      %v1761 = vshrl.u32 %v904, 16
      %v1763 = vrot.slane %v1761, 3
      %v1764 = vshll.u32 %v904, 16
      %v1766 = vrot.slane %v1764, 4
      %v1767 = vor.u32 %v1763, %v1766
      %v1768 = vsel %vm1278, %v1759, %v1767
      %v1770 = vshrl.u32 %v1030, 16
      %v1772 = vrot.slane %v1770, 3
      %v1773 = vshll.u32 %v1030, 16
      %v1775 = vrot.slane %v1773, 4
      %v1776 = vor.u32 %v1772, %v1775
      %v1777 = vsel %vm1278, %v1776, %v1776
      %v1779 = vshrl.u32 %v1257, 16
      %v1781 = vrot.slane %v1779, 3
      %v1782 = vshll.u32 %v1257, 16
      %v1784 = vrot.slane %v1782, 4
      %v1785 = vor.u32 %v1781, %v1784
      %v1787 = vshrl.u32 %v1259, 16
      %v1789 = vrot.slane %v1787, 3
      %v1790 = vshll.u32 %v1259, 16
      %v1792 = vrot.slane %v1790, 4
      %v1793 = vor.u32 %v1789, %v1792
      %v1794 = vsel %vm1278, %v1785, %v1793
      %v1796 = vshrl.u32 %v905, 16
      %v1798 = vrot.slane %v1796, 3
      %v1799 = vshll.u32 %v905, 16
      %v1801 = vrot.slane %v1799, 4
      %v1802 = vor.u32 %v1798, %v1801
      %v1804 = vshrl.u32 %v906, 16
      %v1806 = vrot.slane %v1804, 3
      %v1807 = vshll.u32 %v906, 16
      %v1809 = vrot.slane %v1807, 4
      %v1810 = vor.u32 %v1806, %v1809
      %v1811 = vsel %vm1278, %v1802, %v1810
      %v1813 = vshrl.u32 %v1038, 16
      %v1815 = vrot.slane %v1813, 3
      %v1816 = vshll.u32 %v1038, 16
      %v1818 = vrot.slane %v1816, 4
      %v1819 = vor.u32 %v1815, %v1818
      %v1820 = vsel %vm1278, %v1819, %v1819
      %v1822 = vshrl.u32 %v1260, 16
      %v1824 = vrot.slane %v1822, 3
      %v1825 = vshll.u32 %v1260, 16
      %v1827 = vrot.slane %v1825, 4
      %v1828 = vor.u32 %v1824, %v1827
      %v1830 = vshrl.u32 %v1262, 16
      %v1832 = vrot.slane %v1830, 3
      %v1833 = vshll.u32 %v1262, 16
      %v1835 = vrot.slane %v1833, 4
      %v1836 = vor.u32 %v1832, %v1835
      %v1837 = vsel %vm1278, %v1828, %v1836
      %v1839 = vshrl.u32 %v907, 16
      %v1841 = vrot.slane %v1839, 3
      %v1842 = vshll.u32 %v907, 16
      %v1844 = vrot.slane %v1842, 4
      %v1845 = vor.u32 %v1841, %v1844
      %v1847 = vshrl.u32 %v908, 16
      %v1849 = vrot.slane %v1847, 3
      %v1850 = vshll.u32 %v908, 16
      %v1852 = vrot.slane %v1850, 4
      %v1853 = vor.u32 %v1849, %v1852
      %v1854 = vsel %vm1278, %v1845, %v1853
      %v1856 = vshrl.u32 %v1046, 16
      %v1858 = vrot.slane %v1856, 3
      %v1859 = vshll.u32 %v1046, 16
      %v1861 = vrot.slane %v1859, 4
      %v1862 = vor.u32 %v1858, %v1861
      %v1863 = vsel %vm1278, %v1862, %v1862
      %v1865 = vshrl.u32 %v1263, 16
      %v1867 = vrot.slane %v1865, 3
      %v1868 = vshll.u32 %v1263, 16
      %v1870 = vrot.slane %v1868, 4
      %v1871 = vor.u32 %v1867, %v1870
      %v1873 = vshrl.u32 %v1265, 16
      %v1875 = vrot.slane %v1873, 3
      %v1876 = vshll.u32 %v1265, 16
      %v1878 = vrot.slane %v1876, 4
      %v1879 = vor.u32 %v1875, %v1878
      %v1880 = vsel %vm1278, %v1871, %v1879
      %v1882 = vshrl.u32 %v909, 16
      %v1884 = vrot.slane %v1882, 3
      %v1885 = vshll.u32 %v909, 16
      %v1887 = vrot.slane %v1885, 4
      %v1888 = vor.u32 %v1884, %v1887
      %v1890 = vshrl.u32 %v910, 16
      %v1892 = vrot.slane %v1890, 3
      %v1893 = vshll.u32 %v910, 16
      %v1895 = vrot.slane %v1893, 4
      %v1896 = vor.u32 %v1892, %v1895
      %v1897 = vsel %vm1278, %v1888, %v1896
      %v1899 = vshrl.u32 %v1054, 16
      %v1901 = vrot.slane %v1899, 3
      %v1902 = vshll.u32 %v1054, 16
      %v1904 = vrot.slane %v1902, 4
      %v1905 = vor.u32 %v1901, %v1904
      %v1906 = vsel %vm1278, %v1905, %v1905
      %v1908 = vshrl.u32 %v1266, 16
      %v1910 = vrot.slane %v1908, 3
      %v1911 = vshll.u32 %v1266, 16
      %v1913 = vrot.slane %v1911, 4
      %v1914 = vor.u32 %v1910, %v1913
      %v1916 = vshrl.u32 %v1268, 16
      %v1918 = vrot.slane %v1916, 3
      %v1919 = vshll.u32 %v1268, 16
      %v1921 = vrot.slane %v1919, 4
      %v1922 = vor.u32 %v1918, %v1921
      %v1923 = vsel %vm1278, %v1914, %v1922
      %v1925 = vshrl.u32 %v911, 16
      %v1927 = vrot.slane %v1925, 3
      %v1928 = vshll.u32 %v911, 16
      %v1930 = vrot.slane %v1928, 4
      %v1931 = vor.u32 %v1927, %v1930
      %v1933 = vshrl.u32 %v912, 16
      %v1935 = vrot.slane %v1933, 3
      %v1936 = vshll.u32 %v912, 16
      %v1938 = vrot.slane %v1936, 4
      %v1939 = vor.u32 %v1935, %v1938
      %v1940 = vsel %vm1278, %v1931, %v1939
      %v1942 = vshrl.u32 %v1062, 16
      %v1944 = vrot.slane %v1942, 3
      %v1945 = vshll.u32 %v1062, 16
      %v1947 = vrot.slane %v1945, 4
      %v1948 = vor.u32 %v1944, %v1947
      %v1949 = vsel %vm1278, %v1948, %v1948
      %v1951 = vshrl.u32 %v1269, 16
      %v1953 = vrot.slane %v1951, 3
      %v1954 = vshll.u32 %v1269, 16
      %v1956 = vrot.slane %v1954, 4
      %v1957 = vor.u32 %v1953, %v1956
      %v1959 = vshrl.u32 %v1271, 16
      %v1961 = vrot.slane %v1959, 3
      %v1962 = vshll.u32 %v1271, 16
      %v1964 = vrot.slane %v1962, 4
      %v1965 = vor.u32 %v1961, %v1964
      %v1966 = vsel %vm1278, %v1957, %v1965
      %v2015 = vld [vmem:[%s3] sm:$0xf]
      %v2016 = vld [vmem:[%s3 + $0x4] sm:$0xf]
      %v2017 = vld [vmem:[%s3 + $0x8] sm:$0xf]
      %v2018 = vld [vmem:[%s3 + $0xc] sm:$0xf]
      %v2019 = vld [vmem:[%s3 + $0x10] sm:$0xf]
      %v2020 = vld [vmem:[%s3 + $0x14] sm:$0xf]
      %v2021 = vld [vmem:[%s3 + $0x18] sm:$0xf]
      %v2022 = vld [vmem:[%s3 + $0x1c] sm:$0xf]
      %v2023 = vld [vmem:[%s3 + $0x20] sm:$0xf]
      %v2024 = vld [vmem:[%s3 + $0x24] sm:$0xf]
      %v2025 = vld [vmem:[%s3 + $0x28] sm:$0xf]
      %v2026 = vld [vmem:[%s3 + $0x2c] sm:$0xf]
      %v2027 = vld [vmem:[%s3 + $0x30] sm:$0xf]
      %v2028 = vld [vmem:[%s3 + $0x34] sm:$0xf]
      %v2029 = vld [vmem:[%s3 + $0x38] sm:$0xf]
      %v2030 = vld [vmem:[%s3 + $0x3c] sm:$0xf]
      %v2031 = vld [vmem:[%s3 + $0x40] sm:$0xf]
      %v2032 = vld [vmem:[%s3 + $0x44] sm:$0xf]
      %v2033 = vld [vmem:[%s3 + $0x48] sm:$0xf]
      %v2034 = vld [vmem:[%s3 + $0x4c] sm:$0xf]
      %v2035 = vld [vmem:[%s3 + $0x50] sm:$0xf]
      %v2036 = vld [vmem:[%s3 + $0x54] sm:$0xf]
      %v2037 = vld [vmem:[%s3 + $0x58] sm:$0xf]
      %v2038 = vld [vmem:[%s3 + $0x5c] sm:$0xf]
      %v2039 = vld [vmem:[%s3 + $0x60] sm:$0xf]
      %v2040 = vld [vmem:[%s3 + $0x64] sm:$0xf]
      %v2041 = vld [vmem:[%s3 + $0x68] sm:$0xf]
      %v2042 = vld [vmem:[%s3 + $0x6c] sm:$0xf]
      %v2043 = vld [vmem:[%s3 + $0x70] sm:$0xf]
      %v2044 = vld [vmem:[%s3 + $0x74] sm:$0xf]
      %v2045 = vld [vmem:[%s3 + $0x78] sm:$0xf]
      %v2046 = vld [vmem:[%s3 + $0x7c] sm:$0xf]
      %v2047 = vld [vmem:[%s3 + $0x80] sm:$0xf]
      %v2048 = vld [vmem:[%s3 + $0x84] sm:$0xf]
      %v2049 = vld [vmem:[%s3 + $0x88] sm:$0xf]
      %v2050 = vld [vmem:[%s3 + $0x8c] sm:$0xf]
      %v2051 = vld [vmem:[%s3 + $0x90] sm:$0xf]
      %v2052 = vld [vmem:[%s3 + $0x94] sm:$0xf]
      %v2053 = vld [vmem:[%s3 + $0x98] sm:$0xf]
      %v2054 = vld [vmem:[%s3 + $0x9c] sm:$0xf]
      %v2055 = vld [vmem:[%s3 + $0xa0] sm:$0xf]
      %v2056 = vld [vmem:[%s3 + $0xa4] sm:$0xf]
      %v2057 = vld [vmem:[%s3 + $0xa8] sm:$0xf]
      %v2058 = vld [vmem:[%s3 + $0xac] sm:$0xf]
      %v2059 = vld [vmem:[%s3 + $0xb0] sm:$0xf]
      %v2060 = vld [vmem:[%s3 + $0xb4] sm:$0xf]
      %v2061 = vld [vmem:[%s3 + $0xb8] sm:$0xf]
      %v2062 = vld [vmem:[%s3 + $0xbc] sm:$0xf]
      %v2064 = vshrl.u32 %v913, 16
      %v2066 = vrot.slane %v2064, 3
      %v2067 = vshll.u32 %v913, 16
      %v2069 = vrot.slane %v2067, 4
      %v2070 = vor.u32 %v2066, %v2069
      %v2072 = vshrl.u32 %v914, 16
      %v2074 = vrot.slane %v2072, 3
      %v2075 = vshll.u32 %v914, 16
      %v2077 = vrot.slane %v2075, 4
      %v2078 = vor.u32 %v2074, %v2077
      %v2079 = vsel %vm1278, %v2070, %v2078
      %v2081 = vshrl.u32 %v1070, 16
      %v2083 = vrot.slane %v2081, 3
      %v2084 = vshll.u32 %v1070, 16
      %v2086 = vrot.slane %v2084, 4
      %v2087 = vor.u32 %v2083, %v2086
      %v2088 = vsel %vm1278, %v2087, %v2087
      %v2090 = vshrl.u32 %v1272, 16
      %v2092 = vrot.slane %v2090, 3
      %v2093 = vshll.u32 %v1272, 16
      %v2095 = vrot.slane %v2093, 4
      %v2096 = vor.u32 %v2092, %v2095
      %v2098 = vshrl.u32 %v1274, 16
      %v2100 = vrot.slane %v2098, 3
      %v2101 = vshll.u32 %v1274, 16
      %v2103 = vrot.slane %v2101, 4
      %v2104 = vor.u32 %v2100, %v2103
      %v2105 = vsel %vm1278, %v2096, %v2104
      %s2109 = scalar_lea.vmem %s3, 192
      %v2110 = vld [vmem:[%s2109] sm:$0xf]
      %v2111 = vld [vmem:[%s2109 + $0x4] sm:$0xf]
      %v2112 = vld [vmem:[%s2109 + $0x8] sm:$0xf]
      %v2113 = vld [vmem:[%s2109 + $0xc] sm:$0xf]
      %v2114 = vld [vmem:[%s2109 + $0x10] sm:$0xf]
      %v2115 = vld [vmem:[%s2109 + $0x14] sm:$0xf]
      %v2116 = vld [vmem:[%s2109 + $0x18] sm:$0xf]
      %v2117 = vld [vmem:[%s2109 + $0x1c] sm:$0xf]
      %v2118 = vld [vmem:[%s2109 + $0x20] sm:$0xf]
      %v2119 = vld [vmem:[%s2109 + $0x24] sm:$0xf]
      %v2120 = vld [vmem:[%s2109 + $0x28] sm:$0xf]
      %v2121 = vld [vmem:[%s2109 + $0x2c] sm:$0xf]
      %v2122 = vld [vmem:[%s2109 + $0x30] sm:$0xf]
      %v2123 = vld [vmem:[%s2109 + $0x34] sm:$0xf]
      %v2124 = vld [vmem:[%s2109 + $0x38] sm:$0xf]
      %v2125 = vld [vmem:[%s2109 + $0x3c] sm:$0xf]
      %v2126 = vld [vmem:[%s2109 + $0x40] sm:$0xf]
      %v2127 = vld [vmem:[%s2109 + $0x44] sm:$0xf]
      %v2128 = vld [vmem:[%s2109 + $0x48] sm:$0xf]
      %v2129 = vld [vmem:[%s2109 + $0x4c] sm:$0xf]
      %v2130 = vld [vmem:[%s2109 + $0x50] sm:$0xf]
      %v2131 = vld [vmem:[%s2109 + $0x54] sm:$0xf]
      %v2132 = vld [vmem:[%s2109 + $0x58] sm:$0xf]
      %v2133 = vld [vmem:[%s2109 + $0x5c] sm:$0xf]
      %v2134 = vld [vmem:[%s2109 + $0x60] sm:$0xf]
      %v2135 = vld [vmem:[%s2109 + $0x64] sm:$0xf]
      %v2136 = vld [vmem:[%s2109 + $0x68] sm:$0xf]
      %v2137 = vld [vmem:[%s2109 + $0x6c] sm:$0xf]
      %v2138 = vld [vmem:[%s2109 + $0x70] sm:$0xf]
      %v2139 = vld [vmem:[%s2109 + $0x74] sm:$0xf]
      %v2140 = vld [vmem:[%s2109 + $0x78] sm:$0xf]
      %v2141 = vld [vmem:[%s2109 + $0x7c] sm:$0xf]
      %v2142 = vld [vmem:[%s2109 + $0x80] sm:$0xf]
      %v2143 = vld [vmem:[%s2109 + $0x84] sm:$0xf]
      %v2144 = vld [vmem:[%s2109 + $0x88] sm:$0xf]
      %v2145 = vld [vmem:[%s2109 + $0x8c] sm:$0xf]
      %v2146 = vld [vmem:[%s2109 + $0x90] sm:$0xf]
      %v2147 = vld [vmem:[%s2109 + $0x94] sm:$0xf]
      %v2148 = vld [vmem:[%s2109 + $0x98] sm:$0xf]
      %v2149 = vld [vmem:[%s2109 + $0x9c] sm:$0xf]
      %v2150 = vld [vmem:[%s2109 + $0xa0] sm:$0xf]
      %v2151 = vld [vmem:[%s2109 + $0xa4] sm:$0xf]
      %v2152 = vld [vmem:[%s2109 + $0xa8] sm:$0xf]
      %v2153 = vld [vmem:[%s2109 + $0xac] sm:$0xf]
      %v2154 = vld [vmem:[%s2109 + $0xb0] sm:$0xf]
      %v2155 = vld [vmem:[%s2109 + $0xb4] sm:$0xf]
      %v2156 = vld [vmem:[%s2109 + $0xb8] sm:$0xf]
      %v2157 = vld [vmem:[%s2109 + $0xbc] sm:$0xf]
      %v2206 = vunpack.c.l.b16 %v2110
      %v2207 = vunpack.c.l.b16 %v2111
      %v2208 = vunpack.c.l.b16 %v2112
      %v2209 = vunpack.c.l.b16 %v2113
      %v2210 = vunpack.c.l.b16 %v2114
      %v2211 = vunpack.c.l.b16 %v2115
      %v2212 = vunpack.c.l.b16 %v2116
      %v2213 = vunpack.c.l.b16 %v2117
      %v2214 = vunpack.c.l.b16 %v2118
      %v2215 = vunpack.c.l.b16 %v2119
      %v2216 = vunpack.c.l.b16 %v2120
      %v2217 = vunpack.c.l.b16 %v2121
      %v2218 = vunpack.c.l.b16 %v2122
      %v2219 = vunpack.c.l.b16 %v2123
      %v2220 = vunpack.c.l.b16 %v2124
      %v2221 = vunpack.c.l.b16 %v2125
      %v2222 = vunpack.c.l.b16 %v2126
      %v2223 = vunpack.c.l.b16 %v2127
      %v2224 = vunpack.c.l.b16 %v2128
      %v2225 = vunpack.c.l.b16 %v2129
      %v2226 = vunpack.c.l.b16 %v2130
      %v2227 = vunpack.c.l.b16 %v2131
      %v2228 = vunpack.c.l.b16 %v2132
      %v2229 = vunpack.c.l.b16 %v2133
      %v2230 = vunpack.c.l.b16 %v2134
      %v2231 = vunpack.c.l.b16 %v2135
      %v2232 = vunpack.c.l.b16 %v2136
      %v2233 = vunpack.c.l.b16 %v2137
      %v2234 = vunpack.c.l.b16 %v2138
      %v2235 = vunpack.c.l.b16 %v2139
      %v2236 = vunpack.c.l.b16 %v2140
      %v2237 = vunpack.c.l.b16 %v2141
      %v2238 = vunpack.c.l.b16 %v2142
      %v2239 = vunpack.c.l.b16 %v2143
      %v2240 = vunpack.c.l.b16 %v2144
      %v2241 = vunpack.c.l.b16 %v2145
      %v2242 = vunpack.c.l.b16 %v2146
      %v2243 = vunpack.c.l.b16 %v2147
      %v2244 = vunpack.c.l.b16 %v2148
      %v2245 = vunpack.c.l.b16 %v2149
      %v2246 = vunpack.c.l.b16 %v2150
      %v2247 = vunpack.c.l.b16 %v2151
      %v2248 = vunpack.c.l.b16 %v2152
      %v2249 = vunpack.c.l.b16 %v2153
      %v2250 = vunpack.c.l.b16 %v2154
      %v2251 = vunpack.c.l.b16 %v2155
      %v2252 = vunpack.c.l.b16 %v2156
      %v2253 = vunpack.c.l.b16 %v2157
      %v2254 = vpack.c.b16 %v2207, %v2206
      %v2255 = vpack.c.b16 %v2209, %v2208
      %v2256 = vpack.c.b16 %v2211, %v2210
      %v2257 = vpack.c.b16 %v2213, %v2212
      %v2258 = vpack.c.b16 %v2215, %v2214
      %v2259 = vpack.c.b16 %v2217, %v2216
      %v2260 = vpack.c.b16 %v2219, %v2218
      %v2261 = vpack.c.b16 %v2221, %v2220
      %v2262 = vpack.c.b16 %v2223, %v2222
      %v2263 = vpack.c.b16 %v2225, %v2224
      %v2264 = vpack.c.b16 %v2227, %v2226
      %v2265 = vpack.c.b16 %v2229, %v2228
      %v2266 = vpack.c.b16 %v2231, %v2230
      %v2267 = vpack.c.b16 %v2233, %v2232
      %v2268 = vpack.c.b16 %v2235, %v2234
      %v2269 = vpack.c.b16 %v2237, %v2236
      %v2270 = vpack.c.b16 %v2239, %v2238
      %v2271 = vpack.c.b16 %v2241, %v2240
      %v2272 = vpack.c.b16 %v2243, %v2242
      %v2273 = vpack.c.b16 %v2245, %v2244
      %v2274 = vpack.c.b16 %v2247, %v2246
      %v2275 = vpack.c.b16 %v2249, %v2248
      %v2276 = vpack.c.b16 %v2251, %v2250
      %v2277 = vpack.c.b16 %v2253, %v2252
      %2302 = vmatpush.bf16.msra.mxu0 %v2261
      %2303 = vmatpush.bf16.msra.mxu0 %v2260
      %2304 = vmatpush.bf16.msra.mxu0 %v2259
      %2305 = vmatpush.bf16.msra.mxu0 %v2258
      %2306 = vmatpush.bf16.msra.mxu0 %v2257
      %2307 = vmatpush.bf16.msra.mxu0 %v2256
      %2308 = vmatpush.bf16.msra.mxu0 %v2255
      %2309 = vmatpush.bf16.msra.mxu0 %v2254
      %2310 = vmatmul.bf16.gmra.mxu0 %v1338
      %v2311 = vpop.f32.mrf.mxu0
      %v2312 = vadd.f32 0.0, %v2311
      %v2313 = vpop.f32.mrf.mxu0
      %v2314 = vadd.f32 0.0, %v2313
      %2315 = vmatmul.bf16.gmra.mxu0 %v1381
      %v2316 = vpop.f32.mrf.mxu0
      %v2317 = vadd.f32 0.0, %v2316
      %v2318 = vpop.f32.mrf.mxu0
      %v2319 = vadd.f32 0.0, %v2318
      %2320 = vmatmul.bf16.gmra.mxu0 %v1424
      %v2321 = vpop.f32.mrf.mxu0
      %v2322 = vadd.f32 0.0, %v2321
      %v2323 = vpop.f32.mrf.mxu0
      %v2324 = vadd.f32 0.0, %v2323
      %2325 = vmatmul.bf16.gmra.mxu0 %v1467
      %v2326 = vpop.f32.mrf.mxu0
      %v2327 = vadd.f32 0.0, %v2326
      %v2328 = vpop.f32.mrf.mxu0
      %v2329 = vadd.f32 0.0, %v2328
      %2330 = vmatmul.bf16.gmra.mxu0 %v1510
      %v2331 = vpop.f32.mrf.mxu0
      %v2332 = vadd.f32 0.0, %v2331
      %v2333 = vpop.f32.mrf.mxu0
      %v2334 = vadd.f32 0.0, %v2333
      %2335 = vmatmul.bf16.gmra.mxu0 %v1553
      %v2336 = vpop.f32.mrf.mxu0
      %v2337 = vadd.f32 0.0, %v2336
      %v2338 = vpop.f32.mrf.mxu0
      %v2339 = vadd.f32 0.0, %v2338
      %2340 = vmatmul.bf16.gmra.mxu0 %v1596
      %v2341 = vpop.f32.mrf.mxu0
      %v2342 = vadd.f32 0.0, %v2341
      %v2343 = vpop.f32.mrf.mxu0
      %v2344 = vadd.f32 0.0, %v2343
      %2345 = vmatmul.bf16.gmra.mxu0 %v1639
      %v2346 = vpop.f32.mrf.mxu0
      %v2347 = vadd.f32 0.0, %v2346
      %v2348 = vpop.f32.mrf.mxu0
      %v2349 = vadd.f32 0.0, %v2348
      %2350 = vmatmul.bf16.gmra.mxu0 %v1682
      %v2351 = vpop.f32.mrf.mxu0
      %v2352 = vadd.f32 0.0, %v2351
      %v2353 = vpop.f32.mrf.mxu0
      %v2354 = vadd.f32 0.0, %v2353
      %2355 = vmatmul.bf16.gmra.mxu0 %v1725
      %v2356 = vpop.f32.mrf.mxu0
      %v2357 = vadd.f32 0.0, %v2356
      %v2358 = vpop.f32.mrf.mxu0
      %v2359 = vadd.f32 0.0, %v2358
      %2360 = vmatmul.bf16.gmra.mxu0 %v1768
      %v2361 = vpop.f32.mrf.mxu0
      %v2362 = vadd.f32 0.0, %v2361
      %v2363 = vpop.f32.mrf.mxu0
      %v2364 = vadd.f32 0.0, %v2363
      %2365 = vmatmul.bf16.gmra.mxu0 %v1811
      %v2366 = vpop.f32.mrf.mxu0
      %v2367 = vadd.f32 0.0, %v2366
      %v2368 = vpop.f32.mrf.mxu0
      %v2369 = vadd.f32 0.0, %v2368
      %2370 = vmatmul.bf16.gmra.mxu0 %v1854
      %v2371 = vpop.f32.mrf.mxu0
      %v2372 = vadd.f32 0.0, %v2371
      %v2373 = vpop.f32.mrf.mxu0
      %v2374 = vadd.f32 0.0, %v2373
      %2375 = vmatmul.bf16.gmra.mxu0 %v1897
      %v2376 = vpop.f32.mrf.mxu0
      %v2377 = vadd.f32 0.0, %v2376
      %v2378 = vpop.f32.mrf.mxu0
      %v2379 = vadd.f32 0.0, %v2378
      %2380 = vmatmul.bf16.gmra.mxu0 %v1940
      %v2381 = vpop.f32.mrf.mxu0
      %v2382 = vadd.f32 0.0, %v2381
      %v2383 = vpop.f32.mrf.mxu0
      %v2384 = vadd.f32 0.0, %v2383
      %2385 = vmatmul.bf16.gmra.mxu0 %v2079
      %v2386 = vpop.f32.mrf.mxu0
      %v2387 = vadd.f32 0.0, %v2386
      %v2388 = vpop.f32.mrf.mxu0
      %v2389 = vadd.f32 0.0, %v2388
      %2390 = vdwg.mxu0
      %2391 = vmatpush.bf16.msra.mxu0 %v2269
      %2392 = vmatpush.bf16.msra.mxu0 %v2268
      %2393 = vmatpush.bf16.msra.mxu0 %v2267
      %2394 = vmatpush.bf16.msra.mxu0 %v2266
      %2395 = vmatpush.bf16.msra.mxu0 %v2265
      %2396 = vmatpush.bf16.msra.mxu0 %v2264
      %2397 = vmatpush.bf16.msra.mxu0 %v2263
      %2398 = vmatpush.bf16.msra.mxu0 %v2262
      %2399 = vmatmul.bf16.gmra.mxu0 %v1347
      %v2400 = vpop.f32.mrf.mxu0
      %v2401 = vadd.f32 %v2312, %v2400
      %v2402 = vpop.f32.mrf.mxu0
      %v2403 = vadd.f32 %v2314, %v2402
      %2404 = vmatmul.bf16.gmra.mxu0 %v1390
      %v2405 = vpop.f32.mrf.mxu0
      %v2406 = vadd.f32 %v2317, %v2405
      %v2407 = vpop.f32.mrf.mxu0
      %v2408 = vadd.f32 %v2319, %v2407
      %2409 = vmatmul.bf16.gmra.mxu0 %v1433
      %v2410 = vpop.f32.mrf.mxu0
      %v2411 = vadd.f32 %v2322, %v2410
      %v2412 = vpop.f32.mrf.mxu0
      %v2413 = vadd.f32 %v2324, %v2412
      %2414 = vmatmul.bf16.gmra.mxu0 %v1476
      %v2415 = vpop.f32.mrf.mxu0
      %v2416 = vadd.f32 %v2327, %v2415
      %v2417 = vpop.f32.mrf.mxu0
      %v2418 = vadd.f32 %v2329, %v2417
      %2419 = vmatmul.bf16.gmra.mxu0 %v1519
      %v2420 = vpop.f32.mrf.mxu0
      %v2421 = vadd.f32 %v2332, %v2420
      %v2422 = vpop.f32.mrf.mxu0
      %v2423 = vadd.f32 %v2334, %v2422
      %2424 = vmatmul.bf16.gmra.mxu0 %v1562
      %v2425 = vpop.f32.mrf.mxu0
      %v2426 = vadd.f32 %v2337, %v2425
      %v2427 = vpop.f32.mrf.mxu0
      %v2428 = vadd.f32 %v2339, %v2427
      %2429 = vmatmul.bf16.gmra.mxu0 %v1605
      %v2430 = vpop.f32.mrf.mxu0
      %v2431 = vadd.f32 %v2342, %v2430
      %v2432 = vpop.f32.mrf.mxu0
      %v2433 = vadd.f32 %v2344, %v2432
      %2434 = vmatmul.bf16.gmra.mxu0 %v1648
      %v2435 = vpop.f32.mrf.mxu0
      %v2436 = vadd.f32 %v2347, %v2435
      %v2437 = vpop.f32.mrf.mxu0
      %v2438 = vadd.f32 %v2349, %v2437
      %2439 = vmatmul.bf16.gmra.mxu0 %v1691
      %v2440 = vpop.f32.mrf.mxu0
      %v2441 = vadd.f32 %v2352, %v2440
      %v2442 = vpop.f32.mrf.mxu0
      %v2443 = vadd.f32 %v2354, %v2442
      %2444 = vmatmul.bf16.gmra.mxu0 %v1734
      %v2445 = vpop.f32.mrf.mxu0
      %v2446 = vadd.f32 %v2357, %v2445
      %v2447 = vpop.f32.mrf.mxu0
      %v2448 = vadd.f32 %v2359, %v2447
      %2449 = vmatmul.bf16.gmra.mxu0 %v1777
      %v2450 = vpop.f32.mrf.mxu0
      %v2451 = vadd.f32 %v2362, %v2450
      %v2452 = vpop.f32.mrf.mxu0
      %v2453 = vadd.f32 %v2364, %v2452
      %2454 = vmatmul.bf16.gmra.mxu0 %v1820
      %v2455 = vpop.f32.mrf.mxu0
      %v2456 = vadd.f32 %v2367, %v2455
      %v2457 = vpop.f32.mrf.mxu0
      %v2458 = vadd.f32 %v2369, %v2457
      %2459 = vmatmul.bf16.gmra.mxu0 %v1863
      %v2460 = vpop.f32.mrf.mxu0
      %v2461 = vadd.f32 %v2372, %v2460
      %v2462 = vpop.f32.mrf.mxu0
      %v2463 = vadd.f32 %v2374, %v2462
      %2464 = vmatmul.bf16.gmra.mxu0 %v1906
      %v2465 = vpop.f32.mrf.mxu0
      %v2466 = vadd.f32 %v2377, %v2465
      %v2467 = vpop.f32.mrf.mxu0
      %v2468 = vadd.f32 %v2379, %v2467
      %2469 = vmatmul.bf16.gmra.mxu0 %v1949
      %v2470 = vpop.f32.mrf.mxu0
      %v2471 = vadd.f32 %v2382, %v2470
      %v2472 = vpop.f32.mrf.mxu0
      %v2473 = vadd.f32 %v2384, %v2472
      %2474 = vmatmul.bf16.gmra.mxu0 %v2088
      %v2475 = vpop.f32.mrf.mxu0
      %v2476 = vadd.f32 %v2387, %v2475
      %v2477 = vpop.f32.mrf.mxu0
      %v2478 = vadd.f32 %v2389, %v2477
      %2479 = vdwg.mxu0
      %2480 = vmatpush.bf16.msra.mxu0 %v2277
      %2481 = vmatpush.bf16.msra.mxu0 %v2276
      %2482 = vmatpush.bf16.msra.mxu0 %v2275
      %2483 = vmatpush.bf16.msra.mxu0 %v2274
      %2484 = vmatpush.bf16.msra.mxu0 %v2273
      %2485 = vmatpush.bf16.msra.mxu0 %v2272
      %2486 = vmatpush.bf16.msra.mxu0 %v2271
      %2487 = vmatpush.bf16.msra.mxu0 %v2270
      %2488 = vmatmul.bf16.gmra.mxu0 %v1364
      %v2489 = vpop.f32.mrf.mxu0
      %v2490 = vadd.f32 %v2401, %v2489
      %v2491 = vpop.f32.mrf.mxu0
      %v2492 = vadd.f32 %v2403, %v2491
      %2493 = vmatmul.bf16.gmra.mxu0 %v1407
      %v2494 = vpop.f32.mrf.mxu0
      %v2495 = vadd.f32 %v2406, %v2494
      %v2496 = vpop.f32.mrf.mxu0
      %v2497 = vadd.f32 %v2408, %v2496
      %2498 = vmatmul.bf16.gmra.mxu0 %v1450
      %v2499 = vpop.f32.mrf.mxu0
      %v2500 = vadd.f32 %v2411, %v2499
      %v2501 = vpop.f32.mrf.mxu0
      %v2502 = vadd.f32 %v2413, %v2501
      %2503 = vmatmul.bf16.gmra.mxu0 %v1493
      %v2504 = vpop.f32.mrf.mxu0
      %v2505 = vadd.f32 %v2416, %v2504
      %v2506 = vpop.f32.mrf.mxu0
      %v2507 = vadd.f32 %v2418, %v2506
      %2508 = vmatmul.bf16.gmra.mxu0 %v1536
      %v2509 = vpop.f32.mrf.mxu0
      %v2510 = vadd.f32 %v2421, %v2509
      %v2511 = vpop.f32.mrf.mxu0
      %v2512 = vadd.f32 %v2423, %v2511
      %2513 = vmatmul.bf16.gmra.mxu0 %v1579
      %v2514 = vpop.f32.mrf.mxu0
      %v2515 = vadd.f32 %v2426, %v2514
      %v2516 = vpop.f32.mrf.mxu0
      %v2517 = vadd.f32 %v2428, %v2516
      %2518 = vmatmul.bf16.gmra.mxu0 %v1622
      %v2519 = vpop.f32.mrf.mxu0
      %v2520 = vadd.f32 %v2431, %v2519
      %v2521 = vpop.f32.mrf.mxu0
      %v2522 = vadd.f32 %v2433, %v2521
      %2523 = vmatmul.bf16.gmra.mxu0 %v1665
      %v2524 = vpop.f32.mrf.mxu0
      %v2525 = vadd.f32 %v2436, %v2524
      %v2526 = vpop.f32.mrf.mxu0
      %v2527 = vadd.f32 %v2438, %v2526
      %2528 = vmatmul.bf16.gmra.mxu0 %v1708
      %v2529 = vpop.f32.mrf.mxu0
      %v2530 = vadd.f32 %v2441, %v2529
      %v2531 = vpop.f32.mrf.mxu0
      %v2532 = vadd.f32 %v2443, %v2531
      %2533 = vmatmul.bf16.gmra.mxu0 %v1751
      %v2534 = vpop.f32.mrf.mxu0
      %v2535 = vadd.f32 %v2446, %v2534
      %v2536 = vpop.f32.mrf.mxu0
      %v2537 = vadd.f32 %v2448, %v2536
      %2538 = vmatmul.bf16.gmra.mxu0 %v1794
      %v2539 = vpop.f32.mrf.mxu0
      %v2540 = vadd.f32 %v2451, %v2539
      %v2541 = vpop.f32.mrf.mxu0
      %v2542 = vadd.f32 %v2453, %v2541
      %2543 = vmatmul.bf16.gmra.mxu0 %v1837
      %v2544 = vpop.f32.mrf.mxu0
      %v2545 = vadd.f32 %v2456, %v2544
      %v2546 = vpop.f32.mrf.mxu0
      %v2547 = vadd.f32 %v2458, %v2546
      %2548 = vmatmul.bf16.gmra.mxu0 %v1880
      %v2549 = vpop.f32.mrf.mxu0
      %v2550 = vadd.f32 %v2461, %v2549
      %v2551 = vpop.f32.mrf.mxu0
      %v2552 = vadd.f32 %v2463, %v2551
      %2553 = vmatmul.bf16.gmra.mxu0 %v1923
      %v2554 = vpop.f32.mrf.mxu0
      %v2555 = vadd.f32 %v2466, %v2554
      %v2556 = vpop.f32.mrf.mxu0
      %v2557 = vadd.f32 %v2468, %v2556
      %2558 = vmatmul.bf16.gmra.mxu0 %v1966
      %v2559 = vpop.f32.mrf.mxu0
      %v2560 = vadd.f32 %v2471, %v2559
      %v2561 = vpop.f32.mrf.mxu0
      %v2562 = vadd.f32 %v2473, %v2561
      %2563 = vmatmul.bf16.gmra.mxu0 %v2105
      %v2564 = vpop.f32.mrf.mxu0
      %v2565 = vadd.f32 %v2476, %v2564
      %v2566 = vpop.f32.mrf.mxu0
      %v2567 = vadd.f32 %v2478, %v2566
      %2568 = vdwg.mxu0
      %v2617 = vunpack.c.l.b16 %v2015
      %v2618 = vunpack.c.l.b16 %v2016
      %v2619 = vunpack.c.l.b16 %v2017
      %v2620 = vunpack.c.l.b16 %v2018
      %v2621 = vunpack.c.l.b16 %v2019
      %v2622 = vunpack.c.l.b16 %v2020
      %v2623 = vunpack.c.l.b16 %v2021
      %v2624 = vunpack.c.l.b16 %v2022
      %v2625 = vunpack.c.l.b16 %v2023
      %v2626 = vunpack.c.l.b16 %v2024
      %v2627 = vunpack.c.l.b16 %v2025
      %v2628 = vunpack.c.l.b16 %v2026
      %v2629 = vunpack.c.l.b16 %v2027
      %v2630 = vunpack.c.l.b16 %v2028
      %v2631 = vunpack.c.l.b16 %v2029
      %v2632 = vunpack.c.l.b16 %v2030
      %v2633 = vunpack.c.l.b16 %v2031
      %v2634 = vunpack.c.l.b16 %v2032
      %v2635 = vunpack.c.l.b16 %v2033
      %v2636 = vunpack.c.l.b16 %v2034
      %v2637 = vunpack.c.l.b16 %v2035
      %v2638 = vunpack.c.l.b16 %v2036
      %v2639 = vunpack.c.l.b16 %v2037
      %v2640 = vunpack.c.l.b16 %v2038
      %v2641 = vunpack.c.l.b16 %v2039
      %v2642 = vunpack.c.l.b16 %v2040
      %v2643 = vunpack.c.l.b16 %v2041
      %v2644 = vunpack.c.l.b16 %v2042
      %v2645 = vunpack.c.l.b16 %v2043
      %v2646 = vunpack.c.l.b16 %v2044
      %v2647 = vunpack.c.l.b16 %v2045
      %v2648 = vunpack.c.l.b16 %v2046
      %v2649 = vunpack.c.l.b16 %v2047
      %v2650 = vunpack.c.l.b16 %v2048
      %v2651 = vunpack.c.l.b16 %v2049
      %v2652 = vunpack.c.l.b16 %v2050
      %v2653 = vunpack.c.l.b16 %v2051
      %v2654 = vunpack.c.l.b16 %v2052
      %v2655 = vunpack.c.l.b16 %v2053
      %v2656 = vunpack.c.l.b16 %v2054
      %v2657 = vunpack.c.l.b16 %v2055
      %v2658 = vunpack.c.l.b16 %v2056
      %v2659 = vunpack.c.l.b16 %v2057
      %v2660 = vunpack.c.l.b16 %v2058
      %v2661 = vunpack.c.l.b16 %v2059
      %v2662 = vunpack.c.l.b16 %v2060
      %v2663 = vunpack.c.l.b16 %v2061
      %v2664 = vunpack.c.l.b16 %v2062
      %v2665 = vpack.c.b16 %v2618, %v2617
      %v2666 = vpack.c.b16 %v2620, %v2619
      %v2667 = vpack.c.b16 %v2622, %v2621
      %v2668 = vpack.c.b16 %v2624, %v2623
      %v2669 = vpack.c.b16 %v2626, %v2625
      %v2670 = vpack.c.b16 %v2628, %v2627
      %v2671 = vpack.c.b16 %v2630, %v2629
      %v2672 = vpack.c.b16 %v2632, %v2631
      %v2673 = vpack.c.b16 %v2634, %v2633
      %v2674 = vpack.c.b16 %v2636, %v2635
      %v2675 = vpack.c.b16 %v2638, %v2637
      %v2676 = vpack.c.b16 %v2640, %v2639
      %v2677 = vpack.c.b16 %v2642, %v2641
      %v2678 = vpack.c.b16 %v2644, %v2643
      %v2679 = vpack.c.b16 %v2646, %v2645
      %v2680 = vpack.c.b16 %v2648, %v2647
      %v2681 = vpack.c.b16 %v2650, %v2649
      %v2682 = vpack.c.b16 %v2652, %v2651
      %v2683 = vpack.c.b16 %v2654, %v2653
      %v2684 = vpack.c.b16 %v2656, %v2655
      %v2685 = vpack.c.b16 %v2658, %v2657
      %v2686 = vpack.c.b16 %v2660, %v2659
      %v2687 = vpack.c.b16 %v2662, %v2661
      %v2688 = vpack.c.b16 %v2664, %v2663
      %2713 = vmatpush.bf16.msra.mxu0 %v2672
      %2714 = vmatpush.bf16.msra.mxu0 %v2671
      %2715 = vmatpush.bf16.msra.mxu0 %v2670
      %2716 = vmatpush.bf16.msra.mxu0 %v2669
      %2717 = vmatpush.bf16.msra.mxu0 %v2668
      %2718 = vmatpush.bf16.msra.mxu0 %v2667
      %2719 = vmatpush.bf16.msra.mxu0 %v2666
      %2720 = vmatpush.bf16.msra.mxu0 %v2665
      %2721 = vmatmul.bf16.gmra.mxu0 %v1295
      %v2722 = vpop.f32.mrf.mxu0
      %v2723 = vadd.f32 %v2490, %v2722
      %v2724 = vpop.f32.mrf.mxu0
      %v2725 = vadd.f32 %v2492, %v2724
      %2726 = vmatmul.bf16.gmra.mxu0 %v1338
      %v2727 = vpop.f32.mrf.mxu0
      %v2728 = vadd.f32 %v2495, %v2727
      %v2729 = vpop.f32.mrf.mxu0
      %v2730 = vadd.f32 %v2497, %v2729
      %2731 = vmatmul.bf16.gmra.mxu0 %v1381
      %v2732 = vpop.f32.mrf.mxu0
      %v2733 = vadd.f32 %v2500, %v2732
      %v2734 = vpop.f32.mrf.mxu0
      %v2735 = vadd.f32 %v2502, %v2734
      %2736 = vmatmul.bf16.gmra.mxu0 %v1424
      %v2737 = vpop.f32.mrf.mxu0
      %v2738 = vadd.f32 %v2505, %v2737
      %v2739 = vpop.f32.mrf.mxu0
      %v2740 = vadd.f32 %v2507, %v2739
      %2741 = vmatmul.bf16.gmra.mxu0 %v1467
      %v2742 = vpop.f32.mrf.mxu0
      %v2743 = vadd.f32 %v2510, %v2742
      %v2744 = vpop.f32.mrf.mxu0
      %v2745 = vadd.f32 %v2512, %v2744
      %2746 = vmatmul.bf16.gmra.mxu0 %v1510
      %v2747 = vpop.f32.mrf.mxu0
      %v2748 = vadd.f32 %v2515, %v2747
      %v2749 = vpop.f32.mrf.mxu0
      %v2750 = vadd.f32 %v2517, %v2749
      %2751 = vmatmul.bf16.gmra.mxu0 %v1553
      %v2752 = vpop.f32.mrf.mxu0
      %v2753 = vadd.f32 %v2520, %v2752
      %v2754 = vpop.f32.mrf.mxu0
      %v2755 = vadd.f32 %v2522, %v2754
      %2756 = vmatmul.bf16.gmra.mxu0 %v1596
      %v2757 = vpop.f32.mrf.mxu0
      %v2758 = vadd.f32 %v2525, %v2757
      %v2759 = vpop.f32.mrf.mxu0
      %v2760 = vadd.f32 %v2527, %v2759
      %2761 = vmatmul.bf16.gmra.mxu0 %v1639
      %v2762 = vpop.f32.mrf.mxu0
      %v2763 = vadd.f32 %v2530, %v2762
      %v2764 = vpop.f32.mrf.mxu0
      %v2765 = vadd.f32 %v2532, %v2764
      %2766 = vmatmul.bf16.gmra.mxu0 %v1682
      %v2767 = vpop.f32.mrf.mxu0
      %v2768 = vadd.f32 %v2535, %v2767
      %v2769 = vpop.f32.mrf.mxu0
      %v2770 = vadd.f32 %v2537, %v2769
      %2771 = vmatmul.bf16.gmra.mxu0 %v1725
      %v2772 = vpop.f32.mrf.mxu0
      %v2773 = vadd.f32 %v2540, %v2772
      %v2774 = vpop.f32.mrf.mxu0
      %v2775 = vadd.f32 %v2542, %v2774
      %2776 = vmatmul.bf16.gmra.mxu0 %v1768
      %v2777 = vpop.f32.mrf.mxu0
      %v2778 = vadd.f32 %v2545, %v2777
      %v2779 = vpop.f32.mrf.mxu0
      %v2780 = vadd.f32 %v2547, %v2779
      %2781 = vmatmul.bf16.gmra.mxu0 %v1811
      %v2782 = vpop.f32.mrf.mxu0
      %v2783 = vadd.f32 %v2550, %v2782
      %v2784 = vpop.f32.mrf.mxu0
      %v2785 = vadd.f32 %v2552, %v2784
      %2786 = vmatmul.bf16.gmra.mxu0 %v1854
      %v2787 = vpop.f32.mrf.mxu0
      %v2788 = vadd.f32 %v2555, %v2787
      %v2789 = vpop.f32.mrf.mxu0
      %v2790 = vadd.f32 %v2557, %v2789
      %2791 = vmatmul.bf16.gmra.mxu0 %v1897
      %v2792 = vpop.f32.mrf.mxu0
      %v2793 = vadd.f32 %v2560, %v2792
      %v2794 = vpop.f32.mrf.mxu0
      %v2795 = vadd.f32 %v2562, %v2794
      %2796 = vmatmul.bf16.gmra.mxu0 %v1940
      %v2797 = vpop.f32.mrf.mxu0
      %v2798 = vadd.f32 %v2565, %v2797
      %v2799 = vpop.f32.mrf.mxu0
      %v2800 = vadd.f32 %v2567, %v2799
      %2801 = vdwg.mxu0
      %2802 = vmatpush.bf16.msra.mxu0 %v2680
      %2803 = vmatpush.bf16.msra.mxu0 %v2679
      %2804 = vmatpush.bf16.msra.mxu0 %v2678
      %2805 = vmatpush.bf16.msra.mxu0 %v2677
      %2806 = vmatpush.bf16.msra.mxu0 %v2676
      %2807 = vmatpush.bf16.msra.mxu0 %v2675
      %2808 = vmatpush.bf16.msra.mxu0 %v2674
      %2809 = vmatpush.bf16.msra.mxu0 %v2673
      %2810 = vmatmul.bf16.gmra.mxu0 %v1304
      %v2811 = vpop.f32.mrf.mxu0
      %v2812 = vadd.f32 %v2723, %v2811
      %v2813 = vpop.f32.mrf.mxu0
      %v2814 = vadd.f32 %v2725, %v2813
      %2815 = vmatmul.bf16.gmra.mxu0 %v1347
      %v2816 = vpop.f32.mrf.mxu0
      %v2817 = vadd.f32 %v2728, %v2816
      %v2818 = vpop.f32.mrf.mxu0
      %v2819 = vadd.f32 %v2730, %v2818
      %2820 = vmatmul.bf16.gmra.mxu0 %v1390
      %v2821 = vpop.f32.mrf.mxu0
      %v2822 = vadd.f32 %v2733, %v2821
      %v2823 = vpop.f32.mrf.mxu0
      %v2824 = vadd.f32 %v2735, %v2823
      %2825 = vmatmul.bf16.gmra.mxu0 %v1433
      %v2826 = vpop.f32.mrf.mxu0
      %v2827 = vadd.f32 %v2738, %v2826
      %v2828 = vpop.f32.mrf.mxu0
      %v2829 = vadd.f32 %v2740, %v2828
      %2830 = vmatmul.bf16.gmra.mxu0 %v1476
      %v2831 = vpop.f32.mrf.mxu0
      %v2832 = vadd.f32 %v2743, %v2831
      %v2833 = vpop.f32.mrf.mxu0
      %v2834 = vadd.f32 %v2745, %v2833
      %2835 = vmatmul.bf16.gmra.mxu0 %v1519
      %v2836 = vpop.f32.mrf.mxu0
      %v2837 = vadd.f32 %v2748, %v2836
      %v2838 = vpop.f32.mrf.mxu0
      %v2839 = vadd.f32 %v2750, %v2838
      %2840 = vmatmul.bf16.gmra.mxu0 %v1562
      %v2841 = vpop.f32.mrf.mxu0
      %v2842 = vadd.f32 %v2753, %v2841
      %v2843 = vpop.f32.mrf.mxu0
      %v2844 = vadd.f32 %v2755, %v2843
      %2845 = vmatmul.bf16.gmra.mxu0 %v1605
      %v2846 = vpop.f32.mrf.mxu0
      %v2847 = vadd.f32 %v2758, %v2846
      %v2848 = vpop.f32.mrf.mxu0
      %v2849 = vadd.f32 %v2760, %v2848
      %2850 = vmatmul.bf16.gmra.mxu0 %v1648
      %v2851 = vpop.f32.mrf.mxu0
      %v2852 = vadd.f32 %v2763, %v2851
      %v2853 = vpop.f32.mrf.mxu0
      %v2854 = vadd.f32 %v2765, %v2853
      %2855 = vmatmul.bf16.gmra.mxu0 %v1691
      %v2856 = vpop.f32.mrf.mxu0
      %v2857 = vadd.f32 %v2768, %v2856
      %v2858 = vpop.f32.mrf.mxu0
      %v2859 = vadd.f32 %v2770, %v2858
      %2860 = vmatmul.bf16.gmra.mxu0 %v1734
      %v2861 = vpop.f32.mrf.mxu0
      %v2862 = vadd.f32 %v2773, %v2861
      %v2863 = vpop.f32.mrf.mxu0
      %v2864 = vadd.f32 %v2775, %v2863
      %2865 = vmatmul.bf16.gmra.mxu0 %v1777
      %v2866 = vpop.f32.mrf.mxu0
      %v2867 = vadd.f32 %v2778, %v2866
      %v2868 = vpop.f32.mrf.mxu0
      %v2869 = vadd.f32 %v2780, %v2868
      %2870 = vmatmul.bf16.gmra.mxu0 %v1820
      %v2871 = vpop.f32.mrf.mxu0
      %v2872 = vadd.f32 %v2783, %v2871
      %v2873 = vpop.f32.mrf.mxu0
      %v2874 = vadd.f32 %v2785, %v2873
      %2875 = vmatmul.bf16.gmra.mxu0 %v1863
      %v2876 = vpop.f32.mrf.mxu0
      %v2877 = vadd.f32 %v2788, %v2876
      %v2878 = vpop.f32.mrf.mxu0
      %v2879 = vadd.f32 %v2790, %v2878
      %2880 = vmatmul.bf16.gmra.mxu0 %v1906
      %v2881 = vpop.f32.mrf.mxu0
      %v2882 = vadd.f32 %v2793, %v2881
      %v2883 = vpop.f32.mrf.mxu0
      %v2884 = vadd.f32 %v2795, %v2883
      %2885 = vmatmul.bf16.gmra.mxu0 %v1949
      %v2886 = vpop.f32.mrf.mxu0
      %v2887 = vadd.f32 %v2798, %v2886
      %v2888 = vpop.f32.mrf.mxu0
      %v2889 = vadd.f32 %v2800, %v2888
      %2890 = vdwg.mxu0
      %2891 = vmatpush.bf16.msra.mxu0 %v2688
      %2892 = vmatpush.bf16.msra.mxu0 %v2687
      %2893 = vmatpush.bf16.msra.mxu0 %v2686
      %2894 = vmatpush.bf16.msra.mxu0 %v2685
      %2895 = vmatpush.bf16.msra.mxu0 %v2684
      %2896 = vmatpush.bf16.msra.mxu0 %v2683
      %2897 = vmatpush.bf16.msra.mxu0 %v2682
      %2898 = vmatpush.bf16.msra.mxu0 %v2681
      %2899 = vmatmul.bf16.gmra.mxu0 %v1321
      %v2900 = vpop.f32.mrf.mxu0
      %v2901 = vadd.f32 %v2812, %v2900
      %v2902 = vpop.f32.mrf.mxu0
      %v2903 = vadd.f32 %v2814, %v2902
      %2904 = vmatmul.bf16.gmra.mxu0 %v1364
      %v2905 = vpop.f32.mrf.mxu0
      %v2906 = vadd.f32 %v2817, %v2905
      %v2907 = vpop.f32.mrf.mxu0
      %v2908 = vadd.f32 %v2819, %v2907
      %2909 = vmatmul.bf16.gmra.mxu0 %v1407
      %v2910 = vpop.f32.mrf.mxu0
      %v2911 = vadd.f32 %v2822, %v2910
      %v2912 = vpop.f32.mrf.mxu0
      %v2913 = vadd.f32 %v2824, %v2912
      %2914 = vmatmul.bf16.gmra.mxu0 %v1450
      %v2915 = vpop.f32.mrf.mxu0
      %v2916 = vadd.f32 %v2827, %v2915
      %v2917 = vpop.f32.mrf.mxu0
      %v2918 = vadd.f32 %v2829, %v2917
      %2919 = vmatmul.bf16.gmra.mxu0 %v1493
      %v2920 = vpop.f32.mrf.mxu0
      %v2921 = vadd.f32 %v2832, %v2920
      %v2922 = vpop.f32.mrf.mxu0
      %v2923 = vadd.f32 %v2834, %v2922
      %2924 = vmatmul.bf16.gmra.mxu0 %v1536
      %v2925 = vpop.f32.mrf.mxu0
      %v2926 = vadd.f32 %v2837, %v2925
      %v2927 = vpop.f32.mrf.mxu0
      %v2928 = vadd.f32 %v2839, %v2927
      %2929 = vmatmul.bf16.gmra.mxu0 %v1579
      %v2930 = vpop.f32.mrf.mxu0
      %v2931 = vadd.f32 %v2842, %v2930
      %v2932 = vpop.f32.mrf.mxu0
      %v2933 = vadd.f32 %v2844, %v2932
      %2934 = vmatmul.bf16.gmra.mxu0 %v1622
      %v2935 = vpop.f32.mrf.mxu0
      %v2936 = vadd.f32 %v2847, %v2935
      %v2937 = vpop.f32.mrf.mxu0
      %v2938 = vadd.f32 %v2849, %v2937
      %2939 = vmatmul.bf16.gmra.mxu0 %v1665
      %v2940 = vpop.f32.mrf.mxu0
      %v2941 = vadd.f32 %v2852, %v2940
      %v2942 = vpop.f32.mrf.mxu0
      %v2943 = vadd.f32 %v2854, %v2942
      %2944 = vmatmul.bf16.gmra.mxu0 %v1708
      %v2945 = vpop.f32.mrf.mxu0
      %v2946 = vadd.f32 %v2857, %v2945
      %v2947 = vpop.f32.mrf.mxu0
      %v2948 = vadd.f32 %v2859, %v2947
      %2949 = vmatmul.bf16.gmra.mxu0 %v1751
      %v2950 = vpop.f32.mrf.mxu0
      %v2951 = vadd.f32 %v2862, %v2950
      %v2952 = vpop.f32.mrf.mxu0
      %v2953 = vadd.f32 %v2864, %v2952
      %2954 = vmatmul.bf16.gmra.mxu0 %v1794
      %v2955 = vpop.f32.mrf.mxu0
      %v2956 = vadd.f32 %v2867, %v2955
      %v2957 = vpop.f32.mrf.mxu0
      %v2958 = vadd.f32 %v2869, %v2957
      %2959 = vmatmul.bf16.gmra.mxu0 %v1837
      %v2960 = vpop.f32.mrf.mxu0
      %v2961 = vadd.f32 %v2872, %v2960
      %v2962 = vpop.f32.mrf.mxu0
      %v2963 = vadd.f32 %v2874, %v2962
      %2964 = vmatmul.bf16.gmra.mxu0 %v1880
      %v2965 = vpop.f32.mrf.mxu0
      %v2966 = vadd.f32 %v2877, %v2965
      %v2967 = vpop.f32.mrf.mxu0
      %v2968 = vadd.f32 %v2879, %v2967
      %2969 = vmatmul.bf16.gmra.mxu0 %v1923
      %v2970 = vpop.f32.mrf.mxu0
      %v2971 = vadd.f32 %v2882, %v2970
      %v2972 = vpop.f32.mrf.mxu0
      %v2973 = vadd.f32 %v2884, %v2972
      %2974 = vmatmul.bf16.gmra.mxu0 %v1966
      %v2975 = vpop.f32.mrf.mxu0
      %v2976 = vadd.f32 %v2887, %v2975
      %v2977 = vpop.f32.mrf.mxu0
      %v2978 = vadd.f32 %v2889, %v2977
      %2979 = vdwg.mxu0
      %v2981 = vshrl.u32 %v915, 16
      %v2983 = vrot.slane %v2981, 3
      %v2984 = vshll.u32 %v915, 16
      %v2986 = vrot.slane %v2984, 4
      %v2987 = vor.u32 %v2983, %v2986
      %v2989 = vshrl.u32 %v916, 16
      %v2991 = vrot.slane %v2989, 3
      %v2992 = vshll.u32 %v916, 16
      %v2994 = vrot.slane %v2992, 4
      %v2995 = vor.u32 %v2991, %v2994
      %v2996 = vsel %vm1278, %v2987, %v2995
      %v2998 = vshrl.u32 %v1078, 16
      %v3000 = vrot.slane %v2998, 3
      %v3001 = vshll.u32 %v1078, 16
      %v3003 = vrot.slane %v3001, 4
      %v3004 = vor.u32 %v3000, %v3003
      %v3005 = vsel %vm1278, %v3004, %v3004
      %v3007 = vshrl.u32 %v1275, 16
      %v3009 = vrot.slane %v3007, 3
      %v3010 = vshll.u32 %v1275, 16
      %v3012 = vrot.slane %v3010, 4
      %v3013 = vor.u32 %v3009, %v3012
      %v3015 = vshrl.u32 %v1277, 16
      %v3017 = vrot.slane %v3015, 3
      %v3018 = vshll.u32 %v1277, 16
      %v3020 = vrot.slane %v3018, 4
      %v3021 = vor.u32 %v3017, %v3020
      %v3022 = vsel %vm1278, %v3013, %v3021
      %s3026 = scalar_lea.vmem %s3, 384
      %v3027 = vld [vmem:[%s3026] sm:$0xf]
      %v3028 = vld [vmem:[%s3026 + $0x4] sm:$0xf]
      %v3029 = vld [vmem:[%s3026 + $0x8] sm:$0xf]
      %v3030 = vld [vmem:[%s3026 + $0xc] sm:$0xf]
      %v3031 = vld [vmem:[%s3026 + $0x10] sm:$0xf]
      %v3032 = vld [vmem:[%s3026 + $0x14] sm:$0xf]
      %v3033 = vld [vmem:[%s3026 + $0x18] sm:$0xf]
      %v3034 = vld [vmem:[%s3026 + $0x1c] sm:$0xf]
      %v3035 = vld [vmem:[%s3026 + $0x20] sm:$0xf]
      %v3036 = vld [vmem:[%s3026 + $0x24] sm:$0xf]
      %v3037 = vld [vmem:[%s3026 + $0x28] sm:$0xf]
      %v3038 = vld [vmem:[%s3026 + $0x2c] sm:$0xf]
      %v3039 = vld [vmem:[%s3026 + $0x30] sm:$0xf]
      %v3040 = vld [vmem:[%s3026 + $0x34] sm:$0xf]
      %v3041 = vld [vmem:[%s3026 + $0x38] sm:$0xf]
      %v3042 = vld [vmem:[%s3026 + $0x3c] sm:$0xf]
      %v3043 = vld [vmem:[%s3026 + $0x40] sm:$0xf]
      %v3044 = vld [vmem:[%s3026 + $0x44] sm:$0xf]
      %v3045 = vld [vmem:[%s3026 + $0x48] sm:$0xf]
      %v3046 = vld [vmem:[%s3026 + $0x4c] sm:$0xf]
      %v3047 = vld [vmem:[%s3026 + $0x50] sm:$0xf]
      %v3048 = vld [vmem:[%s3026 + $0x54] sm:$0xf]
      %v3049 = vld [vmem:[%s3026 + $0x58] sm:$0xf]
      %v3050 = vld [vmem:[%s3026 + $0x5c] sm:$0xf]
      %v3051 = vld [vmem:[%s3026 + $0x60] sm:$0xf]
      %v3052 = vld [vmem:[%s3026 + $0x64] sm:$0xf]
      %v3053 = vld [vmem:[%s3026 + $0x68] sm:$0xf]
      %v3054 = vld [vmem:[%s3026 + $0x6c] sm:$0xf]
      %v3055 = vld [vmem:[%s3026 + $0x70] sm:$0xf]
      %v3056 = vld [vmem:[%s3026 + $0x74] sm:$0xf]
      %v3057 = vld [vmem:[%s3026 + $0x78] sm:$0xf]
      %v3058 = vld [vmem:[%s3026 + $0x7c] sm:$0xf]
      %v3059 = vld [vmem:[%s3026 + $0x80] sm:$0xf]
      %v3060 = vld [vmem:[%s3026 + $0x84] sm:$0xf]
      %v3061 = vld [vmem:[%s3026 + $0x88] sm:$0xf]
      %v3062 = vld [vmem:[%s3026 + $0x8c] sm:$0xf]
      %v3063 = vld [vmem:[%s3026 + $0x90] sm:$0xf]
      %v3064 = vld [vmem:[%s3026 + $0x94] sm:$0xf]
      %v3065 = vld [vmem:[%s3026 + $0x98] sm:$0xf]
      %v3066 = vld [vmem:[%s3026 + $0x9c] sm:$0xf]
      %v3067 = vld [vmem:[%s3026 + $0xa0] sm:$0xf]
      %v3068 = vld [vmem:[%s3026 + $0xa4] sm:$0xf]
      %v3069 = vld [vmem:[%s3026 + $0xa8] sm:$0xf]
      %v3070 = vld [vmem:[%s3026 + $0xac] sm:$0xf]
      %v3071 = vld [vmem:[%s3026 + $0xb0] sm:$0xf]
      %v3072 = vld [vmem:[%s3026 + $0xb4] sm:$0xf]
      %v3073 = vld [vmem:[%s3026 + $0xb8] sm:$0xf]
      %v3074 = vld [vmem:[%s3026 + $0xbc] sm:$0xf]
      %v3123 = vunpack.c.l.b16 %v3027
      %v3124 = vunpack.c.l.b16 %v3028
      %v3125 = vunpack.c.l.b16 %v3029
      %v3126 = vunpack.c.l.b16 %v3030
      %v3127 = vunpack.c.l.b16 %v3031
      %v3128 = vunpack.c.l.b16 %v3032
      %v3129 = vunpack.c.l.b16 %v3033
      %v3130 = vunpack.c.l.b16 %v3034
      %v3131 = vunpack.c.l.b16 %v3035
      %v3132 = vunpack.c.l.b16 %v3036
      %v3133 = vunpack.c.l.b16 %v3037
      %v3134 = vunpack.c.l.b16 %v3038
      %v3135 = vunpack.c.l.b16 %v3039
      %v3136 = vunpack.c.l.b16 %v3040
      %v3137 = vunpack.c.l.b16 %v3041
      %v3138 = vunpack.c.l.b16 %v3042
      %v3139 = vunpack.c.l.b16 %v3043
      %v3140 = vunpack.c.l.b16 %v3044
      %v3141 = vunpack.c.l.b16 %v3045
      %v3142 = vunpack.c.l.b16 %v3046
      %v3143 = vunpack.c.l.b16 %v3047
      %v3144 = vunpack.c.l.b16 %v3048
      %v3145 = vunpack.c.l.b16 %v3049
      %v3146 = vunpack.c.l.b16 %v3050
      %v3147 = vunpack.c.l.b16 %v3051
      %v3148 = vunpack.c.l.b16 %v3052
      %v3149 = vunpack.c.l.b16 %v3053
      %v3150 = vunpack.c.l.b16 %v3054
      %v3151 = vunpack.c.l.b16 %v3055
      %v3152 = vunpack.c.l.b16 %v3056
      %v3153 = vunpack.c.l.b16 %v3057
      %v3154 = vunpack.c.l.b16 %v3058
      %v3155 = vunpack.c.l.b16 %v3059
      %v3156 = vunpack.c.l.b16 %v3060
      %v3157 = vunpack.c.l.b16 %v3061
      %v3158 = vunpack.c.l.b16 %v3062
      %v3159 = vunpack.c.l.b16 %v3063
      %v3160 = vunpack.c.l.b16 %v3064
      %v3161 = vunpack.c.l.b16 %v3065
      %v3162 = vunpack.c.l.b16 %v3066
      %v3163 = vunpack.c.l.b16 %v3067
      %v3164 = vunpack.c.l.b16 %v3068
      %v3165 = vunpack.c.l.b16 %v3069
      %v3166 = vunpack.c.l.b16 %v3070
      %v3167 = vunpack.c.l.b16 %v3071
      %v3168 = vunpack.c.l.b16 %v3072
      %v3169 = vunpack.c.l.b16 %v3073
      %v3170 = vunpack.c.l.b16 %v3074
      %v3171 = vpack.c.b16 %v3124, %v3123
      %v3172 = vpack.c.b16 %v3126, %v3125
      %v3173 = vpack.c.b16 %v3128, %v3127
      %v3174 = vpack.c.b16 %v3130, %v3129
      %v3175 = vpack.c.b16 %v3132, %v3131
      %v3176 = vpack.c.b16 %v3134, %v3133
      %v3177 = vpack.c.b16 %v3136, %v3135
      %v3178 = vpack.c.b16 %v3138, %v3137
      %v3179 = vpack.c.b16 %v3140, %v3139
      %v3180 = vpack.c.b16 %v3142, %v3141
      %v3181 = vpack.c.b16 %v3144, %v3143
      %v3182 = vpack.c.b16 %v3146, %v3145
      %v3183 = vpack.c.b16 %v3148, %v3147
      %v3184 = vpack.c.b16 %v3150, %v3149
      %v3185 = vpack.c.b16 %v3152, %v3151
      %v3186 = vpack.c.b16 %v3154, %v3153
      %v3187 = vpack.c.b16 %v3156, %v3155
      %v3188 = vpack.c.b16 %v3158, %v3157
      %v3189 = vpack.c.b16 %v3160, %v3159
      %v3190 = vpack.c.b16 %v3162, %v3161
      %v3191 = vpack.c.b16 %v3164, %v3163
      %v3192 = vpack.c.b16 %v3166, %v3165
      %v3193 = vpack.c.b16 %v3168, %v3167
      %v3194 = vpack.c.b16 %v3170, %v3169
      %3219 = vmatpush.bf16.msra.mxu0 %v3178
      %3220 = vmatpush.bf16.msra.mxu0 %v3177
      %3221 = vmatpush.bf16.msra.mxu0 %v3176
      %3222 = vmatpush.bf16.msra.mxu0 %v3175
      %3223 = vmatpush.bf16.msra.mxu0 %v3174
      %3224 = vmatpush.bf16.msra.mxu0 %v3173
      %3225 = vmatpush.bf16.msra.mxu0 %v3172
      %3226 = vmatpush.bf16.msra.mxu0 %v3171
      %3227 = vmatmul.bf16.gmra.mxu0 %v1381
      %v3228 = vpop.f32.mrf.mxu0
      %v3229 = vadd.f32 0.0, %v3228
      %v3230 = vpop.f32.mrf.mxu0
      %v3231 = vadd.f32 0.0, %v3230
      %3232 = vmatmul.bf16.gmra.mxu0 %v1424
      %v3233 = vpop.f32.mrf.mxu0
      %v3234 = vadd.f32 0.0, %v3233
      %v3235 = vpop.f32.mrf.mxu0
      %v3236 = vadd.f32 0.0, %v3235
      %3237 = vmatmul.bf16.gmra.mxu0 %v1467
      %v3238 = vpop.f32.mrf.mxu0
      %v3239 = vadd.f32 0.0, %v3238
      %v3240 = vpop.f32.mrf.mxu0
      %v3241 = vadd.f32 0.0, %v3240
      %3242 = vmatmul.bf16.gmra.mxu0 %v1510
      %v3243 = vpop.f32.mrf.mxu0
      %v3244 = vadd.f32 0.0, %v3243
      %v3245 = vpop.f32.mrf.mxu0
      %v3246 = vadd.f32 0.0, %v3245
      %3247 = vmatmul.bf16.gmra.mxu0 %v1553
      %v3248 = vpop.f32.mrf.mxu0
      %v3249 = vadd.f32 0.0, %v3248
      %v3250 = vpop.f32.mrf.mxu0
      %v3251 = vadd.f32 0.0, %v3250
      %3252 = vmatmul.bf16.gmra.mxu0 %v1596
      %v3253 = vpop.f32.mrf.mxu0
      %v3254 = vadd.f32 0.0, %v3253
      %v3255 = vpop.f32.mrf.mxu0
      %v3256 = vadd.f32 0.0, %v3255
      %3257 = vmatmul.bf16.gmra.mxu0 %v1639
      %v3258 = vpop.f32.mrf.mxu0
      %v3259 = vadd.f32 0.0, %v3258
      %v3260 = vpop.f32.mrf.mxu0
      %v3261 = vadd.f32 0.0, %v3260
      %3262 = vmatmul.bf16.gmra.mxu0 %v1682
      %v3263 = vpop.f32.mrf.mxu0
      %v3264 = vadd.f32 0.0, %v3263
      %v3265 = vpop.f32.mrf.mxu0
      %v3266 = vadd.f32 0.0, %v3265
      %3267 = vmatmul.bf16.gmra.mxu0 %v1725
      %v3268 = vpop.f32.mrf.mxu0
      %v3269 = vadd.f32 0.0, %v3268
      %v3270 = vpop.f32.mrf.mxu0
      %v3271 = vadd.f32 0.0, %v3270
      %3272 = vmatmul.bf16.gmra.mxu0 %v1768
      %v3273 = vpop.f32.mrf.mxu0
      %v3274 = vadd.f32 0.0, %v3273
      %v3275 = vpop.f32.mrf.mxu0
      %v3276 = vadd.f32 0.0, %v3275
      %3277 = vmatmul.bf16.gmra.mxu0 %v1811
      %v3278 = vpop.f32.mrf.mxu0
      %v3279 = vadd.f32 0.0, %v3278
      %v3280 = vpop.f32.mrf.mxu0
      %v3281 = vadd.f32 0.0, %v3280
      %3282 = vmatmul.bf16.gmra.mxu0 %v1854
      %v3283 = vpop.f32.mrf.mxu0
      %v3284 = vadd.f32 0.0, %v3283
      %v3285 = vpop.f32.mrf.mxu0
      %v3286 = vadd.f32 0.0, %v3285
      %3287 = vmatmul.bf16.gmra.mxu0 %v1897
      %v3288 = vpop.f32.mrf.mxu0
      %v3289 = vadd.f32 0.0, %v3288
      %v3290 = vpop.f32.mrf.mxu0
      %v3291 = vadd.f32 0.0, %v3290
      %3292 = vmatmul.bf16.gmra.mxu0 %v1940
      %v3293 = vpop.f32.mrf.mxu0
      %v3294 = vadd.f32 0.0, %v3293
      %v3295 = vpop.f32.mrf.mxu0
      %v3296 = vadd.f32 0.0, %v3295
      %3297 = vmatmul.bf16.gmra.mxu0 %v2079
      %v3298 = vpop.f32.mrf.mxu0
      %v3299 = vadd.f32 0.0, %v3298
      %v3300 = vpop.f32.mrf.mxu0
      %v3301 = vadd.f32 0.0, %v3300
      %3302 = vmatmul.bf16.gmra.mxu0 %v2996
      %v3303 = vpop.f32.mrf.mxu0
      %v3304 = vadd.f32 0.0, %v3303
      %v3305 = vpop.f32.mrf.mxu0
      %v3306 = vadd.f32 0.0, %v3305
      %3307 = vdwg.mxu0
      %3308 = vmatpush.bf16.msra.mxu0 %v3186
      %3309 = vmatpush.bf16.msra.mxu0 %v3185
      %3310 = vmatpush.bf16.msra.mxu0 %v3184
      %3311 = vmatpush.bf16.msra.mxu0 %v3183
      %3312 = vmatpush.bf16.msra.mxu0 %v3182
      %3313 = vmatpush.bf16.msra.mxu0 %v3181
      %3314 = vmatpush.bf16.msra.mxu0 %v3180
      %3315 = vmatpush.bf16.msra.mxu0 %v3179
      %3316 = vmatmul.bf16.gmra.mxu0 %v1390
      %v3317 = vpop.f32.mrf.mxu0
      %v3318 = vadd.f32 %v3229, %v3317
      %v3319 = vpop.f32.mrf.mxu0
      %v3320 = vadd.f32 %v3231, %v3319
      %3321 = vmatmul.bf16.gmra.mxu0 %v1433
      %v3322 = vpop.f32.mrf.mxu0
      %v3323 = vadd.f32 %v3234, %v3322
      %v3324 = vpop.f32.mrf.mxu0
      %v3325 = vadd.f32 %v3236, %v3324
      %3326 = vmatmul.bf16.gmra.mxu0 %v1476
      %v3327 = vpop.f32.mrf.mxu0
      %v3328 = vadd.f32 %v3239, %v3327
      %v3329 = vpop.f32.mrf.mxu0
      %v3330 = vadd.f32 %v3241, %v3329
      %3331 = vmatmul.bf16.gmra.mxu0 %v1519
      %v3332 = vpop.f32.mrf.mxu0
      %v3333 = vadd.f32 %v3244, %v3332
      %v3334 = vpop.f32.mrf.mxu0
      %v3335 = vadd.f32 %v3246, %v3334
      %3336 = vmatmul.bf16.gmra.mxu0 %v1562
      %v3337 = vpop.f32.mrf.mxu0
      %v3338 = vadd.f32 %v3249, %v3337
      %v3339 = vpop.f32.mrf.mxu0
      %v3340 = vadd.f32 %v3251, %v3339
      %3341 = vmatmul.bf16.gmra.mxu0 %v1605
      %v3342 = vpop.f32.mrf.mxu0
      %v3343 = vadd.f32 %v3254, %v3342
      %v3344 = vpop.f32.mrf.mxu0
      %v3345 = vadd.f32 %v3256, %v3344
      %3346 = vmatmul.bf16.gmra.mxu0 %v1648
      %v3347 = vpop.f32.mrf.mxu0
      %v3348 = vadd.f32 %v3259, %v3347
      %v3349 = vpop.f32.mrf.mxu0
      %v3350 = vadd.f32 %v3261, %v3349
      %3351 = vmatmul.bf16.gmra.mxu0 %v1691
      %v3352 = vpop.f32.mrf.mxu0
      %v3353 = vadd.f32 %v3264, %v3352
      %v3354 = vpop.f32.mrf.mxu0
      %v3355 = vadd.f32 %v3266, %v3354
      %3356 = vmatmul.bf16.gmra.mxu0 %v1734
      %v3357 = vpop.f32.mrf.mxu0
      %v3358 = vadd.f32 %v3269, %v3357
      %v3359 = vpop.f32.mrf.mxu0
      %v3360 = vadd.f32 %v3271, %v3359
      %3361 = vmatmul.bf16.gmra.mxu0 %v1777
      %v3362 = vpop.f32.mrf.mxu0
      %v3363 = vadd.f32 %v3274, %v3362
      %v3364 = vpop.f32.mrf.mxu0
      %v3365 = vadd.f32 %v3276, %v3364
      %3366 = vmatmul.bf16.gmra.mxu0 %v1820
      %v3367 = vpop.f32.mrf.mxu0
      %v3368 = vadd.f32 %v3279, %v3367
      %v3369 = vpop.f32.mrf.mxu0
      %v3370 = vadd.f32 %v3281, %v3369
      %3371 = vmatmul.bf16.gmra.mxu0 %v1863
      %v3372 = vpop.f32.mrf.mxu0
      %v3373 = vadd.f32 %v3284, %v3372
      %v3374 = vpop.f32.mrf.mxu0
      %v3375 = vadd.f32 %v3286, %v3374
      %3376 = vmatmul.bf16.gmra.mxu0 %v1906
      %v3377 = vpop.f32.mrf.mxu0
      %v3378 = vadd.f32 %v3289, %v3377
      %v3379 = vpop.f32.mrf.mxu0
      %v3380 = vadd.f32 %v3291, %v3379
      %3381 = vmatmul.bf16.gmra.mxu0 %v1949
      %v3382 = vpop.f32.mrf.mxu0
      %v3383 = vadd.f32 %v3294, %v3382
      %v3384 = vpop.f32.mrf.mxu0
      %v3385 = vadd.f32 %v3296, %v3384
      %3386 = vmatmul.bf16.gmra.mxu0 %v2088
      %v3387 = vpop.f32.mrf.mxu0
      %v3388 = vadd.f32 %v3299, %v3387
      %v3389 = vpop.f32.mrf.mxu0
      %v3390 = vadd.f32 %v3301, %v3389
      %3391 = vmatmul.bf16.gmra.mxu0 %v3005
      %v3392 = vpop.f32.mrf.mxu0
      %v3393 = vadd.f32 %v3304, %v3392
      %v3394 = vpop.f32.mrf.mxu0
      %v3395 = vadd.f32 %v3306, %v3394
      %3396 = vdwg.mxu0
      %3397 = vmatpush.bf16.msra.mxu0 %v3194
      %3398 = vmatpush.bf16.msra.mxu0 %v3193
      %3399 = vmatpush.bf16.msra.mxu0 %v3192
      %3400 = vmatpush.bf16.msra.mxu0 %v3191
      %3401 = vmatpush.bf16.msra.mxu0 %v3190
      %3402 = vmatpush.bf16.msra.mxu0 %v3189
      %3403 = vmatpush.bf16.msra.mxu0 %v3188
      %3404 = vmatpush.bf16.msra.mxu0 %v3187
      %3405 = vmatmul.bf16.gmra.mxu0 %v1407
      %v3406 = vpop.f32.mrf.mxu0
      %v3407 = vadd.f32 %v3318, %v3406
      %v3408 = vpop.f32.mrf.mxu0
      %v3409 = vadd.f32 %v3320, %v3408
      %3410 = vmatmul.bf16.gmra.mxu0 %v1450
      %v3411 = vpop.f32.mrf.mxu0
      %v3412 = vadd.f32 %v3323, %v3411
      %v3413 = vpop.f32.mrf.mxu0
      %v3414 = vadd.f32 %v3325, %v3413
      %3415 = vmatmul.bf16.gmra.mxu0 %v1493
      %v3416 = vpop.f32.mrf.mxu0
      %v3417 = vadd.f32 %v3328, %v3416
      %v3418 = vpop.f32.mrf.mxu0
      %v3419 = vadd.f32 %v3330, %v3418
      %3420 = vmatmul.bf16.gmra.mxu0 %v1536
      %v3421 = vpop.f32.mrf.mxu0
      %v3422 = vadd.f32 %v3333, %v3421
      %v3423 = vpop.f32.mrf.mxu0
      %v3424 = vadd.f32 %v3335, %v3423
      %3425 = vmatmul.bf16.gmra.mxu0 %v1579
      %v3426 = vpop.f32.mrf.mxu0
      %v3427 = vadd.f32 %v3338, %v3426
      %v3428 = vpop.f32.mrf.mxu0
      %v3429 = vadd.f32 %v3340, %v3428
      %3430 = vmatmul.bf16.gmra.mxu0 %v1622
      %v3431 = vpop.f32.mrf.mxu0
      %v3432 = vadd.f32 %v3343, %v3431
      %v3433 = vpop.f32.mrf.mxu0
      %v3434 = vadd.f32 %v3345, %v3433
      %3435 = vmatmul.bf16.gmra.mxu0 %v1665
      %v3436 = vpop.f32.mrf.mxu0
      %v3437 = vadd.f32 %v3348, %v3436
      %v3438 = vpop.f32.mrf.mxu0
      %v3439 = vadd.f32 %v3350, %v3438
      %3440 = vmatmul.bf16.gmra.mxu0 %v1708
      %v3441 = vpop.f32.mrf.mxu0
      %v3442 = vadd.f32 %v3353, %v3441
      %v3443 = vpop.f32.mrf.mxu0
      %v3444 = vadd.f32 %v3355, %v3443
      %3445 = vmatmul.bf16.gmra.mxu0 %v1751
      %v3446 = vpop.f32.mrf.mxu0
      %v3447 = vadd.f32 %v3358, %v3446
      %v3448 = vpop.f32.mrf.mxu0
      %v3449 = vadd.f32 %v3360, %v3448
      %3450 = vmatmul.bf16.gmra.mxu0 %v1794
      %v3451 = vpop.f32.mrf.mxu0
      %v3452 = vadd.f32 %v3363, %v3451
      %v3453 = vpop.f32.mrf.mxu0
      %v3454 = vadd.f32 %v3365, %v3453
      %3455 = vmatmul.bf16.gmra.mxu0 %v1837
      %v3456 = vpop.f32.mrf.mxu0
      %v3457 = vadd.f32 %v3368, %v3456
      %v3458 = vpop.f32.mrf.mxu0
      %v3459 = vadd.f32 %v3370, %v3458
      %3460 = vmatmul.bf16.gmra.mxu0 %v1880
      %v3461 = vpop.f32.mrf.mxu0
      %v3462 = vadd.f32 %v3373, %v3461
      %v3463 = vpop.f32.mrf.mxu0
      %v3464 = vadd.f32 %v3375, %v3463
      %3465 = vmatmul.bf16.gmra.mxu0 %v1923
      %v3466 = vpop.f32.mrf.mxu0
      %v3467 = vadd.f32 %v3378, %v3466
      %v3468 = vpop.f32.mrf.mxu0
      %v3469 = vadd.f32 %v3380, %v3468
      %3470 = vmatmul.bf16.gmra.mxu0 %v1966
      %v3471 = vpop.f32.mrf.mxu0
      %v3472 = vadd.f32 %v3383, %v3471
      %v3473 = vpop.f32.mrf.mxu0
      %v3474 = vadd.f32 %v3385, %v3473
      %3475 = vmatmul.bf16.gmra.mxu0 %v2105
      %v3476 = vpop.f32.mrf.mxu0
      %v3477 = vadd.f32 %v3388, %v3476
      %v3478 = vpop.f32.mrf.mxu0
      %v3479 = vadd.f32 %v3390, %v3478
      %3480 = vmatmul.bf16.gmra.mxu0 %v3022
      %v3481 = vpop.f32.mrf.mxu0
      %v3482 = vadd.f32 %v3393, %v3481
      %v3483 = vpop.f32.mrf.mxu0
      %v3484 = vadd.f32 %v3395, %v3483
      %3485 = vdwg.mxu0
      %v3486 = vadd.f32 %v2901, %v3407
      %v3487 = vadd.f32 %v2903, %v3409
      %v3488 = vadd.f32 %v2906, %v3412
      %v3489 = vadd.f32 %v2908, %v3414
      %v3490 = vadd.f32 %v2911, %v3417
      %v3491 = vadd.f32 %v2913, %v3419
      %v3492 = vadd.f32 %v2916, %v3422
      %v3493 = vadd.f32 %v2918, %v3424
      %v3494 = vadd.f32 %v2921, %v3427
      %v3495 = vadd.f32 %v2923, %v3429
      %v3496 = vadd.f32 %v2926, %v3432
      %v3497 = vadd.f32 %v2928, %v3434
      %v3498 = vadd.f32 %v2931, %v3437
      %v3499 = vadd.f32 %v2933, %v3439
      %v3500 = vadd.f32 %v2936, %v3442
      %v3501 = vadd.f32 %v2938, %v3444
      %v3502 = vadd.f32 %v2941, %v3447
      %v3503 = vadd.f32 %v2943, %v3449
      %v3504 = vadd.f32 %v2946, %v3452
      %v3505 = vadd.f32 %v2948, %v3454
      %v3506 = vadd.f32 %v2951, %v3457
      %v3507 = vadd.f32 %v2953, %v3459
      %v3508 = vadd.f32 %v2956, %v3462
      %v3509 = vadd.f32 %v2958, %v3464
      %v3510 = vadd.f32 %v2961, %v3467
      %v3511 = vadd.f32 %v2963, %v3469
      %v3512 = vadd.f32 %v2966, %v3472
      %v3513 = vadd.f32 %v2968, %v3474
      %v3514 = vadd.f32 %v2971, %v3477
      %v3515 = vadd.f32 %v2973, %v3479
      %v3516 = vadd.f32 %v2976, %v3482
      %v3517 = vadd.f32 %v2978, %v3484
      %v3518 = vld [vmem:[%s4] sm:$0x1]
      %v3520 = vperm.slane %v3518, 0
      %v3522 = vadd.f32 %v3486, %v3520
      %v3523 = vadd.f32 %v3487, %v3520
      %v3524 = vadd.f32 %v3488, %v3520
      %v3525 = vadd.f32 %v3489, %v3520
      %v3526 = vadd.f32 %v3490, %v3520
      %v3527 = vadd.f32 %v3491, %v3520
      %v3528 = vadd.f32 %v3492, %v3520
      %v3529 = vadd.f32 %v3493, %v3520
      %v3530 = vadd.f32 %v3494, %v3520
      %v3531 = vadd.f32 %v3495, %v3520
      %v3532 = vadd.f32 %v3496, %v3520
      %v3533 = vadd.f32 %v3497, %v3520
      %v3534 = vadd.f32 %v3498, %v3520
      %v3535 = vadd.f32 %v3499, %v3520
      %v3536 = vadd.f32 %v3500, %v3520
      %v3537 = vadd.f32 %v3501, %v3520
      %v3538 = vadd.f32 %v3502, %v3520
      %v3539 = vadd.f32 %v3503, %v3520
      %v3540 = vadd.f32 %v3504, %v3520
      %v3541 = vadd.f32 %v3505, %v3520
      %v3542 = vadd.f32 %v3506, %v3520
      %v3543 = vadd.f32 %v3507, %v3520
      %v3544 = vadd.f32 %v3508, %v3520
      %v3545 = vadd.f32 %v3509, %v3520
      %v3546 = vadd.f32 %v3510, %v3520
      %v3547 = vadd.f32 %v3511, %v3520
      %v3548 = vadd.f32 %v3512, %v3520
      %v3549 = vadd.f32 %v3513, %v3520
      %v3550 = vadd.f32 %v3514, %v3520
      %v3551 = vadd.f32 %v3515, %v3520
      %v3552 = vadd.f32 %v3516, %v3520
      %v3553 = vadd.f32 %v3517, %v3520
      %v3554 = vmax.f32 %v3522, 0.0
      %v3555 = vmax.f32 %v3523, 0.0
      %v3556 = vmax.f32 %v3524, 0.0
      %v3557 = vmax.f32 %v3525, 0.0
      %v3558 = vmax.f32 %v3526, 0.0
      %v3559 = vmax.f32 %v3527, 0.0
      %v3560 = vmax.f32 %v3528, 0.0
      %v3561 = vmax.f32 %v3529, 0.0
      %v3562 = vmax.f32 %v3530, 0.0
      %v3563 = vmax.f32 %v3531, 0.0
      %v3564 = vmax.f32 %v3532, 0.0
      %v3565 = vmax.f32 %v3533, 0.0
      %v3566 = vmax.f32 %v3534, 0.0
      %v3567 = vmax.f32 %v3535, 0.0
      %v3568 = vmax.f32 %v3536, 0.0
      %v3569 = vmax.f32 %v3537, 0.0
      %v3570 = vmax.f32 %v3538, 0.0
      %v3571 = vmax.f32 %v3539, 0.0
      %v3572 = vmax.f32 %v3540, 0.0
      %v3573 = vmax.f32 %v3541, 0.0
      %v3574 = vmax.f32 %v3542, 0.0
      %v3575 = vmax.f32 %v3543, 0.0
      %v3576 = vmax.f32 %v3544, 0.0
      %v3577 = vmax.f32 %v3545, 0.0
      %v3578 = vmax.f32 %v3546, 0.0
      %v3579 = vmax.f32 %v3547, 0.0
      %v3580 = vmax.f32 %v3548, 0.0
      %v3581 = vmax.f32 %v3549, 0.0
      %v3582 = vmax.f32 %v3550, 0.0
      %v3583 = vmax.f32 %v3551, 0.0
      %v3584 = vmax.f32 %v3552, 0.0
      %v3585 = vmax.f32 %v3553, 0.0
      %v3586 = vpack.c.bf16 %v3555, %v3554
      %v3587 = vpack.c.bf16 %v3557, %v3556
      %v3588 = vpack.c.bf16 %v3559, %v3558
      %v3589 = vpack.c.bf16 %v3561, %v3560
      %v3590 = vpack.c.bf16 %v3563, %v3562
      %v3591 = vpack.c.bf16 %v3565, %v3564
      %v3592 = vpack.c.bf16 %v3567, %v3566
      %v3593 = vpack.c.bf16 %v3569, %v3568
      %v3594 = vpack.c.bf16 %v3571, %v3570
      %v3595 = vpack.c.bf16 %v3573, %v3572
      %v3596 = vpack.c.bf16 %v3575, %v3574
      %v3597 = vpack.c.bf16 %v3577, %v3576
      %v3598 = vpack.c.bf16 %v3579, %v3578
      %v3599 = vpack.c.bf16 %v3581, %v3580
      %v3600 = vpack.c.bf16 %v3583, %v3582
      %v3601 = vpack.c.bf16 %v3585, %v3584
      %v3602 = vld [vmem:[%s5] sm:$0xf]
      %v3603 = vld [vmem:[%s5 + $0x4] sm:$0xf]
      %v3604 = vld [vmem:[%s5 + $0x8] sm:$0xf]
      %v3605 = vld [vmem:[%s5 + $0xc] sm:$0xf]
      %v3606 = vld [vmem:[%s5 + $0x10] sm:$0xf]
      %v3607 = vld [vmem:[%s5 + $0x14] sm:$0xf]
      %v3608 = vld [vmem:[%s5 + $0x18] sm:$0xf]
      %v3609 = vld [vmem:[%s5 + $0x1c] sm:$0xf]
      %v3610 = vld [vmem:[%s5 + $0x20] sm:$0xf]
      %v3611 = vld [vmem:[%s5 + $0x24] sm:$0xf]
      %v3612 = vld [vmem:[%s5 + $0x28] sm:$0xf]
      %v3613 = vld [vmem:[%s5 + $0x2c] sm:$0xf]
      %v3614 = vld [vmem:[%s5 + $0x30] sm:$0xf]
      %v3615 = vld [vmem:[%s5 + $0x34] sm:$0xf]
      %v3616 = vld [vmem:[%s5 + $0x38] sm:$0xf]
      %v3617 = vld [vmem:[%s5 + $0x3c] sm:$0xf]
      %v3618 = vld [vmem:[%s6] sm:$0x1]
      %v3620 = vperm.slane %v3618, 0
      %v3638 = vunpack.c.l.b16 %v3602
      %v3639 = vunpack.c.l.b16 %v3603
      %v3640 = vunpack.c.l.b16 %v3604
      %v3641 = vunpack.c.l.b16 %v3605
      %v3642 = vunpack.c.l.b16 %v3606
      %v3643 = vunpack.c.l.b16 %v3607
      %v3644 = vunpack.c.l.b16 %v3608
      %v3645 = vunpack.c.l.b16 %v3609
      %v3646 = vunpack.c.l.b16 %v3610
      %v3647 = vunpack.c.l.b16 %v3611
      %v3648 = vunpack.c.l.b16 %v3612
      %v3649 = vunpack.c.l.b16 %v3613
      %v3650 = vunpack.c.l.b16 %v3614
      %v3651 = vunpack.c.l.b16 %v3615
      %v3652 = vunpack.c.l.b16 %v3616
      %v3653 = vunpack.c.l.b16 %v3617
      %v3654 = vpack.c.b16 %v3639, %v3638
      %v3655 = vpack.c.b16 %v3641, %v3640
      %v3656 = vpack.c.b16 %v3643, %v3642
      %v3657 = vpack.c.b16 %v3645, %v3644
      %v3658 = vpack.c.b16 %v3647, %v3646
      %v3659 = vpack.c.b16 %v3649, %v3648
      %v3660 = vpack.c.b16 %v3651, %v3650
      %v3661 = vpack.c.b16 %v3653, %v3652
      %3670 = vmatpush.bf16.msra.mxu0 %v3661
      %3671 = vmatpush.bf16.msra.mxu0 %v3660
      %3672 = vmatpush.bf16.msra.mxu0 %v3659
      %3673 = vmatpush.bf16.msra.mxu0 %v3658
      %3674 = vmatpush.bf16.msra.mxu0 %v3657
      %3675 = vmatpush.bf16.msra.mxu0 %v3656
      %3676 = vmatpush.bf16.msra.mxu0 %v3655
      %3677 = vmatpush.bf16.msra.mxu0 %v3654
      %3678 = vmatmul.bf16.gmra.mxu0 %v3586
      %v3679 = vpop.f32.mrf.mxu0
      %v3680 = vadd.f32 %v3620, %v3679
      %v3681 = vpop.f32.mrf.mxu0
      %v3682 = vadd.f32 %v3620, %v3681
      %3683 = vmatmul.bf16.gmra.mxu0 %v3587
      %v3684 = vpop.f32.mrf.mxu0
      %v3685 = vadd.f32 %v3620, %v3684
      %v3686 = vpop.f32.mrf.mxu0
      %v3687 = vadd.f32 %v3620, %v3686
      %3688 = vmatmul.bf16.gmra.mxu0 %v3588
      %v3689 = vpop.f32.mrf.mxu0
      %v3690 = vadd.f32 %v3620, %v3689
      %v3691 = vpop.f32.mrf.mxu0
      %v3692 = vadd.f32 %v3620, %v3691
      %3693 = vmatmul.bf16.gmra.mxu0 %v3589
      %v3694 = vpop.f32.mrf.mxu0
      %v3695 = vadd.f32 %v3620, %v3694
      %v3696 = vpop.f32.mrf.mxu0
      %v3697 = vadd.f32 %v3620, %v3696
      %3698 = vmatmul.bf16.gmra.mxu0 %v3590
      %v3699 = vpop.f32.mrf.mxu0
      %v3700 = vadd.f32 %v3620, %v3699
      %v3701 = vpop.f32.mrf.mxu0
      %v3702 = vadd.f32 %v3620, %v3701
      %3703 = vmatmul.bf16.gmra.mxu0 %v3591
      %v3704 = vpop.f32.mrf.mxu0
      %v3705 = vadd.f32 %v3620, %v3704
      %v3706 = vpop.f32.mrf.mxu0
      %v3707 = vadd.f32 %v3620, %v3706
      %3708 = vmatmul.bf16.gmra.mxu0 %v3592
      %v3709 = vpop.f32.mrf.mxu0
      %v3710 = vadd.f32 %v3620, %v3709
      %v3711 = vpop.f32.mrf.mxu0
      %v3712 = vadd.f32 %v3620, %v3711
      %3713 = vmatmul.bf16.gmra.mxu0 %v3593
      %v3714 = vpop.f32.mrf.mxu0
      %v3715 = vadd.f32 %v3620, %v3714
      %v3716 = vpop.f32.mrf.mxu0
      %v3717 = vadd.f32 %v3620, %v3716
      %3718 = vmatmul.bf16.gmra.mxu0 %v3594
      %v3719 = vpop.f32.mrf.mxu0
      %v3720 = vadd.f32 %v3620, %v3719
      %v3721 = vpop.f32.mrf.mxu0
      %v3722 = vadd.f32 %v3620, %v3721
      %3723 = vmatmul.bf16.gmra.mxu0 %v3595
      %v3724 = vpop.f32.mrf.mxu0
      %v3725 = vadd.f32 %v3620, %v3724
      %v3726 = vpop.f32.mrf.mxu0
      %v3727 = vadd.f32 %v3620, %v3726
      %3728 = vmatmul.bf16.gmra.mxu0 %v3596
      %v3729 = vpop.f32.mrf.mxu0
      %v3730 = vadd.f32 %v3620, %v3729
      %v3731 = vpop.f32.mrf.mxu0
      %v3732 = vadd.f32 %v3620, %v3731
      %3733 = vmatmul.bf16.gmra.mxu0 %v3597
      %v3734 = vpop.f32.mrf.mxu0
      %v3735 = vadd.f32 %v3620, %v3734
      %v3736 = vpop.f32.mrf.mxu0
      %v3737 = vadd.f32 %v3620, %v3736
      %3738 = vmatmul.bf16.gmra.mxu0 %v3598
      %v3739 = vpop.f32.mrf.mxu0
      %v3740 = vadd.f32 %v3620, %v3739
      %v3741 = vpop.f32.mrf.mxu0
      %v3742 = vadd.f32 %v3620, %v3741
      %3743 = vmatmul.bf16.gmra.mxu0 %v3599
      %v3744 = vpop.f32.mrf.mxu0
      %v3745 = vadd.f32 %v3620, %v3744
      %v3746 = vpop.f32.mrf.mxu0
      %v3747 = vadd.f32 %v3620, %v3746
      %3748 = vmatmul.bf16.gmra.mxu0 %v3600
      %v3749 = vpop.f32.mrf.mxu0
      %v3750 = vadd.f32 %v3620, %v3749
      %v3751 = vpop.f32.mrf.mxu0
      %v3752 = vadd.f32 %v3620, %v3751
      %3753 = vmatmul.bf16.gmra.mxu0 %v3601
      %v3754 = vpop.f32.mrf.mxu0
      %v3755 = vadd.f32 %v3620, %v3754
      %v3756 = vpop.f32.mrf.mxu0
      %v3757 = vadd.f32 %v3620, %v3756
      %3758 = vdwg.mxu0
      %v3759 = vadd.f32 %v3680, %v280
      %v3760 = vadd.f32 %v3682, %v281
      %v3761 = vadd.f32 %v3685, %v282
      %v3762 = vadd.f32 %v3687, %v283
      %v3763 = vadd.f32 %v3690, %v284
      %v3764 = vadd.f32 %v3692, %v285
      %v3765 = vadd.f32 %v3695, %v286
      %v3766 = vadd.f32 %v3697, %v287
      %v3767 = vadd.f32 %v3700, %v288
      %v3768 = vadd.f32 %v3702, %v289
      %v3769 = vadd.f32 %v3705, %v290
      %v3770 = vadd.f32 %v3707, %v291
      %v3771 = vadd.f32 %v3710, %v292
      %v3772 = vadd.f32 %v3712, %v293
      %v3773 = vadd.f32 %v3715, %v294
      %v3774 = vadd.f32 %v3717, %v295
      %v3775 = vadd.f32 %v3720, %v296
      %v3776 = vadd.f32 %v3722, %v297
      %v3777 = vadd.f32 %v3725, %v298
      %v3778 = vadd.f32 %v3727, %v299
      %v3779 = vadd.f32 %v3730, %v300
      %v3780 = vadd.f32 %v3732, %v301
      %v3781 = vadd.f32 %v3735, %v302
      %v3782 = vadd.f32 %v3737, %v303
      %v3783 = vadd.f32 %v3740, %v304
      %v3784 = vadd.f32 %v3742, %v305
      %v3785 = vadd.f32 %v3745, %v306
      %v3786 = vadd.f32 %v3747, %v307
      %v3787 = vadd.f32 %v3750, %v308
      %v3788 = vadd.f32 %v3752, %v309
      %v3789 = vadd.f32 %v3755, %v310
      %v3790 = vadd.f32 %v3757, %v311
      %v3791 = vmax.f32 %v3759, 0.0
      %v3792 = vmax.f32 %v3760, 0.0
      %v3793 = vmax.f32 %v3761, 0.0
      %v3794 = vmax.f32 %v3762, 0.0
      %v3795 = vmax.f32 %v3763, 0.0
      %v3796 = vmax.f32 %v3764, 0.0
      %v3797 = vmax.f32 %v3765, 0.0
      %v3798 = vmax.f32 %v3766, 0.0
      %v3799 = vmax.f32 %v3767, 0.0
      %v3800 = vmax.f32 %v3768, 0.0
      %v3801 = vmax.f32 %v3769, 0.0
      %v3802 = vmax.f32 %v3770, 0.0
      %v3803 = vmax.f32 %v3771, 0.0
      %v3804 = vmax.f32 %v3772, 0.0
      %v3805 = vmax.f32 %v3773, 0.0
      %v3806 = vmax.f32 %v3774, 0.0
      %v3807 = vmax.f32 %v3775, 0.0
      %v3808 = vmax.f32 %v3776, 0.0
      %v3809 = vmax.f32 %v3777, 0.0
      %v3810 = vmax.f32 %v3778, 0.0
      %v3811 = vmax.f32 %v3779, 0.0
      %v3812 = vmax.f32 %v3780, 0.0
      %v3813 = vmax.f32 %v3781, 0.0
      %v3814 = vmax.f32 %v3782, 0.0
      %v3815 = vmax.f32 %v3783, 0.0
      %v3816 = vmax.f32 %v3784, 0.0
      %v3817 = vmax.f32 %v3785, 0.0
      %v3818 = vmax.f32 %v3786, 0.0
      %v3819 = vmax.f32 %v3787, 0.0
      %v3820 = vmax.f32 %v3788, 0.0
      %v3821 = vmax.f32 %v3789, 0.0
      %v3822 = vmax.f32 %v3790, 0.0
      %3823 = vst.msk [vmem:[%s278] sm:$0xff] %vm340, %v3791
      %3824 = vst.msk [vmem:[%s278 + $0x8] sm:$0xff] %vm340, %v3792
      %3825 = vst.msk [vmem:[%s278 + $0x10] sm:$0xff] %vm340, %v3793
      %3826 = vst.msk [vmem:[%s278 + $0x18] sm:$0xff] %vm340, %v3794
      %3827 = vst.msk [vmem:[%s278 + $0x20] sm:$0xff] %vm340, %v3795
      %3828 = vst.msk [vmem:[%s278 + $0x28] sm:$0xff] %vm340, %v3796
      %3829 = vst.msk [vmem:[%s278 + $0x30] sm:$0xff] %vm340, %v3797
      %3830 = vst.msk [vmem:[%s278 + $0x38] sm:$0xff] %vm340, %v3798
      %3831 = vst.msk [vmem:[%s278 + $0x40] sm:$0xff] %vm340, %v3799
      %3832 = vst.msk [vmem:[%s278 + $0x48] sm:$0xff] %vm340, %v3800
      %3833 = vst.msk [vmem:[%s278 + $0x50] sm:$0xff] %vm340, %v3801
      %3834 = vst.msk [vmem:[%s278 + $0x58] sm:$0xff] %vm340, %v3802
      %3835 = vst.msk [vmem:[%s278 + $0x60] sm:$0xff] %vm340, %v3803
      %3836 = vst.msk [vmem:[%s278 + $0x68] sm:$0xff] %vm340, %v3804
      %3837 = vst.msk [vmem:[%s278 + $0x70] sm:$0xff] %vm340, %v3805
      %3838 = vst.msk [vmem:[%s278 + $0x78] sm:$0xff] %vm340, %v3806
      %3839 = vst.msk [vmem:[%s278 + $0x80] sm:$0xff] %vm340, %v3807
      %3840 = vst.msk [vmem:[%s278 + $0x88] sm:$0xff] %vm340, %v3808
      %3841 = vst.msk [vmem:[%s278 + $0x90] sm:$0xff] %vm340, %v3809
      %3842 = vst.msk [vmem:[%s278 + $0x98] sm:$0xff] %vm340, %v3810
      %3843 = vst.msk [vmem:[%s278 + $0xa0] sm:$0xff] %vm340, %v3811
      %3844 = vst.msk [vmem:[%s278 + $0xa8] sm:$0xff] %vm340, %v3812
      %3845 = vst.msk [vmem:[%s278 + $0xb0] sm:$0xff] %vm340, %v3813
      %3846 = vst.msk [vmem:[%s278 + $0xb8] sm:$0xff] %vm340, %v3814
      %3847 = vst.msk [vmem:[%s278 + $0xc0] sm:$0xff] %vm340, %v3815
      %3848 = vst.msk [vmem:[%s278 + $0xc8] sm:$0xff] %vm340, %v3816
      %3849 = vst.msk [vmem:[%s278 + $0xd0] sm:$0xff] %vm340, %v3817
      %3850 = vst.msk [vmem:[%s278 + $0xd8] sm:$0xff] %vm340, %v3818
      %3851 = vst.msk [vmem:[%s278 + $0xe0] sm:$0xff] %vm340, %v3819
      %3852 = vst.msk [vmem:[%s278 + $0xe8] sm:$0xff] %vm340, %v3820
      %3853 = vst.msk [vmem:[%s278 + $0xf0] sm:$0xff] %vm340, %v3821
      %3854 = vst.msk [vmem:[%s278 + $0xf8] sm:$0xff] %vm340, %v3822
      %p3855 = scmp.lt.s32.totalorder %s18, 1
      %s3856 = scalar_select %p3855, %s18, 1
      %s3857 = smul.addr %s3856, 32
      %s3858 = smul.addr %s3857, 8
      %s3859 = scalar_lea.vmem %s7, %s3858
      // Predicated region
      $region49: #{bottleneck_forward.1} parent=47 // pred_check
        %p3860 = pneg %p188
      $region50: #{bottleneck_forward.1} parent=47 // pred_check_branch
        %3862 = sbr.rel (%p3860) target = $region52
      $region51: #{bottleneck_forward.1} parent=47 // pred_region
        _
      $region52: #{bottleneck_forward.1} parent=47 // pred_fallthru
        _
    $region48: #{bottleneck_forward.1} parent=5 // pred_fallthru
      _
    %p3863 = scmp.le.s32.totalorder 2, %s13
    // Predicated region
    $region53: #{bottleneck_forward.1} parent=5 // pred_check
      %p3864 = pneg %p3863
    $region54: #{bottleneck_forward.1} parent=5 // pred_check_branch
      %3866 = sbr.rel (%p3864) target = $region56
    $region55: #{bottleneck_forward.1} parent=5 // pred_region
      %s3867 = ssub.s32 %s13, 2
      // Predicated region
      $region57: #{bottleneck_forward.1} parent=55 // pred_check
        %p3868 = pneg %p194
      $region58: #{bottleneck_forward.1} parent=55 // pred_check_branch
        %3870 = sbr.rel (%p3868) target = $region60
      $region59: #{bottleneck_forward.1} parent=55 // pred_region
        %p3871 = scmp.lt.s32.totalorder %s19, 1
        %s3872 = scalar_select %p3871, %s19, 1
        %s3873 = smul.addr %s3872, 32
        %s3874 = smul.addr %s3873, 8
        %s3875 = scalar_lea.vmem %s7, %s3874
      $region60: #{bottleneck_forward.1} parent=55 // pred_fallthru
        _
    $region56: #{bottleneck_forward.1} parent=5 // pred_fallthru
      _
  $region6: #{bottleneck_forward.1} parent=0 // loop_footer
    %s17 = sadd.s32 1, %s13
  $region7: #{bottleneck_forward.1} parent=0 // loop_footer_branch
    %12 = sbr.rel target = $region3
  $region8: #{bottleneck_forward.1} parent=0 // loop_exit
    _

</llo_original>
